<compile_context>
chip_gen: v7x
topology: tpu7x:2x2x1
jax: 0.10.0
libtpu: 0.0.40
codegen_flags: <defaults>
</compile_context>

<pallas_src>
import functools

import jax
import jax.numpy as jnp
from jax import lax
from jax.experimental import pallas as pl
from jax.experimental.pallas import tpu as pltpu


def _round_up(x, m):
    return (x + m - 1) // m * m


def _transition_kernel(x_ref, w1_ref, b1_ref, w2_ref, w2s_ref, b2_ref,
                       w3_ref, b3_ref, eps_ref, *rest,
                       feat: int, output_logits: bool):
    if output_logits:
        (gamma_ref, beta_ref,
         mu_ref, logstd_ref, state_ref, h1_scr, acc_scr) = rest
    else:
        gamma_ref = beta_ref = None
        (mu_ref, logstd_ref, state_ref, h1_scr, acc_scr) = rest

    n = pl.program_id(1)

    # Layer 1: computed once per batch tile, kept resident in VMEM scratch.
    # The layer-3 accumulator is initialized with b3 (no extra add later).
    @pl.when(n == 0)
    def _():
        h1 = jnp.dot(x_ref[...], w1_ref[...],
                     preferred_element_type=jnp.float32) + b1_ref[...]
        h1_scr[...] = jnp.maximum(h1, 0.0).astype(jnp.bfloat16)
        acc_scr[...] = jnp.broadcast_to(b3_ref[...], acc_scr.shape)

    # Layer 2 (int8 weights -> bf16, exact) and the matching K-slice of layer 3.
    # The per-column dequant scale is applied to the small f32 result (VPU op,
    # free in this DMA-bound kernel) rather than to the 1M-element weight slab.
    w2 = w2_ref[...].astype(jnp.bfloat16)
    h2 = (jnp.dot(h1_scr[...], w2, preferred_element_type=jnp.float32)
          * w2s_ref[...] + b2_ref[...])
    h2 = jnp.maximum(h2, 0.0).astype(jnp.bfloat16)
    acc_scr[...] += jnp.dot(h2, w3_ref[...], preferred_element_type=jnp.float32)

    @pl.when(n == pl.num_programs(1) - 1)
    def _():
        feat_pad = mu_ref.shape[-1]
        out = acc_scr[...]
        if output_logits:
            # Masked LayerNorm over the 2*feat real columns of the padded slab.
            # Relies on gamma/beta/eps being zero in the padded lanes (enforced
            # by prepare_params / the wrapper).
            col = lax.broadcasted_iota(jnp.int32, out.shape, 1)
            valid = (col % feat_pad) < feat
            denom = 2.0 * feat
            mean = jnp.sum(jnp.where(valid, out, 0.0), axis=-1,
                           keepdims=True) / denom
            cen = jnp.where(valid, out - mean, 0.0)
            var = jnp.sum(cen * cen, axis=-1, keepdims=True) / denom
            out = cen * lax.rsqrt(var + 1e-5) * gamma_ref[...] + beta_ref[...]
        mu = out[:, :feat_pad]
        logstd = out[:, feat_pad:]
        mu_ref[...] = mu
        logstd_ref[...] = logstd
        state_ref[...] = mu + eps_ref[...] * jnp.exp(logstd)


def prepare_params(params, *, output_feature_num):
    """One-time repack of the torch-layout parameters.

    * W1/W3 stored bf16; W2 quantized to int8 with a per-output-column scale.
    * The output head (W3/b3/gamma/beta) is padded to a lane-dense 2*F_pad
      layout (F_pad multiple of 128) with ZERO padding — the in-kernel masked
      LayerNorm and the zero-padded eps depend on this invariant.
    """
    w1, b1, w2, b2, w3, b3, gamma, beta = params
    F = output_feature_num
    F_pad = _round_up(max(F, 128), 128)
    k_in = w1.shape[0]
    k_pad = _round_up(k_in, 8)

    w1p = jnp.zeros((k_pad, w1.shape[1]), jnp.float32).at[:k_in].set(w1)
    w1p = w1p.astype(jnp.bfloat16)

    # int8 quantization of W2 (per output column).
    w2_scale = jnp.maximum(jnp.max(jnp.abs(w2), axis=0, keepdims=True),
                           1e-30) / 127.0
    w2_q = jnp.clip(jnp.round(w2 / w2_scale), -127, 127).astype(jnp.int8)

    def pad_head(a):
        out = jnp.zeros((a.shape[0], 2 * F_pad), jnp.float32)
        out = out.at[:, :F].set(a[:, :F])
        out = out.at[:, F_pad:F_pad + F].set(a[:, F:])
        return out

    return dict(
        w1=w1p, b1=b1,
        w2=w2_q, w2_scale=w2_scale, b2=b2,
        w3=pad_head(w3).astype(jnp.bfloat16), b3=pad_head(b3),
        gamma=pad_head(gamma), beta=pad_head(beta),
        k_in=k_in, k_pad=k_pad, F=F, F_pad=F_pad)


def transition_model_forward(latent_obs, latent_actions, prepped, eps,
                             output_logits=False, block_n=None, block_b=None):
    """Pallas implementation of Transition_model.forward (detach is a no-op).

    For best HBM amortization, batch as many rows (timesteps / ensemble
    members / candidate actions) per call as possible; with a large B, set
    block_b (a multiple of 8 dividing B) so the leading "parallel" grid axis
    spreads batch tiles across both v7x TensorCores.
    """
    w1, b1 = prepped["w1"], prepped["b1"]
    w2, w2s, b2 = prepped["w2"], prepped["w2_scale"], prepped["b2"]
    w3p, b3p = prepped["w3"], prepped["b3"]
    gp, bp = prepped["gamma"], prepped["beta"]
    k_in, k_pad = prepped["k_in"], prepped["k_pad"]
    F, F_pad = prepped["F"], prepped["F_pad"]

    B = latent_obs.shape[0]
    hidden = w1.shape[1]
    n_out = w2.shape[1]
    two_fpad = w3p.shape[1]

    if block_n is None:
        block_n = n_out          # whole W2 per step: kernel is HBM-bound, extra
                                 # grid steps only pay ~0.35 us each
    if block_b is None:
        block_b = B
    assert n_out % block_n == 0 and B % block_b == 0
    n_blocks = n_out // block_n
    b_blocks = B // block_b

    # Concat + zero-pad + bf16 cast once in the wrapper (tiny) -> one W1 dot.
    x = jnp.concatenate([latent_obs, latent_actions], axis=1)
    x = jnp.zeros((B, k_pad), jnp.float32).at[:, :k_in].set(x)
    x = x.astype(jnp.bfloat16)
    eps_pad = jnp.zeros((B, F_pad), jnp.float32).at[:, :F].set(eps)

    kernel = functools.partial(_transition_kernel, feat=F,
                               output_logits=output_logits)

    fixed = lambda b, n: (0, 0)
    bmap = lambda b, n: (b, 0)
    in_specs = [
        pl.BlockSpec((block_b, k_pad), bmap),                    # obs||act bf16
        pl.BlockSpec(w1.shape, fixed),                           # W1 bf16
        pl.BlockSpec(b1.shape, fixed),                           # b1
        pl.BlockSpec((hidden, block_n), lambda b, n: (0, n)),    # W2 int8 slice
        pl.BlockSpec((1, block_n), lambda b, n: (0, n)),         # W2 scale slice
        pl.BlockSpec((1, block_n), lambda b, n: (0, n)),         # b2 slice
        pl.BlockSpec((block_n, two_fpad), lambda b, n: (n, 0)),  # W3 K-slice
        pl.BlockSpec(b3p.shape, fixed),                          # b3 (padded)
        pl.BlockSpec((block_b, F_pad), bmap),                    # eps (padded)
    ]
    args = [x, w1, b1, w2, w2s, b2, w3p, b3p, eps_pad]
    if output_logits:  # gamma/beta are only DMA'd on the LayerNorm path
        in_specs += [pl.BlockSpec(gp.shape, fixed),
                     pl.BlockSpec(bp.shape, fixed)]
        args += [gp, bp]

    out_spec = pl.BlockSpec((block_b, F_pad), bmap)

    mu_p, logstd_p, state_p = pl.pallas_call(
        kernel,
        out_shape=(jax.ShapeDtypeStruct((B, F_pad), jnp.float32),) * 3,
        grid_spec=pltpu.PrefetchScalarGridSpec(
            num_scalar_prefetch=0,
            grid=(b_blocks, n_blocks),
            in_specs=in_specs,
            out_specs=(out_spec, out_spec, out_spec),
            scratch_shapes=[
                pltpu.VMEM((block_b, hidden), jnp.bfloat16),   # relu(layer 1)
                pltpu.VMEM((block_b, two_fpad), jnp.float32),  # layer-3 acc (+b3)
            ]),
        compiler_params=pltpu.CompilerParams(
            dimension_semantics=("parallel", "arbitrary")),
    )(*args)

    return [mu_p[:, :F], logstd_p[:, :F], state_p[:, :F]]


def transition_reference(latent_obs, latent_actions, prepped, eps,
                         output_logits=False):
    """Pure-JAX mirror of the kernel numerics (bf16 weights/activations,
    int8 W2 with the per-column scale applied to the f32 accumulator)."""
    k_in, k_pad = prepped["k_in"], prepped["k_pad"]
    F, F_pad = prepped["F"], prepped["F_pad"]
    B = latent_obs.shape[0]

    x = jnp.concatenate([latent_obs, latent_actions], axis=1)
    x = jnp.zeros((B, k_pad), jnp.float32).at[:, :k_in].set(x)
    x = x.astype(jnp.bfloat16)

    h1 = jnp.dot(x, prepped["w1"],
                 preferred_element_type=jnp.float32) + prepped["b1"]
    h1 = jnp.maximum(h1, 0.0).astype(jnp.bfloat16)
    h2 = (jnp.dot(h1, prepped["w2"].astype(jnp.bfloat16),
                  preferred_element_type=jnp.float32)
          * prepped["w2_scale"] + prepped["b2"])
    h2 = jnp.maximum(h2, 0.0).astype(jnp.bfloat16)
    out = jnp.dot(h2, prepped["w3"],
                  preferred_element_type=jnp.float32) + prepped["b3"]
    # strip head padding -> (B, 2F) in the original torch layout
    out = jnp.concatenate([out[:, :F], out[:, F_pad:F_pad + F]], axis=1)
    if output_logits:
        mean = jnp.mean(out, axis=-1, keepdims=True)
        var = jnp.mean((out - mean) ** 2, axis=-1, keepdims=True)
        g = jnp.concatenate([prepped["gamma"][:, :F],
                             prepped["gamma"][:, F_pad:F_pad + F]], axis=1)
        bt = jnp.concatenate([prepped["beta"][:, :F],
                              prepped["beta"][:, F_pad:F_pad + F]], axis=1)
        out = (out - mean) * lax.rsqrt(var + 1e-5) * g + bt
    mu, logstd = out[:, :F], out[:, F:]
    state = mu + eps * jnp.exp(logstd)
    return mu, logstd, state


def init_params(key, in_dim, hidden=1024, out_dim=100):
    """Deterministic synthetic parameter init (weights stored as [in, out])."""
    ks = jax.random.split(key, 6)
    w1 = jax.random.normal(ks[0], (in_dim, hidden), jnp.float32) * 0.02
    b1 = jax.random.normal(ks[1], (1, hidden), jnp.float32) * 0.02
    w2 = jax.random.normal(ks[2], (hidden, hidden), jnp.float32) * 0.02
    b2 = jax.random.normal(ks[3], (1, hidden), jnp.float32) * 0.02
    w3 = jax.random.normal(ks[4], (hidden, out_dim), jnp.float32) * 0.02
    b3 = jax.random.normal(ks[5], (1, out_dim), jnp.float32) * 0.02
    gamma = jnp.ones((1, out_dim), jnp.float32)   # nn.LayerNorm default weight
    beta = jnp.zeros((1, out_dim), jnp.float32)   # nn.LayerNorm default bias
    return (w1, b1, w2, b2, w3, b3, gamma, beta)


if __name__ == "__main__":
    B = 4
    z_dim = 32
    latent_action_shape = 8
    F = 50

    key = jax.random.PRNGKey(0)
    k_obs, k_act, k_eps, k_par = jax.random.split(key, 4)

    latent_obs = jax.random.normal(k_obs, (B, z_dim), jnp.float32)
    latent_actions = jax.random.normal(k_act, (B, latent_action_shape),
                                       jnp.float32)
    # TODO(synk): torch.randn_like(std) is drawn host-side here (same
    # distribution); in-kernel pltpu PRNG could replace it if desired.
    eps = jax.random.normal(k_eps, (B, F), jnp.float32)

    params = init_params(k_par, in_dim=z_dim + latent_action_shape,
                         hidden=1024, out_dim=2 * F)
    prepped = prepare_params(params, output_feature_num=F)

    for logits in (False, True):   # module default False, plus LayerNorm path
        mu, logstd, state = transition_model_forward(
            latent_obs, latent_actions, prepped, eps, output_logits=logits)
        jax.block_until_ready((mu, logstd, state))
        mu_r, logstd_r, state_r = transition_reference(
            latent_obs, latent_actions, prepped, eps, output_logits=logits)
        tol = 5e-3 if logits else 2e-3
        assert jnp.allclose(mu, mu_r, atol=tol, rtol=tol)
        assert jnp.allclose(logstd, logstd_r, atol=tol, rtol=tol)
        assert jnp.allclose(state, state_r, atol=tol, rtol=tol)

    print("KERNEL_OK")
</pallas_src>

<mosaic_0001>
module attributes {stable_mosaic.version = 11 : i64} {
  func.func @_transition_kernel(%arg0: i32, %arg1: i32, %arg2: memref<4x40xbf16, #tpu.memory_space<vmem>>, %arg3: memref<40x1024xbf16, #tpu.memory_space<vmem>>, %arg4: memref<1x1024xf32, #tpu.memory_space<vmem>>, %arg5: memref<1024x1024xi8, #tpu.memory_space<vmem>>, %arg6: memref<1x1024xf32, #tpu.memory_space<vmem>>, %arg7: memref<1x1024xf32, #tpu.memory_space<vmem>>, %arg8: memref<1024x256xbf16, #tpu.memory_space<vmem>>, %arg9: memref<1x256xf32, #tpu.memory_space<vmem>>, %arg10: memref<4x128xf32, #tpu.memory_space<vmem>>, %arg11: memref<4x128xf32, #tpu.memory_space<vmem>>, %arg12: memref<4x128xf32, #tpu.memory_space<vmem>>, %arg13: memref<4x128xf32, #tpu.memory_space<vmem>>, %arg14: memref<4x1024xbf16, #tpu.memory_space<vmem>>, %arg15: memref<4x256xf32, #tpu.memory_space<vmem>>) attributes {dimension_semantics = [#tpu.dimension_semantics<parallel>, #tpu.dimension_semantics<arbitrary>], iteration_bounds = array<i64: 1, 1>, scalar_prefetch = 0 : i64, scratch_operands = 2 : i64, tpu.core_type = #tpu.core_type<tc>, window_params = [{transform_indices = @transform_0, window_bounds = array<i64: 4, 40>}, {pipeline_mode = #tpu.pipeline_mode<synchronous>, transform_indices = @transform_1, window_bounds = array<i64: 40, 1024>}, {pipeline_mode = #tpu.pipeline_mode<synchronous>, transform_indices = @transform_2, window_bounds = array<i64: 1, 1024>}, {transform_indices = @transform_3, window_bounds = array<i64: 1024, 1024>}, {transform_indices = @transform_4, window_bounds = array<i64: 1, 1024>}, {transform_indices = @transform_5, window_bounds = array<i64: 1, 1024>}, {transform_indices = @transform_6, window_bounds = array<i64: 1024, 256>}, {pipeline_mode = #tpu.pipeline_mode<synchronous>, transform_indices = @transform_7, window_bounds = array<i64: 1, 256>}, {transform_indices = @transform_8, window_bounds = array<i64: 4, 128>}, {transform_indices = @transform_9, window_bounds = array<i64: 4, 128>}, {transform_indices = @transform_10, window_bounds = array<i64: 4, 128>}, {transform_indices = @transform_11, window_bounds = array<i64: 4, 128>}]} {
    %c0_i32 = arith.constant 0 : i32
    %0 = arith.cmpi eq, %arg1, %c0_i32 : i32
    %1 = arith.extui %0 : i1 to i32
    %c0_i32_0 = arith.constant 0 : i32
    %2 = arith.cmpi ne, %1, %c0_i32_0 : i32
    scf.if %2 {
      %c0_18 = arith.constant 0 : index
      %c0_19 = arith.constant 0 : index
      %24 = vector.load %arg2[%c0_18, %c0_19] : memref<4x40xbf16, #tpu.memory_space<vmem>>, vector<4x40xbf16>
      %c0_20 = arith.constant 0 : index
      %c0_21 = arith.constant 0 : index
      %25 = vector.load %arg3[%c0_20, %c0_21] : memref<40x1024xbf16, #tpu.memory_space<vmem>>, vector<40x1024xbf16>
      %cst_22 = arith.constant dense<0.000000e+00> : vector<4x1024xf32>
      %26 = tpu.matmul %24, %25, %cst_22 {dimension_numbers = #tpu.dot_dimension_numbers<[1], [0], [0], [1], [0, 0, 1, 1], [], []>} : vector<4x40xbf16>, vector<40x1024xbf16>, vector<4x1024xf32> -> vector<4x1024xf32>
      %c0_23 = arith.constant 0 : index
      %c0_24 = arith.constant 0 : index
      %27 = vector.load %arg4[%c0_23, %c0_24] : memref<1x1024xf32, #tpu.memory_space<vmem>>, vector<1x1024xf32>
      %28 = vector.broadcast %27 : vector<1x1024xf32> to vector<4x1024xf32>
      %29 = arith.addf %26, %28 : vector<4x1024xf32>
      %cst_25 = arith.constant 0.000000e+00 : f32
      %30 = vector.broadcast %cst_25 : f32 to vector<4x1024xf32>
      %31 = arith.maximumf %29, %30 : vector<4x1024xf32>
      %32 = arith.truncf %31 : vector<4x1024xf32> to vector<4x1024xbf16>
      %c0_26 = arith.constant 0 : index
      %c0_27 = arith.constant 0 : index
      %33 = vector.load %arg14[%c0_26, %c0_27] : memref<4x1024xbf16, #tpu.memory_space<vmem>>, vector<4x1024xbf16>
      tpu.vector_store %arg14[%c0_26, %c0_27], %32 {strides = array<i32>} : memref<4x1024xbf16, #tpu.memory_space<vmem>>, vector<4x1024xbf16>,
      %c0_28 = arith.constant 0 : index
      %c0_29 = arith.constant 0 : index
      %34 = vector.load %arg9[%c0_28, %c0_29] : memref<1x256xf32, #tpu.memory_space<vmem>>, vector<1x256xf32>
      %35 = vector.shape_cast %34 : vector<1x256xf32> to vector<1x256xf32>
      %36 = vector.broadcast %35 : vector<1x256xf32> to vector<4x256xf32>
      %c0_30 = arith.constant 0 : index
      %c0_31 = arith.constant 0 : index
      %37 = vector.load %arg15[%c0_30, %c0_31] : memref<4x256xf32, #tpu.memory_space<vmem>>, vector<4x256xf32>
      tpu.vector_store %arg15[%c0_30, %c0_31], %36 {strides = array<i32>} : memref<4x256xf32, #tpu.memory_space<vmem>>, vector<4x256xf32>,
    } else {
    }
    %c0 = arith.constant 0 : index
    %c0_1 = arith.constant 0 : index
    %3 = vector.load %arg5[%c0, %c0_1] : memref<1024x1024xi8, #tpu.memory_space<vmem>>, vector<1024x1024xi8>
    %4 = arith.sitofp %3 : vector<1024x1024xi8> to vector<1024x1024xbf16>
    %c0_2 = arith.constant 0 : index
    %c0_3 = arith.constant 0 : index
    %5 = vector.load %arg14[%c0_2, %c0_3] : memref<4x1024xbf16, #tpu.memory_space<vmem>>, vector<4x1024xbf16>
    %cst = arith.constant dense<0.000000e+00> : vector<4x1024xf32>
    %6 = tpu.matmul %5, %4, %cst {dimension_numbers = #tpu.dot_dimension_numbers<[1], [0], [0], [1], [0, 0, 1, 1], [], []>} : vector<4x1024xbf16>, vector<1024x1024xbf16>, vector<4x1024xf32> -> vector<4x1024xf32>
    %c0_4 = arith.constant 0 : index
    %c0_5 = arith.constant 0 : index
    %7 = vector.load %arg6[%c0_4, %c0_5] : memref<1x1024xf32, #tpu.memory_space<vmem>>, vector<1x1024xf32>
    %8 = vector.broadcast %7 : vector<1x1024xf32> to vector<4x1024xf32>
    %9 = arith.mulf %6, %8 : vector<4x1024xf32>
    %c0_6 = arith.constant 0 : index
    %c0_7 = arith.constant 0 : index
    %10 = vector.load %arg7[%c0_6, %c0_7] : memref<1x1024xf32, #tpu.memory_space<vmem>>, vector<1x1024xf32>
    %11 = vector.broadcast %10 : vector<1x1024xf32> to vector<4x1024xf32>
    %12 = arith.addf %9, %11 : vector<4x1024xf32>
    %cst_8 = arith.constant 0.000000e+00 : f32
    %13 = vector.broadcast %cst_8 : f32 to vector<4x1024xf32>
    %14 = arith.maximumf %12, %13 : vector<4x1024xf32>
    %15 = arith.truncf %14 : vector<4x1024xf32> to vector<4x1024xbf16>
    %c0_9 = arith.constant 0 : index
    %c0_10 = arith.constant 0 : index
    %16 = vector.load %arg15[%c0_9, %c0_10] : memref<4x256xf32, #tpu.memory_space<vmem>>, vector<4x256xf32>
    %c0_11 = arith.constant 0 : index
    %c0_12 = arith.constant 0 : index
    %17 = vector.load %arg8[%c0_11, %c0_12] : memref<1024x256xbf16, #tpu.memory_space<vmem>>, vector<1024x256xbf16>
    %cst_13 = arith.constant dense<0.000000e+00> : vector<4x256xf32>
    %18 = tpu.matmul %15, %17, %cst_13 {dimension_numbers = #tpu.dot_dimension_numbers<[1], [0], [0], [1], [0, 0, 1, 1], [], []>} : vector<4x1024xbf16>, vector<1024x256xbf16>, vector<4x256xf32> -> vector<4x256xf32>
    %19 = arith.addf %16, %18 : vector<4x256xf32>
    %c0_14 = arith.constant 0 : index
    %c0_15 = arith.constant 0 : index
    %20 = vector.load %arg15[%c0_14, %c0_15] : memref<4x256xf32, #tpu.memory_space<vmem>>, vector<4x256xf32>
    tpu.vector_store %arg15[%c0_14, %c0_15], %19 {strides = array<i32>} : memref<4x256xf32, #tpu.memory_space<vmem>>, vector<4x256xf32>,
    %c0_i32_16 = arith.constant 0 : i32
    %21 = arith.cmpi eq, %arg1, %c0_i32_16 : i32
    %22 = arith.extui %21 : i1 to i32
    %c0_i32_17 = arith.constant 0 : i32
    %23 = arith.cmpi ne, %22, %c0_i32_17 : i32
    scf.if %23 {
      %c0_18 = arith.constant 0 : index
      %c0_19 = arith.constant 0 : index
      %24 = vector.load %arg15[%c0_18, %c0_19] : memref<4x256xf32, #tpu.memory_space<vmem>>, vector<4x256xf32>
      %25 = vector.extract_strided_slice %24 {offsets = [0, 0], sizes = [4, 128], strides = [1, 1]} : vector<4x256xf32> to vector<4x128xf32>
      %26 = vector.extract_strided_slice %24 {offsets = [0, 128], sizes = [4, 128], strides = [1, 1]} : vector<4x256xf32> to vector<4x128xf32>
      %c0_20 = arith.constant 0 : index
      %c0_21 = arith.constant 0 : index
      %27 = vector.load %arg11[%c0_20, %c0_21] : memref<4x128xf32, #tpu.memory_space<vmem>>, vector<4x128xf32>
      tpu.vector_store %arg11[%c0_20, %c0_21], %25 {strides = array<i32>} : memref<4x128xf32, #tpu.memory_space<vmem>>, vector<4x128xf32>,
      %c0_22 = arith.constant 0 : index
      %c0_23 = arith.constant 0 : index
      %28 = vector.load %arg12[%c0_22, %c0_23] : memref<4x128xf32, #tpu.memory_space<vmem>>, vector<4x128xf32>
      tpu.vector_store %arg12[%c0_22, %c0_23], %26 {strides = array<i32>} : memref<4x128xf32, #tpu.memory_space<vmem>>, vector<4x128xf32>,
      %c0_24 = arith.constant 0 : index
      %c0_25 = arith.constant 0 : index
      %29 = vector.load %arg10[%c0_24, %c0_25] : memref<4x128xf32, #tpu.memory_space<vmem>>, vector<4x128xf32>
      %30 = math.exp %26 : vector<4x128xf32>
      %31 = arith.mulf %29, %30 : vector<4x128xf32>
      %32 = arith.addf %25, %31 : vector<4x128xf32>
      %c0_26 = arith.constant 0 : index
      %c0_27 = arith.constant 0 : index
      %33 = vector.load %arg13[%c0_26, %c0_27] : memref<4x128xf32, #tpu.memory_space<vmem>>, vector<4x128xf32>
      tpu.vector_store %arg13[%c0_26, %c0_27], %32 {strides = array<i32>} : memref<4x128xf32, #tpu.memory_space<vmem>>, vector<4x128xf32>,
    } else {
    }
    return
  }
  func.func @transform_0(%arg0: i32, %arg1: i32) -> (i32, i32) {
    %c0_i32 = arith.constant 0 : i32
    %c0_i32_0 = arith.constant 0 : i32
    return %arg0, %c0_i32 : i32, i32
  }
  func.func @transform_1(%arg0: i32, %arg1: i32) -> (i32, i32) {
    %c0_i32 = arith.constant 0 : i32
    %c0_i32_0 = arith.constant 0 : i32
    %c0_i32_1 = arith.constant 0 : i32
    return %c0_i32, %c0_i32_0 : i32, i32
  }
  func.func @transform_2(%arg0: i32, %arg1: i32) -> (i32, i32) {
    %c0_i32 = arith.constant 0 : i32
    %c0_i32_0 = arith.constant 0 : i32
    %c0_i32_1 = arith.constant 0 : i32
    return %c0_i32, %c0_i32_0 : i32, i32
  }
  func.func @transform_3(%arg0: i32, %arg1: i32) -> (i32, i32) {
    %c0_i32 = arith.constant 0 : i32
    %c0_i32_0 = arith.constant 0 : i32
    return %c0_i32, %arg1 : i32, i32
  }
  func.func @transform_4(%arg0: i32, %arg1: i32) -> (i32, i32) {
    %c0_i32 = arith.constant 0 : i32
    %c0_i32_0 = arith.constant 0 : i32
    return %c0_i32, %arg1 : i32, i32
  }
  func.func @transform_5(%arg0: i32, %arg1: i32) -> (i32, i32) {
    %c0_i32 = arith.constant 0 : i32
    %c0_i32_0 = arith.constant 0 : i32
    return %c0_i32, %arg1 : i32, i32
  }
  func.func @transform_6(%arg0: i32, %arg1: i32) -> (i32, i32) {
    %c0_i32 = arith.constant 0 : i32
    %c0_i32_0 = arith.constant 0 : i32
    return %arg1, %c0_i32 : i32, i32
  }
  func.func @transform_7(%arg0: i32, %arg1: i32) -> (i32, i32) {
    %c0_i32 = arith.constant 0 : i32
    %c0_i32_0 = arith.constant 0 : i32
    %c0_i32_1 = arith.constant 0 : i32
    return %c0_i32, %c0_i32_0 : i32, i32
  }
  func.func @transform_8(%arg0: i32, %arg1: i32) -> (i32, i32) {
    %c0_i32 = arith.constant 0 : i32
    %c0_i32_0 = arith.constant 0 : i32
    return %arg0, %c0_i32 : i32, i32
  }
  func.func @transform_9(%arg0: i32, %arg1: i32) -> (i32, i32) {
    %c0_i32 = arith.constant 0 : i32
    %c0_i32_0 = arith.constant 0 : i32
    return %arg0, %c0_i32 : i32, i32
  }
  func.func @transform_10(%arg0: i32, %arg1: i32) -> (i32, i32) {
    %c0_i32 = arith.constant 0 : i32
    %c0_i32_0 = arith.constant 0 : i32
    return %arg0, %c0_i32 : i32, i32
  }
  func.func @transform_11(%arg0: i32, %arg1: i32) -> (i32, i32) {
    %c0_i32 = arith.constant 0 : i32
    %c0_i32_0 = arith.constant 0 : i32
    return %arg0, %c0_i32 : i32, i32
  }
}

</mosaic_0001>

<llo_original>
// kernel: tpu_custom_call.1
$region0: #{tpu_custom_call.1}
  #allocation0 [shape = 'u32[]', space=smem, size = 0x4, offset = 0x4, fixed_abs, tag = 'smem constant byte address 0x4 - core index']
  #allocation1 [shape = 'u32[144,128]{1,0:T(1,128)}', space=vmem, size = 0x12000, scoped, tag = 'internal scratch']
  #allocation2 [shape = 'bf16[4,1024]{1,0:T(4,128)(2,1)}', space=vmem, size = 0x2000, scoped, tag = 'scratch operand']
  #allocation3 [shape = 'f32[4,256]{1,0:T(4,128)}', space=vmem, size = 0x1000, scoped, tag = 'scratch operand']
  %s0 = inlined_call_operand.hbm [shape: bf16[4,40], index: 0, kind: input, shape index: {}]
  %s1 = inlined_call_operand.hbm [shape: bf16[40,1024], index: 1, kind: input, shape index: {}]
  %s2 = inlined_call_operand.hbm [shape: f32[1,1024], index: 2, kind: input, shape index: {}]
  %s3 = inlined_call_operand.hbm [shape: s8[1024,1024], index: 3, kind: input, shape index: {}]
  %s4 = inlined_call_operand.vmem [shape: f32[1,1024], index: 4, kind: input, shape index: {}]
  %s5 = inlined_call_operand.vmem [shape: f32[1,1024], index: 5, kind: input, shape index: {}]
  %s6 = inlined_call_operand.hbm [shape: bf16[1024,256], index: 6, kind: input, shape index: {}]
  %s7 = inlined_call_operand.vmem [shape: f32[1,256], index: 7, kind: input, shape index: {}]
  %s8 = inlined_call_operand.vmem [shape: f32[4,128], index: 8, kind: input, shape index: {}]
  %s9 = inlined_call_operand.hbm [shape: f32[4,128], index: 9, kind: output, shape index: {0}]
  %s10 = inlined_call_operand.hbm [shape: f32[4,128], index: 10, kind: output, shape index: {1}]
  %s11 = inlined_call_operand.hbm [shape: f32[4,128], index: 11, kind: output, shape index: {2}]
  %12 = xla_tuple %s9, %s10, %s11
  %s13 = sld [smem:[#allocation0]]
  $region90: #{tpu_custom_call.1} parent=0
    _
  %s15 = ssub.s32 1, %s13
  %s16 = scalar_select 0, %s15, %s13
  $region1: #{tpu_custom_call.1} parent=0
    #allocation4 [shape = 'u8[1024]{0}', space=vmem, size = 0x400, scoped, tag = 'input window, operand 0, single buffered']
    #allocation5 [shape = 's32[1]{0}', space=sflag, size = 0x4, scoped, tag = 'scoped memory for tpu_custom_call.1']
    #allocation6 [shape = 's32[1]{0}', space=sflag, size = 0x4, scoped, tag = 'scoped memory for tpu_custom_call.1']
    #allocation7 [shape = 'u8[81920]{0}', space=vmem, size = 0x14000, scoped, tag = 'input window, operand 1, single buffered']
    #allocation8 [shape = 's32[1]{0}', space=sflag, size = 0x4, scoped, tag = 'scoped memory for tpu_custom_call.1']
    #allocation9 [shape = 'u8[4096]{0}', space=vmem, size = 0x1000, scoped, tag = 'input window, operand 2, single buffered']
    #allocation10 [shape = 'u8[1048576]{0}', space=vmem, size = 0x100000, scoped, tag = 'input window, operand 3, single buffered']
    #allocation11 [shape = 's32[1]{0}', space=sflag, size = 0x4, scoped, tag = 'scoped memory for tpu_custom_call.1']
    #allocation12 [shape = 'u8[524288]{0}', space=vmem, size = 0x80000, scoped, tag = 'input window, operand 6, single buffered']
    #allocation13 [shape = 'u8[2048]{0}', space=vmem, size = 0x800, scoped, tag = 'output window, operand 0, single buffered']
    #allocation14 [shape = 'u8[2048]{0}', space=vmem, size = 0x800, scoped, tag = 'output window, operand 1, single buffered']
    #allocation15 [shape = 's32[1]{0}', space=sflag, size = 0x4, scoped, tag = 'scoped memory for tpu_custom_call.1']
    #allocation16 [shape = 'u8[2048]{0}', space=vmem, size = 0x800, scoped, tag = 'output window, operand 2, single buffered']
    %17 = vsyncpa [#allocation5], 0
    %18 = vsyncpa [#allocation8], 0
    %19 = vsyncpa [#allocation11], 0
    %20 = vsyncpa [#allocation6], 0
    %21 = vsyncpa [#allocation15], 0
    // Predicated region
    $region2: #{tpu_custom_call.1} parent=1 // pred_check
      _
    $region3: #{tpu_custom_call.1} parent=1 // pred_check_branch
      %23 = sbr.rel (0) target = $region5
    $region4: #{tpu_custom_call.1} parent=1 // pred_region
      %s25 = ssub.s32 32, 32
      %26 = vsyncadd [#allocation5], %s25
      %s28 = sshll.u32 [#allocation4], 4
      %s29 = int_to_ptr.vmem [resolvable:$true] %s28
      %31 = dma.hbm_to_vmem [thread:$0]  %s0, 32, %s29, [#allocation5]
    $region5: #{tpu_custom_call.1} parent=1 // pred_fallthru
      _
    // Predicated region
    $region6: #{tpu_custom_call.1} parent=1 // pred_check
      _
    $region7: #{tpu_custom_call.1} parent=1 // pred_check_branch
      %33 = sbr.rel (0) target = $region9
    $region8: #{tpu_custom_call.1} parent=1 // pred_region
      %s35 = ssub.s32 2560, 2560
      %36 = vsyncadd [#allocation8], %s35
      %s37 = sshll.u32 [#allocation7], 4
      %s38 = int_to_ptr.vmem [resolvable:$true] %s37
      %43 = dma.hbm_to_vmem [thread:$0]  %s1, 2560, %s38, [#allocation8], 512, 512, 32
    $region9: #{tpu_custom_call.1} parent=1 // pred_fallthru
      _
    // Predicated region
    $region10: #{tpu_custom_call.1} parent=1 // pred_check
      _
    $region11: #{tpu_custom_call.1} parent=1 // pred_check_branch
      %45 = sbr.rel (0) target = $region13
    $region12: #{tpu_custom_call.1} parent=1 // pred_region
      %s47 = ssub.s32 128, 128
      %48 = vsyncadd [#allocation8], %s47
      %s50 = sshll.u32 [#allocation9], 4
      %s51 = int_to_ptr.vmem [resolvable:$true] %s50
      %53 = dma.hbm_to_vmem [thread:$0]  %s2, 128, %s51, [#allocation8]
    $region13: #{tpu_custom_call.1} parent=1 // pred_fallthru
      _
    // Predicated region
    $region14: #{tpu_custom_call.1} parent=1 // pred_check
      _
    $region15: #{tpu_custom_call.1} parent=1 // pred_check_branch
      %55 = sbr.rel (0) target = $region17
    $region16: #{tpu_custom_call.1} parent=1 // pred_region
      %s57 = ssub.s32 32768, 32768
      %58 = vsyncadd [#allocation11], %s57
      %s59 = sshll.u32 [#allocation10], 4
      %s60 = int_to_ptr.vmem [resolvable:$true] %s59
      %65 = dma.hbm_to_vmem [thread:$0]  %s3, 32768, %s60, [#allocation11], 1024, 1024, 64
    $region17: #{tpu_custom_call.1} parent=1 // pred_fallthru
      _
    // Predicated region
    $region18: #{tpu_custom_call.1} parent=1 // pred_check
      _
    $region19: #{tpu_custom_call.1} parent=1 // pred_check_branch
      %67 = sbr.rel (0) target = $region21
    $region20: #{tpu_custom_call.1} parent=1 // pred_region
      _
    $region21: #{tpu_custom_call.1} parent=1 // pred_fallthru
      _
    // Predicated region
    $region22: #{tpu_custom_call.1} parent=1 // pred_check
      _
    $region23: #{tpu_custom_call.1} parent=1 // pred_check_branch
      %69 = sbr.rel (0) target = $region25
    $region24: #{tpu_custom_call.1} parent=1 // pred_region
      _
    $region25: #{tpu_custom_call.1} parent=1 // pred_fallthru
      _
    // Predicated region
    $region26: #{tpu_custom_call.1} parent=1 // pred_check
      _
    $region27: #{tpu_custom_call.1} parent=1 // pred_check_branch
      %71 = sbr.rel (0) target = $region29
    $region28: #{tpu_custom_call.1} parent=1 // pred_region
      %s73 = ssub.s32 16384, 16384
      %74 = vsyncadd [#allocation11], %s73
      %s75 = sshll.u32 [#allocation12], 4
      %s76 = int_to_ptr.vmem [resolvable:$true] %s75
      %81 = dma.hbm_to_vmem [thread:$0]  %s6, 16384, %s76, [#allocation11], 128, 128, 8
    $region29: #{tpu_custom_call.1} parent=1 // pred_fallthru
      _
    // Predicated region
    $region30: #{tpu_custom_call.1} parent=1 // pred_check
      _
    $region31: #{tpu_custom_call.1} parent=1 // pred_check_branch
      %83 = sbr.rel (0) target = $region33
    $region32: #{tpu_custom_call.1} parent=1 // pred_region
      _
    $region33: #{tpu_custom_call.1} parent=1 // pred_fallthru
      _
    // Predicated region
    $region34: #{tpu_custom_call.1} parent=1 // pred_check
      _
    $region35: #{tpu_custom_call.1} parent=1 // pred_check_branch
      %85 = sbr.rel (0) target = $region37
    $region36: #{tpu_custom_call.1} parent=1 // pred_region
      _
    $region37: #{tpu_custom_call.1} parent=1 // pred_fallthru
      _
    // Predicated region
    $region38: #{tpu_custom_call.1} parent=1 // pred_check
      _
    $region39: #{tpu_custom_call.1} parent=1 // pred_check_branch
      %87 = sbr.rel (0) target = $region41
    $region40: #{tpu_custom_call.1} parent=1 // pred_region
      %88 = dma.done [#allocation5], 32
    $region41: #{tpu_custom_call.1} parent=1 // pred_fallthru
      _
    // Predicated region
    $region42: #{tpu_custom_call.1} parent=1 // pred_check
      _
    $region43: #{tpu_custom_call.1} parent=1 // pred_check_branch
      %90 = sbr.rel (0) target = $region45
    $region44: #{tpu_custom_call.1} parent=1 // pred_region
      %91 = dma.done [#allocation8], 2560
    $region45: #{tpu_custom_call.1} parent=1 // pred_fallthru
      _
    // Predicated region
    $region46: #{tpu_custom_call.1} parent=1 // pred_check
      _
    $region47: #{tpu_custom_call.1} parent=1 // pred_check_branch
      %93 = sbr.rel (0) target = $region49
    $region48: #{tpu_custom_call.1} parent=1 // pred_region
      %94 = dma.done [#allocation8], 128
    $region49: #{tpu_custom_call.1} parent=1 // pred_fallthru
      _
    // Predicated region
    $region50: #{tpu_custom_call.1} parent=1 // pred_check
      _
    $region51: #{tpu_custom_call.1} parent=1 // pred_check_branch
      %96 = sbr.rel (0) target = $region53
    $region52: #{tpu_custom_call.1} parent=1 // pred_region
      %97 = dma.done [#allocation11], 32768
    $region53: #{tpu_custom_call.1} parent=1 // pred_fallthru
      _
    // Predicated region
    $region54: #{tpu_custom_call.1} parent=1 // pred_check
      _
    $region55: #{tpu_custom_call.1} parent=1 // pred_check_branch
      %99 = sbr.rel (0) target = $region57
    $region56: #{tpu_custom_call.1} parent=1 // pred_region
      %100 = dma.done [#allocation11], 16384
    $region57: #{tpu_custom_call.1} parent=1 // pred_fallthru
      _
    %p102 = scmp.eq.s32.totalorder 0, 0
    // Predicated region
    $region58: #{tpu_custom_call.1} parent=1 // pred_check
      %p103 = pneg %p102
    $region59: #{tpu_custom_call.1} parent=1 // pred_check_branch
      %105 = sbr.rel (%p103) target = $region61
    $region60: #{tpu_custom_call.1} parent=1 // pred_region
      %v106 = vld [vmem:[#allocation4] sm:$0x3]
      %v107 = vld [vmem:[#allocation7] sm:$0xff]
      %v108 = vld [vmem:[#allocation7 + $0x8] sm:$0xff]
      %v109 = vld [vmem:[#allocation7 + $0x10] sm:$0xff]
      %v110 = vld [vmem:[#allocation7 + $0x18] sm:$0xff]
      %v111 = vld [vmem:[#allocation7 + $0x20] sm:$0xff]
      %v112 = vld [vmem:[#allocation7 + $0x28] sm:$0xff]
      %v113 = vld [vmem:[#allocation7 + $0x30] sm:$0xff]
      %v114 = vld [vmem:[#allocation7 + $0x38] sm:$0xff]
      %v115 = vld [vmem:[#allocation7 + $0x40] sm:$0xff]
      %v116 = vld [vmem:[#allocation7 + $0x48] sm:$0xff]
      %v117 = vld [vmem:[#allocation7 + $0x50] sm:$0xff]
      %v118 = vld [vmem:[#allocation7 + $0x58] sm:$0xff]
      %v119 = vld [vmem:[#allocation7 + $0x60] sm:$0xff]
      %v120 = vld [vmem:[#allocation7 + $0x68] sm:$0xff]
      %v121 = vld [vmem:[#allocation7 + $0x70] sm:$0xff]
      %v122 = vld [vmem:[#allocation7 + $0x78] sm:$0xff]
      %v123 = vld [vmem:[#allocation7 + $0x80] sm:$0xff]
      %v124 = vld [vmem:[#allocation7 + $0x88] sm:$0xff]
      %v125 = vld [vmem:[#allocation7 + $0x90] sm:$0xff]
      %v126 = vld [vmem:[#allocation7 + $0x98] sm:$0xff]
      %v127 = vld [vmem:[#allocation9] sm:$0xff]
      %v129 = vlaneseq
      %v130 = vshrl.u32 %v129, 7
      %v131 = vsub.s32 0, %v130
      %v132 = vrot.slane %v127, %v131
      %v133 = vlaneseq
      %v134 = vshrl.u32 %v133, 7
      %v135 = vsub.s32 1, %v134
      %v136 = vrot.slane %v127, %v135
      %v137 = vlaneseq
      %v138 = vshrl.u32 %v137, 7
      %v139 = vsub.s32 2, %v138
      %v140 = vrot.slane %v127, %v139
      %v141 = vlaneseq
      %v142 = vshrl.u32 %v141, 7
      %v143 = vsub.s32 3, %v142
      %v144 = vrot.slane %v127, %v143
      %v145 = vlaneseq
      %v146 = vshrl.u32 %v145, 7
      %v147 = vsub.s32 4, %v146
      %v148 = vrot.slane %v127, %v147
      %v149 = vlaneseq
      %v150 = vshrl.u32 %v149, 7
      %v151 = vsub.s32 5, %v150
      %v152 = vrot.slane %v127, %v151
      %v153 = vlaneseq
      %v154 = vshrl.u32 %v153, 7
      %v155 = vsub.s32 6, %v154
      %v156 = vrot.slane %v127, %v155
      %v157 = vlaneseq
      %v158 = vshrl.u32 %v157, 7
      %v159 = vsub.s32 7, %v158
      %v160 = vrot.slane %v127, %v159
      %v189 = vunpack.c.l.b16 %v107
      %v190 = vunpack.c.h.b16 %v107
      %v191 = vunpack.c.l.b16 %v108
      %v192 = vunpack.c.h.b16 %v108
      %v193 = vunpack.c.l.b16 %v109
      %v194 = vunpack.c.h.b16 %v109
      %v195 = vunpack.c.l.b16 %v110
      %v196 = vunpack.c.h.b16 %v110
      %v197 = vunpack.c.l.b16 %v111
      %v198 = vunpack.c.h.b16 %v111
      %v199 = vunpack.c.l.b16 %v112
      %v200 = vunpack.c.h.b16 %v112
      %v201 = vunpack.c.l.b16 %v113
      %v202 = vunpack.c.h.b16 %v113
      %v203 = vunpack.c.l.b16 %v114
      %v204 = vunpack.c.h.b16 %v114
      %v205 = vunpack.c.l.b16 %v115
      %v206 = vunpack.c.h.b16 %v115
      %v207 = vunpack.c.l.b16 %v116
      %v208 = vunpack.c.h.b16 %v116
      %v209 = vunpack.c.l.b16 %v117
      %v210 = vunpack.c.h.b16 %v117
      %v211 = vunpack.c.l.b16 %v118
      %v212 = vunpack.c.h.b16 %v118
      %v213 = vunpack.c.l.b16 %v119
      %v214 = vunpack.c.h.b16 %v119
      %v215 = vunpack.c.l.b16 %v120
      %v216 = vunpack.c.h.b16 %v120
      %v217 = vunpack.c.l.b16 %v121
      %v218 = vunpack.c.h.b16 %v121
      %v219 = vunpack.c.l.b16 %v122
      %v220 = vunpack.c.h.b16 %v122
      %v221 = vunpack.c.l.b16 %v123
      %v222 = vunpack.c.h.b16 %v123
      %v223 = vunpack.c.l.b16 %v124
      %v224 = vunpack.c.h.b16 %v124
      %v225 = vunpack.c.l.b16 %v125
      %v226 = vunpack.c.h.b16 %v125
      %v227 = vunpack.c.l.b16 %v126
      %v228 = vunpack.c.h.b16 %v126
      %v229 = vpack.c.b16 %v197, %v189
      %v230 = vpack.c.b16 %v198, %v190
      %v231 = vpack.c.b16 %v199, %v191
      %v232 = vpack.c.b16 %v200, %v192
      %v233 = vpack.c.b16 %v201, %v193
      %v234 = vpack.c.b16 %v202, %v194
      %v235 = vpack.c.b16 %v203, %v195
      %v236 = vpack.c.b16 %v204, %v196
      %v237 = vpack.c.b16 %v213, %v205
      %v238 = vpack.c.b16 %v214, %v206
      %v239 = vpack.c.b16 %v215, %v207
      %v240 = vpack.c.b16 %v216, %v208
      %v241 = vpack.c.b16 %v217, %v209
      %v242 = vpack.c.b16 %v218, %v210
      %v243 = vpack.c.b16 %v219, %v211
      %v244 = vpack.c.b16 %v220, %v212
      %v245 = vpack.c.b16 %v221, %v221
      %v246 = vpack.c.b16 %v222, %v222
      %v247 = vpack.c.b16 %v223, %v223
      %v248 = vpack.c.b16 %v224, %v224
      %v249 = vpack.c.b16 %v225, %v225
      %v250 = vpack.c.b16 %v226, %v226
      %v251 = vpack.c.b16 %v227, %v227
      %v252 = vpack.c.b16 %v228, %v228
      %vm269 = vcmask 326656
      %v271 = vsel %vm269, %v106, 0
      %vm273 = vcmask 1043456
      %v275 = vsel %vm273, %v245, 0
      %v278 = vsel %vm273, %v246, 0
      %v281 = vsel %vm273, %v247, 0
      %v284 = vsel %vm273, %v248, 0
      %v287 = vsel %vm273, %v249, 0
      %v290 = vsel %vm273, %v250, 0
      %v293 = vsel %vm273, %v251, 0
      %v296 = vsel %vm273, %v252, 0
      %298 = vmatprep.subr.bf16.mxu0 %v230
      %299 = vmatpush1.bf16.msra.mxu0 %v229
      %300 = vmatprep.subr.bf16.mxu0 %v238
      %301 = vmatpush1.bf16.msra.mxu0 %v237
      %302 = vmatprep.subr.bf16.mxu0 %v278
      %303 = vmatpush1.bf16.msra.mxu0 %v275
      %304 = vmatprep.subr.bf16.mxu0 0
      %305 = vmatpush1.bf16.msra.mxu0 0
      %306 = vmatprep.subr.bf16.mxu0 0
      %307 = vmatpush1.bf16.msra.mxu0 0
      %308 = vmatprep.subr.bf16.mxu0 0
      %309 = vmatpush1.bf16.msra.mxu0 0
      %310 = vmatprep.subr.bf16.mxu0 0
      %311 = vmatpush1.bf16.msra.mxu0 0
      %312 = vmatprep.subr.bf16.mxu0 0
      %313 = vmatpush1.bf16.msra.mxu0 0
      %314 = vmatprep.subr.bf16.mxu0 0
      %315 = vmatpush1.bf16.msra.mxu0 0
      %316 = vmatprep.subr.bf16.mxu0 0
      %317 = vmatpush1.bf16.msra.mxu0 0
      %318 = vmatprep.subr.bf16.mxu0 0
      %319 = vmatpush1.bf16.msra.mxu0 0
      %320 = vmatprep.subr.bf16.mxu0 0
      %321 = vmatpush1.bf16.msra.mxu0 0
      %322 = vmatprep.subr.bf16.mxu0 0
      %323 = vmatpush1.bf16.msra.mxu0 0
      %324 = vmatprep.subr.bf16.mxu0 0
      %325 = vmatpush1.bf16.msra.mxu0 0
      %326 = vmatprep.subr.bf16.mxu0 0
      %327 = vmatpush1.bf16.msra.mxu0 0
      %328 = vmatprep.subr.bf16.mxu0 0
      %329 = vmatpush1.bf16.msra.mxu0 0
      %330 = vmatprep.mubr.bf16.mxu0 0
      %331 = vmatmul.mubr.bf16.gmra.mrb[0].mxu0 %v271
      %v332 = vpop.f32.mrb[0].mxu0
      %v333 = vadd.f32 %v132, %v332
      %v334 = vpop.f32.mrb[0].mxu0
      %v335 = vadd.f32 %v136, %v334
      %v336 = vpop.f32.mrb[0].mxu0
      %v337 = vpop.f32.mrb[0].mxu0
      %338 = vdwg.mxu0
      %339 = vmatprep.subr.bf16.mxu0 %v232
      %340 = vmatpush1.bf16.msra.mxu0 %v231
      %341 = vmatprep.subr.bf16.mxu0 %v240
      %342 = vmatpush1.bf16.msra.mxu0 %v239
      %343 = vmatprep.subr.bf16.mxu0 %v284
      %344 = vmatpush1.bf16.msra.mxu0 %v281
      %345 = vmatprep.subr.bf16.mxu0 0
      %346 = vmatpush1.bf16.msra.mxu0 0
      %347 = vmatprep.subr.bf16.mxu0 0
      %348 = vmatpush1.bf16.msra.mxu0 0
      %349 = vmatprep.subr.bf16.mxu0 0
      %350 = vmatpush1.bf16.msra.mxu0 0
      %351 = vmatprep.subr.bf16.mxu0 0
      %352 = vmatpush1.bf16.msra.mxu0 0
      %353 = vmatprep.subr.bf16.mxu0 0
      %354 = vmatpush1.bf16.msra.mxu0 0
      %355 = vmatprep.subr.bf16.mxu0 0
      %356 = vmatpush1.bf16.msra.mxu0 0
      %357 = vmatprep.subr.bf16.mxu0 0
      %358 = vmatpush1.bf16.msra.mxu0 0
      %359 = vmatprep.subr.bf16.mxu0 0
      %360 = vmatpush1.bf16.msra.mxu0 0
      %361 = vmatprep.subr.bf16.mxu0 0
      %362 = vmatpush1.bf16.msra.mxu0 0
      %363 = vmatprep.subr.bf16.mxu0 0
      %364 = vmatpush1.bf16.msra.mxu0 0
      %365 = vmatprep.subr.bf16.mxu0 0
      %366 = vmatpush1.bf16.msra.mxu0 0
      %367 = vmatprep.subr.bf16.mxu0 0
      %368 = vmatpush1.bf16.msra.mxu0 0
      %369 = vmatprep.subr.bf16.mxu0 0
      %370 = vmatpush1.bf16.msra.mxu0 0
      %371 = vmatprep.mubr.bf16.mxu0 0
      %372 = vmatmul.mubr.bf16.gmra.mrb[0].mxu0 %v271
      %v373 = vpop.f32.mrb[0].mxu0
      %v374 = vadd.f32 %v140, %v373
      %v375 = vpop.f32.mrb[0].mxu0
      %v376 = vadd.f32 %v144, %v375
      %v377 = vpop.f32.mrb[0].mxu0
      %v378 = vpop.f32.mrb[0].mxu0
      %379 = vdwg.mxu0
      %380 = vmatprep.subr.bf16.mxu0 %v234
      %381 = vmatpush1.bf16.msra.mxu0 %v233
      %382 = vmatprep.subr.bf16.mxu0 %v242
      %383 = vmatpush1.bf16.msra.mxu0 %v241
      %384 = vmatprep.subr.bf16.mxu0 %v290
      %385 = vmatpush1.bf16.msra.mxu0 %v287
      %386 = vmatprep.subr.bf16.mxu0 0
      %387 = vmatpush1.bf16.msra.mxu0 0
      %388 = vmatprep.subr.bf16.mxu0 0
      %389 = vmatpush1.bf16.msra.mxu0 0
      %390 = vmatprep.subr.bf16.mxu0 0
      %391 = vmatpush1.bf16.msra.mxu0 0
      %392 = vmatprep.subr.bf16.mxu0 0
      %393 = vmatpush1.bf16.msra.mxu0 0
      %394 = vmatprep.subr.bf16.mxu0 0
      %395 = vmatpush1.bf16.msra.mxu0 0
      %396 = vmatprep.subr.bf16.mxu0 0
      %397 = vmatpush1.bf16.msra.mxu0 0
      %398 = vmatprep.subr.bf16.mxu0 0
      %399 = vmatpush1.bf16.msra.mxu0 0
      %400 = vmatprep.subr.bf16.mxu0 0
      %401 = vmatpush1.bf16.msra.mxu0 0
      %402 = vmatprep.subr.bf16.mxu0 0
      %403 = vmatpush1.bf16.msra.mxu0 0
      %404 = vmatprep.subr.bf16.mxu0 0
      %405 = vmatpush1.bf16.msra.mxu0 0
      %406 = vmatprep.subr.bf16.mxu0 0
      %407 = vmatpush1.bf16.msra.mxu0 0
      %408 = vmatprep.subr.bf16.mxu0 0
      %409 = vmatpush1.bf16.msra.mxu0 0
      %410 = vmatprep.subr.bf16.mxu0 0
      %411 = vmatpush1.bf16.msra.mxu0 0
      %412 = vmatprep.mubr.bf16.mxu0 0
      %413 = vmatmul.mubr.bf16.gmra.mrb[0].mxu0 %v271
      %v414 = vpop.f32.mrb[0].mxu0
      %v415 = vadd.f32 %v148, %v414
      %v416 = vpop.f32.mrb[0].mxu0
      %v417 = vadd.f32 %v152, %v416
      %v418 = vpop.f32.mrb[0].mxu0
      %v419 = vpop.f32.mrb[0].mxu0
      %420 = vdwg.mxu0
      %421 = vmatprep.subr.bf16.mxu0 %v236
      %422 = vmatpush1.bf16.msra.mxu0 %v235
      %423 = vmatprep.subr.bf16.mxu0 %v244
      %424 = vmatpush1.bf16.msra.mxu0 %v243
      %425 = vmatprep.subr.bf16.mxu0 %v296
      %426 = vmatpush1.bf16.msra.mxu0 %v293
      %427 = vmatprep.subr.bf16.mxu0 0
      %428 = vmatpush1.bf16.msra.mxu0 0
      %429 = vmatprep.subr.bf16.mxu0 0
      %430 = vmatpush1.bf16.msra.mxu0 0
      %431 = vmatprep.subr.bf16.mxu0 0
      %432 = vmatpush1.bf16.msra.mxu0 0
      %433 = vmatprep.subr.bf16.mxu0 0
      %434 = vmatpush1.bf16.msra.mxu0 0
      %435 = vmatprep.subr.bf16.mxu0 0
      %436 = vmatpush1.bf16.msra.mxu0 0
      %437 = vmatprep.subr.bf16.mxu0 0
      %438 = vmatpush1.bf16.msra.mxu0 0
      %439 = vmatprep.subr.bf16.mxu0 0
      %440 = vmatpush1.bf16.msra.mxu0 0
      %441 = vmatprep.subr.bf16.mxu0 0
      %442 = vmatpush1.bf16.msra.mxu0 0
      %443 = vmatprep.subr.bf16.mxu0 0
      %444 = vmatpush1.bf16.msra.mxu0 0
      %445 = vmatprep.subr.bf16.mxu0 0
      %446 = vmatpush1.bf16.msra.mxu0 0
      %447 = vmatprep.subr.bf16.mxu0 0
      %448 = vmatpush1.bf16.msra.mxu0 0
      %449 = vmatprep.subr.bf16.mxu0 0
      %450 = vmatpush1.bf16.msra.mxu0 0
      %451 = vmatprep.subr.bf16.mxu0 0
      %452 = vmatpush1.bf16.msra.mxu0 0
      %453 = vmatprep.mubr.bf16.mxu0 0
      %454 = vmatmul.mubr.bf16.gmra.mrb[0].mxu0 %v271
      %v455 = vpop.f32.mrb[0].mxu0
      %v456 = vadd.f32 %v156, %v455
      %v457 = vpop.f32.mrb[0].mxu0
      %v458 = vadd.f32 %v160, %v457
      %v459 = vpop.f32.mrb[0].mxu0
      %v460 = vpop.f32.mrb[0].mxu0
      %461 = vdwg.mxu0
      %v462 = vmax.f32 %v333, 0.0
      %v463 = vmax.f32 %v335, 0.0
      %v464 = vmax.f32 %v374, 0.0
      %v465 = vmax.f32 %v376, 0.0
      %v466 = vmax.f32 %v415, 0.0
      %v467 = vmax.f32 %v417, 0.0
      %v468 = vmax.f32 %v456, 0.0
      %v469 = vmax.f32 %v458, 0.0
      %v470 = vpack.c.bf16 %v462, %v462
      %v471 = vpack.c.bf16 %v463, %v463
      %v472 = vpack.c.bf16 %v464, %v464
      %v473 = vpack.c.bf16 %v465, %v465
      %v474 = vpack.c.bf16 %v466, %v466
      %v475 = vpack.c.bf16 %v467, %v467
      %v476 = vpack.c.bf16 %v468, %v468
      %v477 = vpack.c.bf16 %v469, %v469
      %v486 = vcombine.low %v470, %v471
      %v487 = vcombine.low %v472, %v473
      %v489 = vunpack.c.l.s4 1983009808
      %v490 = vunpack.c.0.s8 %v489
      %v491 = vlaneseq
      %v492 = vshrl.u32 %v491, 7
      %v493 = vsub.s32 %v490, %v492
      %v494 = vrot.slane %v486, %v493
      %v496 = vunpack.c.l.s4 1983009808
      %v497 = vunpack.c.0.s8 %v496
      %v498 = vlaneseq
      %v499 = vshrl.u32 %v498, 7
      %v500 = vsub.s32 %v497, %v499
      %v501 = vrot.slane %v487, %v500
      %v502 = vcombine.low %v494, %v501
      %v503 = vcombine.low %v474, %v475
      %v504 = vcombine.low %v476, %v477
      %v506 = vunpack.c.l.s4 1983009808
      %v507 = vunpack.c.0.s8 %v506
      %v508 = vlaneseq
      %v509 = vshrl.u32 %v508, 7
      %v510 = vsub.s32 %v507, %v509
      %v511 = vrot.slane %v503, %v510
      %v513 = vunpack.c.l.s4 1983009808
      %v514 = vunpack.c.0.s8 %v513
      %v515 = vlaneseq
      %v516 = vshrl.u32 %v515, 7
      %v517 = vsub.s32 %v514, %v516
      %v518 = vrot.slane %v504, %v517
      %v519 = vcombine.low %v511, %v518
      %522 = vst [vmem:[#allocation2] sm:$0xff] %v502
      %523 = vst [vmem:[#allocation2 + $0x8] sm:$0xff] %v519
      %v524 = vld [vmem:[%s7] sm:$0x3]
      %v526 = vlaneseq
      %v527 = vshrl.u32 %v526, 7
      %v528 = vsub.s32 0, %v527
      %v529 = vrot.slane %v524, %v528
      %v530 = vlaneseq
      %v531 = vshrl.u32 %v530, 7
      %v532 = vsub.s32 1, %v531
      %v533 = vrot.slane %v524, %v532
      %v534 = vcombine.low %v529, %v533
      %536 = vst [vmem:[#allocation3] sm:$0xff] %v534
    $region61: #{tpu_custom_call.1} parent=1 // pred_fallthru
      _
    %v537 = vld [vmem:[#allocation10] sm:$0xff]
    %v538 = vld [vmem:[#allocation10 + $0x8] sm:$0xff]
    %v539 = vld [vmem:[#allocation10 + $0x10] sm:$0xff]
    %v540 = vld [vmem:[#allocation10 + $0x18] sm:$0xff]
    %v541 = vld [vmem:[#allocation10 + $0x20] sm:$0xff]
    %v542 = vld [vmem:[#allocation10 + $0x28] sm:$0xff]
    %v543 = vld [vmem:[#allocation10 + $0x30] sm:$0xff]
    %v544 = vld [vmem:[#allocation10 + $0x38] sm:$0xff]
    %v545 = vld [vmem:[#allocation10 + $0x40] sm:$0xff]
    %v546 = vld [vmem:[#allocation10 + $0x48] sm:$0xff]
    %v547 = vld [vmem:[#allocation10 + $0x50] sm:$0xff]
    %v548 = vld [vmem:[#allocation10 + $0x58] sm:$0xff]
    %v549 = vld [vmem:[#allocation10 + $0x60] sm:$0xff]
    %v550 = vld [vmem:[#allocation10 + $0x68] sm:$0xff]
    %v551 = vld [vmem:[#allocation10 + $0x70] sm:$0xff]
    %v552 = vld [vmem:[#allocation10 + $0x78] sm:$0xff]
    %v553 = vld [vmem:[#allocation10 + $0x80] sm:$0xff]
    %v554 = vld [vmem:[#allocation10 + $0x88] sm:$0xff]
    %v555 = vld [vmem:[#allocation10 + $0x90] sm:$0xff]
    %v556 = vld [vmem:[#allocation10 + $0x98] sm:$0xff]
    %v557 = vld [vmem:[#allocation10 + $0xa0] sm:$0xff]
    %v558 = vld [vmem:[#allocation10 + $0xa8] sm:$0xff]
    %v559 = vld [vmem:[#allocation10 + $0xb0] sm:$0xff]
    %v560 = vld [vmem:[#allocation10 + $0xb8] sm:$0xff]
    %v561 = vld [vmem:[#allocation10 + $0xc0] sm:$0xff]
    %v562 = vld [vmem:[#allocation10 + $0xc8] sm:$0xff]
    %v563 = vld [vmem:[#allocation10 + $0xd0] sm:$0xff]
    %v564 = vld [vmem:[#allocation10 + $0xd8] sm:$0xff]
    %v565 = vld [vmem:[#allocation10 + $0xe0] sm:$0xff]
    %v566 = vld [vmem:[#allocation10 + $0xe8] sm:$0xff]
    %v567 = vld [vmem:[#allocation10 + $0xf0] sm:$0xff]
    %v568 = vld [vmem:[#allocation10 + $0xf8] sm:$0xff]
    %v569 = vld [vmem:[#allocation10 + $0x100] sm:$0xff]
    %v570 = vld [vmem:[#allocation10 + $0x108] sm:$0xff]
    %v571 = vld [vmem:[#allocation10 + $0x110] sm:$0xff]
    %v572 = vld [vmem:[#allocation10 + $0x118] sm:$0xff]
    %v573 = vld [vmem:[#allocation10 + $0x120] sm:$0xff]
    %v574 = vld [vmem:[#allocation10 + $0x128] sm:$0xff]
    %v575 = vld [vmem:[#allocation10 + $0x130] sm:$0xff]
    %v576 = vld [vmem:[#allocation10 + $0x138] sm:$0xff]
    %v577 = vld [vmem:[#allocation10 + $0x140] sm:$0xff]
    %v578 = vld [vmem:[#allocation10 + $0x148] sm:$0xff]
    %v579 = vld [vmem:[#allocation10 + $0x150] sm:$0xff]
    %v580 = vld [vmem:[#allocation10 + $0x158] sm:$0xff]
    %v581 = vld [vmem:[#allocation10 + $0x160] sm:$0xff]
    %v582 = vld [vmem:[#allocation10 + $0x168] sm:$0xff]
    %v583 = vld [vmem:[#allocation10 + $0x170] sm:$0xff]
    %v584 = vld [vmem:[#allocation10 + $0x178] sm:$0xff]
    %v585 = vld [vmem:[#allocation10 + $0x180] sm:$0xff]
    %v586 = vld [vmem:[#allocation10 + $0x188] sm:$0xff]
    %v587 = vld [vmem:[#allocation10 + $0x190] sm:$0xff]
    %v588 = vld [vmem:[#allocation10 + $0x198] sm:$0xff]
    %v589 = vld [vmem:[#allocation10 + $0x1a0] sm:$0xff]
    %v590 = vld [vmem:[#allocation10 + $0x1a8] sm:$0xff]
    %v591 = vld [vmem:[#allocation10 + $0x1b0] sm:$0xff]
    %v592 = vld [vmem:[#allocation10 + $0x1b8] sm:$0xff]
    %v593 = vld [vmem:[#allocation10 + $0x1c0] sm:$0xff]
    %v594 = vld [vmem:[#allocation10 + $0x1c8] sm:$0xff]
    %v595 = vld [vmem:[#allocation10 + $0x1d0] sm:$0xff]
    %v596 = vld [vmem:[#allocation10 + $0x1d8] sm:$0xff]
    %v597 = vld [vmem:[#allocation10 + $0x1e0] sm:$0xff]
    %v598 = vld [vmem:[#allocation10 + $0x1e8] sm:$0xff]
    %v599 = vld [vmem:[#allocation10 + $0x1f0] sm:$0xff]
    %v600 = vld [vmem:[#allocation10 + $0x1f8] sm:$0xff]
    %v601 = vld [vmem:[#allocation10 + $0x200] sm:$0xff]
    %v602 = vld [vmem:[#allocation10 + $0x208] sm:$0xff]
    %v603 = vld [vmem:[#allocation10 + $0x210] sm:$0xff]
    %v604 = vld [vmem:[#allocation10 + $0x218] sm:$0xff]
    %v605 = vld [vmem:[#allocation10 + $0x220] sm:$0xff]
    %v606 = vld [vmem:[#allocation10 + $0x228] sm:$0xff]
    %v607 = vld [vmem:[#allocation10 + $0x230] sm:$0xff]
    %v608 = vld [vmem:[#allocation10 + $0x238] sm:$0xff]
    %v609 = vld [vmem:[#allocation10 + $0x240] sm:$0xff]
    %v610 = vld [vmem:[#allocation10 + $0x248] sm:$0xff]
    %v611 = vld [vmem:[#allocation10 + $0x250] sm:$0xff]
    %v612 = vld [vmem:[#allocation10 + $0x258] sm:$0xff]
    %v613 = vld [vmem:[#allocation10 + $0x260] sm:$0xff]
    %v614 = vld [vmem:[#allocation10 + $0x268] sm:$0xff]
    %v615 = vld [vmem:[#allocation10 + $0x270] sm:$0xff]
    %v616 = vld [vmem:[#allocation10 + $0x278] sm:$0xff]
    %v617 = vld [vmem:[#allocation10 + $0x280] sm:$0xff]
    %v618 = vld [vmem:[#allocation10 + $0x288] sm:$0xff]
    %v619 = vld [vmem:[#allocation10 + $0x290] sm:$0xff]
    %v620 = vld [vmem:[#allocation10 + $0x298] sm:$0xff]
    %v621 = vld [vmem:[#allocation10 + $0x2a0] sm:$0xff]
    %v622 = vld [vmem:[#allocation10 + $0x2a8] sm:$0xff]
    %v623 = vld [vmem:[#allocation10 + $0x2b0] sm:$0xff]
    %v624 = vld [vmem:[#allocation10 + $0x2b8] sm:$0xff]
    %v625 = vld [vmem:[#allocation10 + $0x2c0] sm:$0xff]
    %v626 = vld [vmem:[#allocation10 + $0x2c8] sm:$0xff]
    %v627 = vld [vmem:[#allocation10 + $0x2d0] sm:$0xff]
    %v628 = vld [vmem:[#allocation10 + $0x2d8] sm:$0xff]
    %v629 = vld [vmem:[#allocation10 + $0x2e0] sm:$0xff]
    %v630 = vld [vmem:[#allocation10 + $0x2e8] sm:$0xff]
    %v631 = vld [vmem:[#allocation10 + $0x2f0] sm:$0xff]
    %v632 = vld [vmem:[#allocation10 + $0x2f8] sm:$0xff]
    %v633 = vld [vmem:[#allocation10 + $0x300] sm:$0xff]
    %v634 = vld [vmem:[#allocation10 + $0x308] sm:$0xff]
    %v635 = vld [vmem:[#allocation10 + $0x310] sm:$0xff]
    %v636 = vld [vmem:[#allocation10 + $0x318] sm:$0xff]
    %v637 = vld [vmem:[#allocation10 + $0x320] sm:$0xff]
    %v638 = vld [vmem:[#allocation10 + $0x328] sm:$0xff]
    %v639 = vld [vmem:[#allocation10 + $0x330] sm:$0xff]
    %v640 = vld [vmem:[#allocation10 + $0x338] sm:$0xff]
    %v641 = vld [vmem:[#allocation10 + $0x340] sm:$0xff]
    %v642 = vld [vmem:[#allocation10 + $0x348] sm:$0xff]
    %v643 = vld [vmem:[#allocation10 + $0x350] sm:$0xff]
    %v644 = vld [vmem:[#allocation10 + $0x358] sm:$0xff]
    %v645 = vld [vmem:[#allocation10 + $0x360] sm:$0xff]
    %v646 = vld [vmem:[#allocation10 + $0x368] sm:$0xff]
    %v647 = vld [vmem:[#allocation10 + $0x370] sm:$0xff]
    %v648 = vld [vmem:[#allocation10 + $0x378] sm:$0xff]
    %v649 = vld [vmem:[#allocation10 + $0x380] sm:$0xff]
    %v650 = vld [vmem:[#allocation10 + $0x388] sm:$0xff]
    %v651 = vld [vmem:[#allocation10 + $0x390] sm:$0xff]
    %v652 = vld [vmem:[#allocation10 + $0x398] sm:$0xff]
    %v653 = vld [vmem:[#allocation10 + $0x3a0] sm:$0xff]
    %v654 = vld [vmem:[#allocation10 + $0x3a8] sm:$0xff]
    %v655 = vld [vmem:[#allocation10 + $0x3b0] sm:$0xff]
    %v656 = vld [vmem:[#allocation10 + $0x3b8] sm:$0xff]
    %v657 = vld [vmem:[#allocation10 + $0x3c0] sm:$0xff]
    %v658 = vld [vmem:[#allocation10 + $0x3c8] sm:$0xff]
    %v659 = vld [vmem:[#allocation10 + $0x3d0] sm:$0xff]
    %v660 = vld [vmem:[#allocation10 + $0x3d8] sm:$0xff]
    %v661 = vld [vmem:[#allocation10 + $0x3e0] sm:$0xff]
    %v662 = vld [vmem:[#allocation10 + $0x3e8] sm:$0xff]
    %v663 = vld [vmem:[#allocation10 + $0x3f0] sm:$0xff]
    %v664 = vld [vmem:[#allocation10 + $0x3f8] sm:$0xff]
    %v665 = vld [vmem:[#allocation10 + $0x400] sm:$0xff]
    %v666 = vld [vmem:[#allocation10 + $0x408] sm:$0xff]
    %v667 = vld [vmem:[#allocation10 + $0x410] sm:$0xff]
    %v668 = vld [vmem:[#allocation10 + $0x418] sm:$0xff]
    %v669 = vld [vmem:[#allocation10 + $0x420] sm:$0xff]
    %v670 = vld [vmem:[#allocation10 + $0x428] sm:$0xff]
    %v671 = vld [vmem:[#allocation10 + $0x430] sm:$0xff]
    %v672 = vld [vmem:[#allocation10 + $0x438] sm:$0xff]
    %v673 = vld [vmem:[#allocation10 + $0x440] sm:$0xff]
    %v674 = vld [vmem:[#allocation10 + $0x448] sm:$0xff]
    %v675 = vld [vmem:[#allocation10 + $0x450] sm:$0xff]
    %v676 = vld [vmem:[#allocation10 + $0x458] sm:$0xff]
    %v677 = vld [vmem:[#allocation10 + $0x460] sm:$0xff]
    %v678 = vld [vmem:[#allocation10 + $0x468] sm:$0xff]
    %v679 = vld [vmem:[#allocation10 + $0x470] sm:$0xff]
    %v680 = vld [vmem:[#allocation10 + $0x478] sm:$0xff]
    %v681 = vld [vmem:[#allocation10 + $0x480] sm:$0xff]
    %v682 = vld [vmem:[#allocation10 + $0x488] sm:$0xff]
    %v683 = vld [vmem:[#allocation10 + $0x490] sm:$0xff]
    %v684 = vld [vmem:[#allocation10 + $0x498] sm:$0xff]
    %v685 = vld [vmem:[#allocation10 + $0x4a0] sm:$0xff]
    %v686 = vld [vmem:[#allocation10 + $0x4a8] sm:$0xff]
    %v687 = vld [vmem:[#allocation10 + $0x4b0] sm:$0xff]
    %v688 = vld [vmem:[#allocation10 + $0x4b8] sm:$0xff]
    %v689 = vld [vmem:[#allocation10 + $0x4c0] sm:$0xff]
    %v690 = vld [vmem:[#allocation10 + $0x4c8] sm:$0xff]
    %v691 = vld [vmem:[#allocation10 + $0x4d0] sm:$0xff]
    %v692 = vld [vmem:[#allocation10 + $0x4d8] sm:$0xff]
    %v693 = vld [vmem:[#allocation10 + $0x4e0] sm:$0xff]
    %v694 = vld [vmem:[#allocation10 + $0x4e8] sm:$0xff]
    %v695 = vld [vmem:[#allocation10 + $0x4f0] sm:$0xff]
    %v696 = vld [vmem:[#allocation10 + $0x4f8] sm:$0xff]
    %v697 = vld [vmem:[#allocation10 + $0x500] sm:$0xff]
    %v698 = vld [vmem:[#allocation10 + $0x508] sm:$0xff]
    %v699 = vld [vmem:[#allocation10 + $0x510] sm:$0xff]
    %v700 = vld [vmem:[#allocation10 + $0x518] sm:$0xff]
    %v701 = vld [vmem:[#allocation10 + $0x520] sm:$0xff]
    %v702 = vld [vmem:[#allocation10 + $0x528] sm:$0xff]
    %v703 = vld [vmem:[#allocation10 + $0x530] sm:$0xff]
    %v704 = vld [vmem:[#allocation10 + $0x538] sm:$0xff]
    %v705 = vld [vmem:[#allocation10 + $0x540] sm:$0xff]
    %v706 = vld [vmem:[#allocation10 + $0x548] sm:$0xff]
    %v707 = vld [vmem:[#allocation10 + $0x550] sm:$0xff]
    %v708 = vld [vmem:[#allocation10 + $0x558] sm:$0xff]
    %v709 = vld [vmem:[#allocation10 + $0x560] sm:$0xff]
    %v710 = vld [vmem:[#allocation10 + $0x568] sm:$0xff]
    %v711 = vld [vmem:[#allocation10 + $0x570] sm:$0xff]
    %v712 = vld [vmem:[#allocation10 + $0x578] sm:$0xff]
    %v713 = vld [vmem:[#allocation10 + $0x580] sm:$0xff]
    %v714 = vld [vmem:[#allocation10 + $0x588] sm:$0xff]
    %v715 = vld [vmem:[#allocation10 + $0x590] sm:$0xff]
    %v716 = vld [vmem:[#allocation10 + $0x598] sm:$0xff]
    %v717 = vld [vmem:[#allocation10 + $0x5a0] sm:$0xff]
    %v718 = vld [vmem:[#allocation10 + $0x5a8] sm:$0xff]
    %v719 = vld [vmem:[#allocation10 + $0x5b0] sm:$0xff]
    %v720 = vld [vmem:[#allocation10 + $0x5b8] sm:$0xff]
    %v721 = vld [vmem:[#allocation10 + $0x5c0] sm:$0xff]
    %v722 = vld [vmem:[#allocation10 + $0x5c8] sm:$0xff]
    %v723 = vld [vmem:[#allocation10 + $0x5d0] sm:$0xff]
    %v724 = vld [vmem:[#allocation10 + $0x5d8] sm:$0xff]
    %v725 = vld [vmem:[#allocation10 + $0x5e0] sm:$0xff]
    %v726 = vld [vmem:[#allocation10 + $0x5e8] sm:$0xff]
    %v727 = vld [vmem:[#allocation10 + $0x5f0] sm:$0xff]
    %v728 = vld [vmem:[#allocation10 + $0x5f8] sm:$0xff]
    %v729 = vld [vmem:[#allocation10 + $0x600] sm:$0xff]
    %v730 = vld [vmem:[#allocation10 + $0x608] sm:$0xff]
    %v731 = vld [vmem:[#allocation10 + $0x610] sm:$0xff]
    %v732 = vld [vmem:[#allocation10 + $0x618] sm:$0xff]
    %v733 = vld [vmem:[#allocation10 + $0x620] sm:$0xff]
    %v734 = vld [vmem:[#allocation10 + $0x628] sm:$0xff]
    %v735 = vld [vmem:[#allocation10 + $0x630] sm:$0xff]
    %v736 = vld [vmem:[#allocation10 + $0x638] sm:$0xff]
    %v737 = vld [vmem:[#allocation10 + $0x640] sm:$0xff]
    %v738 = vld [vmem:[#allocation10 + $0x648] sm:$0xff]
    %v739 = vld [vmem:[#allocation10 + $0x650] sm:$0xff]
    %v740 = vld [vmem:[#allocation10 + $0x658] sm:$0xff]
    %v741 = vld [vmem:[#allocation10 + $0x660] sm:$0xff]
    %v742 = vld [vmem:[#allocation10 + $0x668] sm:$0xff]
    %v743 = vld [vmem:[#allocation10 + $0x670] sm:$0xff]
    %v744 = vld [vmem:[#allocation10 + $0x678] sm:$0xff]
    %v745 = vld [vmem:[#allocation10 + $0x680] sm:$0xff]
    %v746 = vld [vmem:[#allocation10 + $0x688] sm:$0xff]
    %v747 = vld [vmem:[#allocation10 + $0x690] sm:$0xff]
    %v748 = vld [vmem:[#allocation10 + $0x698] sm:$0xff]
    %v749 = vld [vmem:[#allocation10 + $0x6a0] sm:$0xff]
    %v750 = vld [vmem:[#allocation10 + $0x6a8] sm:$0xff]
    %v751 = vld [vmem:[#allocation10 + $0x6b0] sm:$0xff]
    %v752 = vld [vmem:[#allocation10 + $0x6b8] sm:$0xff]
    %v753 = vld [vmem:[#allocation10 + $0x6c0] sm:$0xff]
    %v754 = vld [vmem:[#allocation10 + $0x6c8] sm:$0xff]
    %v755 = vld [vmem:[#allocation10 + $0x6d0] sm:$0xff]
    %v756 = vld [vmem:[#allocation10 + $0x6d8] sm:$0xff]
    %v757 = vld [vmem:[#allocation10 + $0x6e0] sm:$0xff]
    %v758 = vld [vmem:[#allocation10 + $0x6e8] sm:$0xff]
    %v759 = vld [vmem:[#allocation10 + $0x6f0] sm:$0xff]
    %v760 = vld [vmem:[#allocation10 + $0x6f8] sm:$0xff]
    %v761 = vld [vmem:[#allocation10 + $0x700] sm:$0xff]
    %v762 = vld [vmem:[#allocation10 + $0x708] sm:$0xff]
    %v763 = vld [vmem:[#allocation10 + $0x710] sm:$0xff]
    %v764 = vld [vmem:[#allocation10 + $0x718] sm:$0xff]
    %v765 = vld [vmem:[#allocation10 + $0x720] sm:$0xff]
    %v766 = vld [vmem:[#allocation10 + $0x728] sm:$0xff]
    %v767 = vld [vmem:[#allocation10 + $0x730] sm:$0xff]
    %v768 = vld [vmem:[#allocation10 + $0x738] sm:$0xff]
    %v769 = vld [vmem:[#allocation10 + $0x740] sm:$0xff]
    %v770 = vld [vmem:[#allocation10 + $0x748] sm:$0xff]
    %v771 = vld [vmem:[#allocation10 + $0x750] sm:$0xff]
    %v772 = vld [vmem:[#allocation10 + $0x758] sm:$0xff]
    %v773 = vld [vmem:[#allocation10 + $0x760] sm:$0xff]
    %v774 = vld [vmem:[#allocation10 + $0x768] sm:$0xff]
    %v775 = vld [vmem:[#allocation10 + $0x770] sm:$0xff]
    %v776 = vld [vmem:[#allocation10 + $0x778] sm:$0xff]
    %v777 = vld [vmem:[#allocation10 + $0x780] sm:$0xff]
    %v778 = vld [vmem:[#allocation10 + $0x788] sm:$0xff]
    %v779 = vld [vmem:[#allocation10 + $0x790] sm:$0xff]
    %v780 = vld [vmem:[#allocation10 + $0x798] sm:$0xff]
    %v781 = vld [vmem:[#allocation10 + $0x7a0] sm:$0xff]
    %v782 = vld [vmem:[#allocation10 + $0x7a8] sm:$0xff]
    %v783 = vld [vmem:[#allocation10 + $0x7b0] sm:$0xff]
    %v784 = vld [vmem:[#allocation10 + $0x7b8] sm:$0xff]
    %v785 = vld [vmem:[#allocation10 + $0x7c0] sm:$0xff]
    %v786 = vld [vmem:[#allocation10 + $0x7c8] sm:$0xff]
    %v787 = vld [vmem:[#allocation10 + $0x7d0] sm:$0xff]
    %v788 = vld [vmem:[#allocation10 + $0x7d8] sm:$0xff]
    %v789 = vld [vmem:[#allocation10 + $0x7e0] sm:$0xff]
    %v790 = vld [vmem:[#allocation10 + $0x7e8] sm:$0xff]
    %v791 = vld [vmem:[#allocation10 + $0x7f0] sm:$0xff]
    %v792 = vld [vmem:[#allocation10 + $0x7f8] sm:$0xff]
    %v793 = vunpack.c.l.s8.bf16 %v537
    %v794 = vunpack.c.l.s8.bf16 %v538
    %v795 = vunpack.c.l.s8.bf16 %v539
    %v796 = vunpack.c.l.s8.bf16 %v540
    %v797 = vunpack.c.l.s8.bf16 %v541
    %v798 = vunpack.c.l.s8.bf16 %v542
    %v799 = vunpack.c.l.s8.bf16 %v543
    %v800 = vunpack.c.l.s8.bf16 %v544
    %v801 = vunpack.c.h.s8.bf16 %v537
    %v802 = vunpack.c.h.s8.bf16 %v538
    %v803 = vunpack.c.h.s8.bf16 %v539
    %v804 = vunpack.c.h.s8.bf16 %v540
    %v805 = vunpack.c.h.s8.bf16 %v541
    %v806 = vunpack.c.h.s8.bf16 %v542
    %v807 = vunpack.c.h.s8.bf16 %v543
    %v808 = vunpack.c.h.s8.bf16 %v544
    %v809 = vunpack.c.l.s8.bf16 %v545
    %v810 = vunpack.c.l.s8.bf16 %v546
    %v811 = vunpack.c.l.s8.bf16 %v547
    %v812 = vunpack.c.l.s8.bf16 %v548
    %v813 = vunpack.c.l.s8.bf16 %v549
    %v814 = vunpack.c.l.s8.bf16 %v550
    %v815 = vunpack.c.l.s8.bf16 %v551
    %v816 = vunpack.c.l.s8.bf16 %v552
    %v817 = vunpack.c.h.s8.bf16 %v545
    %v818 = vunpack.c.h.s8.bf16 %v546
    %v819 = vunpack.c.h.s8.bf16 %v547
    %v820 = vunpack.c.h.s8.bf16 %v548
    %v821 = vunpack.c.h.s8.bf16 %v549
    %v822 = vunpack.c.h.s8.bf16 %v550
    %v823 = vunpack.c.h.s8.bf16 %v551
    %v824 = vunpack.c.h.s8.bf16 %v552
    %v825 = vunpack.c.l.s8.bf16 %v553
    %v826 = vunpack.c.l.s8.bf16 %v554
    %v827 = vunpack.c.l.s8.bf16 %v555
    %v828 = vunpack.c.l.s8.bf16 %v556
    %v829 = vunpack.c.l.s8.bf16 %v557
    %v830 = vunpack.c.l.s8.bf16 %v558
    %v831 = vunpack.c.l.s8.bf16 %v559
    %v832 = vunpack.c.l.s8.bf16 %v560
    %v833 = vunpack.c.h.s8.bf16 %v553
    %v834 = vunpack.c.h.s8.bf16 %v554
    %v835 = vunpack.c.h.s8.bf16 %v555
    %v836 = vunpack.c.h.s8.bf16 %v556
    %v837 = vunpack.c.h.s8.bf16 %v557
    %v838 = vunpack.c.h.s8.bf16 %v558
    %v839 = vunpack.c.h.s8.bf16 %v559
    %v840 = vunpack.c.h.s8.bf16 %v560
    %v841 = vunpack.c.l.s8.bf16 %v561
    %v842 = vunpack.c.l.s8.bf16 %v562
    %v843 = vunpack.c.l.s8.bf16 %v563
    %v844 = vunpack.c.l.s8.bf16 %v564
    %v845 = vunpack.c.l.s8.bf16 %v565
    %v846 = vunpack.c.l.s8.bf16 %v566
    %v847 = vunpack.c.l.s8.bf16 %v567
    %v848 = vunpack.c.l.s8.bf16 %v568
    %v849 = vunpack.c.h.s8.bf16 %v561
    %v850 = vunpack.c.h.s8.bf16 %v562
    %v851 = vunpack.c.h.s8.bf16 %v563
    %v852 = vunpack.c.h.s8.bf16 %v564
    %v853 = vunpack.c.h.s8.bf16 %v565
    %v854 = vunpack.c.h.s8.bf16 %v566
    %v855 = vunpack.c.h.s8.bf16 %v567
    %v856 = vunpack.c.h.s8.bf16 %v568
    %v857 = vunpack.c.l.s8.bf16 %v569
    %v858 = vunpack.c.l.s8.bf16 %v570
    %v859 = vunpack.c.l.s8.bf16 %v571
    %v860 = vunpack.c.l.s8.bf16 %v572
    %v861 = vunpack.c.l.s8.bf16 %v573
    %v862 = vunpack.c.l.s8.bf16 %v574
    %v863 = vunpack.c.l.s8.bf16 %v575
    %v864 = vunpack.c.l.s8.bf16 %v576
    %v865 = vunpack.c.h.s8.bf16 %v569
    %v866 = vunpack.c.h.s8.bf16 %v570
    %v867 = vunpack.c.h.s8.bf16 %v571
    %v868 = vunpack.c.h.s8.bf16 %v572
    %v869 = vunpack.c.h.s8.bf16 %v573
    %v870 = vunpack.c.h.s8.bf16 %v574
    %v871 = vunpack.c.h.s8.bf16 %v575
    %v872 = vunpack.c.h.s8.bf16 %v576
    %v873 = vunpack.c.l.s8.bf16 %v577
    %v874 = vunpack.c.l.s8.bf16 %v578
    %v875 = vunpack.c.l.s8.bf16 %v579
    %v876 = vunpack.c.l.s8.bf16 %v580
    %v877 = vunpack.c.l.s8.bf16 %v581
    %v878 = vunpack.c.l.s8.bf16 %v582
    %v879 = vunpack.c.l.s8.bf16 %v583
    %v880 = vunpack.c.l.s8.bf16 %v584
    %v881 = vunpack.c.h.s8.bf16 %v577
    %v882 = vunpack.c.h.s8.bf16 %v578
    %v883 = vunpack.c.h.s8.bf16 %v579
    %v884 = vunpack.c.h.s8.bf16 %v580
    %v885 = vunpack.c.h.s8.bf16 %v581
    %v886 = vunpack.c.h.s8.bf16 %v582
    %v887 = vunpack.c.h.s8.bf16 %v583
    %v888 = vunpack.c.h.s8.bf16 %v584
    %v889 = vunpack.c.l.s8.bf16 %v585
    %v890 = vunpack.c.l.s8.bf16 %v586
    %v891 = vunpack.c.l.s8.bf16 %v587
    %v892 = vunpack.c.l.s8.bf16 %v588
    %v893 = vunpack.c.l.s8.bf16 %v589
    %v894 = vunpack.c.l.s8.bf16 %v590
    %v895 = vunpack.c.l.s8.bf16 %v591
    %v896 = vunpack.c.l.s8.bf16 %v592
    %v897 = vunpack.c.h.s8.bf16 %v585
    %v898 = vunpack.c.h.s8.bf16 %v586
    %v899 = vunpack.c.h.s8.bf16 %v587
    %v900 = vunpack.c.h.s8.bf16 %v588
    %v901 = vunpack.c.h.s8.bf16 %v589
    %v902 = vunpack.c.h.s8.bf16 %v590
    %v903 = vunpack.c.h.s8.bf16 %v591
    %v904 = vunpack.c.h.s8.bf16 %v592
    %v905 = vunpack.c.l.s8.bf16 %v593
    %v906 = vunpack.c.l.s8.bf16 %v594
    %v907 = vunpack.c.l.s8.bf16 %v595
    %v908 = vunpack.c.l.s8.bf16 %v596
    %v909 = vunpack.c.l.s8.bf16 %v597
    %v910 = vunpack.c.l.s8.bf16 %v598
    %v911 = vunpack.c.l.s8.bf16 %v599
    %v912 = vunpack.c.l.s8.bf16 %v600
    %v913 = vunpack.c.h.s8.bf16 %v593
    %v914 = vunpack.c.h.s8.bf16 %v594
    %v915 = vunpack.c.h.s8.bf16 %v595
    %v916 = vunpack.c.h.s8.bf16 %v596
    %v917 = vunpack.c.h.s8.bf16 %v597
    %v918 = vunpack.c.h.s8.bf16 %v598
    %v919 = vunpack.c.h.s8.bf16 %v599
    %v920 = vunpack.c.h.s8.bf16 %v600
    %v921 = vunpack.c.l.s8.bf16 %v601
    %v922 = vunpack.c.l.s8.bf16 %v602
    %v923 = vunpack.c.l.s8.bf16 %v603
    %v924 = vunpack.c.l.s8.bf16 %v604
    %v925 = vunpack.c.l.s8.bf16 %v605
    %v926 = vunpack.c.l.s8.bf16 %v606
    %v927 = vunpack.c.l.s8.bf16 %v607
    %v928 = vunpack.c.l.s8.bf16 %v608
    %v929 = vunpack.c.h.s8.bf16 %v601
    %v930 = vunpack.c.h.s8.bf16 %v602
    %v931 = vunpack.c.h.s8.bf16 %v603
    %v932 = vunpack.c.h.s8.bf16 %v604
    %v933 = vunpack.c.h.s8.bf16 %v605
    %v934 = vunpack.c.h.s8.bf16 %v606
    %v935 = vunpack.c.h.s8.bf16 %v607
    %v936 = vunpack.c.h.s8.bf16 %v608
    %v937 = vunpack.c.l.s8.bf16 %v609
    %v938 = vunpack.c.l.s8.bf16 %v610
    %v939 = vunpack.c.l.s8.bf16 %v611
    %v940 = vunpack.c.l.s8.bf16 %v612
    %v941 = vunpack.c.l.s8.bf16 %v613
    %v942 = vunpack.c.l.s8.bf16 %v614
    %v943 = vunpack.c.l.s8.bf16 %v615
    %v944 = vunpack.c.l.s8.bf16 %v616
    %v945 = vunpack.c.h.s8.bf16 %v609
    %v946 = vunpack.c.h.s8.bf16 %v610
    %v947 = vunpack.c.h.s8.bf16 %v611
    %v948 = vunpack.c.h.s8.bf16 %v612
    %v949 = vunpack.c.h.s8.bf16 %v613
    %v950 = vunpack.c.h.s8.bf16 %v614
    %v951 = vunpack.c.h.s8.bf16 %v615
    %v952 = vunpack.c.h.s8.bf16 %v616
    %v953 = vunpack.c.l.s8.bf16 %v617
    %v954 = vunpack.c.l.s8.bf16 %v618
    %v955 = vunpack.c.l.s8.bf16 %v619
    %v956 = vunpack.c.l.s8.bf16 %v620
    %v957 = vunpack.c.l.s8.bf16 %v621
    %v958 = vunpack.c.l.s8.bf16 %v622
    %v959 = vunpack.c.l.s8.bf16 %v623
    %v960 = vunpack.c.l.s8.bf16 %v624
    %v961 = vunpack.c.h.s8.bf16 %v617
    %v962 = vunpack.c.h.s8.bf16 %v618
    %v963 = vunpack.c.h.s8.bf16 %v619
    %v964 = vunpack.c.h.s8.bf16 %v620
    %v965 = vunpack.c.h.s8.bf16 %v621
    %v966 = vunpack.c.h.s8.bf16 %v622
    %v967 = vunpack.c.h.s8.bf16 %v623
    %v968 = vunpack.c.h.s8.bf16 %v624
    %v969 = vunpack.c.l.s8.bf16 %v625
    %v970 = vunpack.c.l.s8.bf16 %v626
    %v971 = vunpack.c.l.s8.bf16 %v627
    %v972 = vunpack.c.l.s8.bf16 %v628
    %v973 = vunpack.c.l.s8.bf16 %v629
    %v974 = vunpack.c.l.s8.bf16 %v630
    %v975 = vunpack.c.l.s8.bf16 %v631
    %v976 = vunpack.c.l.s8.bf16 %v632
    %v977 = vunpack.c.h.s8.bf16 %v625
    %v978 = vunpack.c.h.s8.bf16 %v626
    %v979 = vunpack.c.h.s8.bf16 %v627
    %v980 = vunpack.c.h.s8.bf16 %v628
    %v981 = vunpack.c.h.s8.bf16 %v629
    %v982 = vunpack.c.h.s8.bf16 %v630
    %v983 = vunpack.c.h.s8.bf16 %v631
    %v984 = vunpack.c.h.s8.bf16 %v632
    %v985 = vunpack.c.l.s8.bf16 %v633
    %v986 = vunpack.c.l.s8.bf16 %v634
    %v987 = vunpack.c.l.s8.bf16 %v635
    %v988 = vunpack.c.l.s8.bf16 %v636
    %v989 = vunpack.c.l.s8.bf16 %v637
    %v990 = vunpack.c.l.s8.bf16 %v638
    %v991 = vunpack.c.l.s8.bf16 %v639
    %v992 = vunpack.c.l.s8.bf16 %v640
    %v993 = vunpack.c.h.s8.bf16 %v633
    %v994 = vunpack.c.h.s8.bf16 %v634
    %v995 = vunpack.c.h.s8.bf16 %v635
    %v996 = vunpack.c.h.s8.bf16 %v636
    %v997 = vunpack.c.h.s8.bf16 %v637
    %v998 = vunpack.c.h.s8.bf16 %v638
    %v999 = vunpack.c.h.s8.bf16 %v639
    %v1000 = vunpack.c.h.s8.bf16 %v640
    %v1001 = vunpack.c.l.s8.bf16 %v641
    %v1002 = vunpack.c.l.s8.bf16 %v642
    %v1003 = vunpack.c.l.s8.bf16 %v643
    %v1004 = vunpack.c.l.s8.bf16 %v644
    %v1005 = vunpack.c.l.s8.bf16 %v645
    %v1006 = vunpack.c.l.s8.bf16 %v646
    %v1007 = vunpack.c.l.s8.bf16 %v647
    %v1008 = vunpack.c.l.s8.bf16 %v648
    %v1009 = vunpack.c.h.s8.bf16 %v641
    %v1010 = vunpack.c.h.s8.bf16 %v642
    %v1011 = vunpack.c.h.s8.bf16 %v643
    %v1012 = vunpack.c.h.s8.bf16 %v644
    %v1013 = vunpack.c.h.s8.bf16 %v645
    %v1014 = vunpack.c.h.s8.bf16 %v646
    %v1015 = vunpack.c.h.s8.bf16 %v647
    %v1016 = vunpack.c.h.s8.bf16 %v648
    %v1017 = vunpack.c.l.s8.bf16 %v649
    %v1018 = vunpack.c.l.s8.bf16 %v650
    %v1019 = vunpack.c.l.s8.bf16 %v651
    %v1020 = vunpack.c.l.s8.bf16 %v652
    %v1021 = vunpack.c.l.s8.bf16 %v653
    %v1022 = vunpack.c.l.s8.bf16 %v654
    %v1023 = vunpack.c.l.s8.bf16 %v655
    %v1024 = vunpack.c.l.s8.bf16 %v656
    %v1025 = vunpack.c.h.s8.bf16 %v649
    %v1026 = vunpack.c.h.s8.bf16 %v650
    %v1027 = vunpack.c.h.s8.bf16 %v651
    %v1028 = vunpack.c.h.s8.bf16 %v652
    %v1029 = vunpack.c.h.s8.bf16 %v653
    %v1030 = vunpack.c.h.s8.bf16 %v654
    %v1031 = vunpack.c.h.s8.bf16 %v655
    %v1032 = vunpack.c.h.s8.bf16 %v656
    %v1033 = vunpack.c.l.s8.bf16 %v657
    %v1034 = vunpack.c.l.s8.bf16 %v658
    %v1035 = vunpack.c.l.s8.bf16 %v659
    %v1036 = vunpack.c.l.s8.bf16 %v660
    %v1037 = vunpack.c.l.s8.bf16 %v661
    %v1038 = vunpack.c.l.s8.bf16 %v662
    %v1039 = vunpack.c.l.s8.bf16 %v663
    %v1040 = vunpack.c.l.s8.bf16 %v664
    %v1041 = vunpack.c.h.s8.bf16 %v657
    %v1042 = vunpack.c.h.s8.bf16 %v658
    %v1043 = vunpack.c.h.s8.bf16 %v659
    %v1044 = vunpack.c.h.s8.bf16 %v660
    %v1045 = vunpack.c.h.s8.bf16 %v661
    %v1046 = vunpack.c.h.s8.bf16 %v662
    %v1047 = vunpack.c.h.s8.bf16 %v663
    %v1048 = vunpack.c.h.s8.bf16 %v664
    %v1049 = vunpack.c.l.s8.bf16 %v665
    %v1050 = vunpack.c.l.s8.bf16 %v666
    %v1051 = vunpack.c.l.s8.bf16 %v667
    %v1052 = vunpack.c.l.s8.bf16 %v668
    %v1053 = vunpack.c.l.s8.bf16 %v669
    %v1054 = vunpack.c.l.s8.bf16 %v670
    %v1055 = vunpack.c.l.s8.bf16 %v671
    %v1056 = vunpack.c.l.s8.bf16 %v672
    %v1057 = vunpack.c.h.s8.bf16 %v665
    %v1058 = vunpack.c.h.s8.bf16 %v666
    %v1059 = vunpack.c.h.s8.bf16 %v667
    %v1060 = vunpack.c.h.s8.bf16 %v668
    %v1061 = vunpack.c.h.s8.bf16 %v669
    %v1062 = vunpack.c.h.s8.bf16 %v670
    %v1063 = vunpack.c.h.s8.bf16 %v671
    %v1064 = vunpack.c.h.s8.bf16 %v672
    %v1065 = vunpack.c.l.s8.bf16 %v673
    %v1066 = vunpack.c.l.s8.bf16 %v674
    %v1067 = vunpack.c.l.s8.bf16 %v675
    %v1068 = vunpack.c.l.s8.bf16 %v676
    %v1069 = vunpack.c.l.s8.bf16 %v677
    %v1070 = vunpack.c.l.s8.bf16 %v678
    %v1071 = vunpack.c.l.s8.bf16 %v679
    %v1072 = vunpack.c.l.s8.bf16 %v680
    %v1073 = vunpack.c.h.s8.bf16 %v673
    %v1074 = vunpack.c.h.s8.bf16 %v674
    %v1075 = vunpack.c.h.s8.bf16 %v675
    %v1076 = vunpack.c.h.s8.bf16 %v676
    %v1077 = vunpack.c.h.s8.bf16 %v677
    %v1078 = vunpack.c.h.s8.bf16 %v678
    %v1079 = vunpack.c.h.s8.bf16 %v679
    %v1080 = vunpack.c.h.s8.bf16 %v680
    %v1081 = vunpack.c.l.s8.bf16 %v681
    %v1082 = vunpack.c.l.s8.bf16 %v682
    %v1083 = vunpack.c.l.s8.bf16 %v683
    %v1084 = vunpack.c.l.s8.bf16 %v684
    %v1085 = vunpack.c.l.s8.bf16 %v685
    %v1086 = vunpack.c.l.s8.bf16 %v686
    %v1087 = vunpack.c.l.s8.bf16 %v687
    %v1088 = vunpack.c.l.s8.bf16 %v688
    %v1089 = vunpack.c.h.s8.bf16 %v681
    %v1090 = vunpack.c.h.s8.bf16 %v682
    %v1091 = vunpack.c.h.s8.bf16 %v683
    %v1092 = vunpack.c.h.s8.bf16 %v684
    %v1093 = vunpack.c.h.s8.bf16 %v685
    %v1094 = vunpack.c.h.s8.bf16 %v686
    %v1095 = vunpack.c.h.s8.bf16 %v687
    %v1096 = vunpack.c.h.s8.bf16 %v688
    %v1097 = vunpack.c.l.s8.bf16 %v689
    %v1098 = vunpack.c.l.s8.bf16 %v690
    %v1099 = vunpack.c.l.s8.bf16 %v691
    %v1100 = vunpack.c.l.s8.bf16 %v692
    %v1101 = vunpack.c.l.s8.bf16 %v693
    %v1102 = vunpack.c.l.s8.bf16 %v694
    %v1103 = vunpack.c.l.s8.bf16 %v695
    %v1104 = vunpack.c.l.s8.bf16 %v696
    %v1105 = vunpack.c.h.s8.bf16 %v689
    %v1106 = vunpack.c.h.s8.bf16 %v690
    %v1107 = vunpack.c.h.s8.bf16 %v691
    %v1108 = vunpack.c.h.s8.bf16 %v692
    %v1109 = vunpack.c.h.s8.bf16 %v693
    %v1110 = vunpack.c.h.s8.bf16 %v694
    %v1111 = vunpack.c.h.s8.bf16 %v695
    %v1112 = vunpack.c.h.s8.bf16 %v696
    %v1113 = vunpack.c.l.s8.bf16 %v697
    %v1114 = vunpack.c.l.s8.bf16 %v698
    %v1115 = vunpack.c.l.s8.bf16 %v699
    %v1116 = vunpack.c.l.s8.bf16 %v700
    %v1117 = vunpack.c.l.s8.bf16 %v701
    %v1118 = vunpack.c.l.s8.bf16 %v702
    %v1119 = vunpack.c.l.s8.bf16 %v703
    %v1120 = vunpack.c.l.s8.bf16 %v704
    %v1121 = vunpack.c.h.s8.bf16 %v697
    %v1122 = vunpack.c.h.s8.bf16 %v698
    %v1123 = vunpack.c.h.s8.bf16 %v699
    %v1124 = vunpack.c.h.s8.bf16 %v700
    %v1125 = vunpack.c.h.s8.bf16 %v701
    %v1126 = vunpack.c.h.s8.bf16 %v702
    %v1127 = vunpack.c.h.s8.bf16 %v703
    %v1128 = vunpack.c.h.s8.bf16 %v704
    %v1129 = vunpack.c.l.s8.bf16 %v705
    %v1130 = vunpack.c.l.s8.bf16 %v706
    %v1131 = vunpack.c.l.s8.bf16 %v707
    %v1132 = vunpack.c.l.s8.bf16 %v708
    %v1133 = vunpack.c.l.s8.bf16 %v709
    %v1134 = vunpack.c.l.s8.bf16 %v710
    %v1135 = vunpack.c.l.s8.bf16 %v711
    %v1136 = vunpack.c.l.s8.bf16 %v712
    %v1137 = vunpack.c.h.s8.bf16 %v705
    %v1138 = vunpack.c.h.s8.bf16 %v706
    %v1139 = vunpack.c.h.s8.bf16 %v707
    %v1140 = vunpack.c.h.s8.bf16 %v708
    %v1141 = vunpack.c.h.s8.bf16 %v709
    %v1142 = vunpack.c.h.s8.bf16 %v710
    %v1143 = vunpack.c.h.s8.bf16 %v711
    %v1144 = vunpack.c.h.s8.bf16 %v712
    %v1145 = vunpack.c.l.s8.bf16 %v713
    %v1146 = vunpack.c.l.s8.bf16 %v714
    %v1147 = vunpack.c.l.s8.bf16 %v715
    %v1148 = vunpack.c.l.s8.bf16 %v716
    %v1149 = vunpack.c.l.s8.bf16 %v717
    %v1150 = vunpack.c.l.s8.bf16 %v718
    %v1151 = vunpack.c.l.s8.bf16 %v719
    %v1152 = vunpack.c.l.s8.bf16 %v720
    %v1153 = vunpack.c.h.s8.bf16 %v713
    %v1154 = vunpack.c.h.s8.bf16 %v714
    %v1155 = vunpack.c.h.s8.bf16 %v715
    %v1156 = vunpack.c.h.s8.bf16 %v716
    %v1157 = vunpack.c.h.s8.bf16 %v717
    %v1158 = vunpack.c.h.s8.bf16 %v718
    %v1159 = vunpack.c.h.s8.bf16 %v719
    %v1160 = vunpack.c.h.s8.bf16 %v720
    %v1161 = vunpack.c.l.s8.bf16 %v721
    %v1162 = vunpack.c.l.s8.bf16 %v722
    %v1163 = vunpack.c.l.s8.bf16 %v723
    %v1164 = vunpack.c.l.s8.bf16 %v724
    %v1165 = vunpack.c.l.s8.bf16 %v725
    %v1166 = vunpack.c.l.s8.bf16 %v726
    %v1167 = vunpack.c.l.s8.bf16 %v727
    %v1168 = vunpack.c.l.s8.bf16 %v728
    %v1169 = vunpack.c.h.s8.bf16 %v721
    %v1170 = vunpack.c.h.s8.bf16 %v722
    %v1171 = vunpack.c.h.s8.bf16 %v723
    %v1172 = vunpack.c.h.s8.bf16 %v724
    %v1173 = vunpack.c.h.s8.bf16 %v725
    %v1174 = vunpack.c.h.s8.bf16 %v726
    %v1175 = vunpack.c.h.s8.bf16 %v727
    %v1176 = vunpack.c.h.s8.bf16 %v728
    %v1177 = vunpack.c.l.s8.bf16 %v729
    %v1178 = vunpack.c.l.s8.bf16 %v730
    %v1179 = vunpack.c.l.s8.bf16 %v731
    %v1180 = vunpack.c.l.s8.bf16 %v732
    %v1181 = vunpack.c.l.s8.bf16 %v733
    %v1182 = vunpack.c.l.s8.bf16 %v734
    %v1183 = vunpack.c.l.s8.bf16 %v735
    %v1184 = vunpack.c.l.s8.bf16 %v736
    %v1185 = vunpack.c.h.s8.bf16 %v729
    %v1186 = vunpack.c.h.s8.bf16 %v730
    %v1187 = vunpack.c.h.s8.bf16 %v731
    %v1188 = vunpack.c.h.s8.bf16 %v732
    %v1189 = vunpack.c.h.s8.bf16 %v733
    %v1190 = vunpack.c.h.s8.bf16 %v734
    %v1191 = vunpack.c.h.s8.bf16 %v735
    %v1192 = vunpack.c.h.s8.bf16 %v736
    %v1193 = vunpack.c.l.s8.bf16 %v737
    %v1194 = vunpack.c.l.s8.bf16 %v738
    %v1195 = vunpack.c.l.s8.bf16 %v739
    %v1196 = vunpack.c.l.s8.bf16 %v740
    %v1197 = vunpack.c.l.s8.bf16 %v741
    %v1198 = vunpack.c.l.s8.bf16 %v742
    %v1199 = vunpack.c.l.s8.bf16 %v743
    %v1200 = vunpack.c.l.s8.bf16 %v744
    %v1201 = vunpack.c.h.s8.bf16 %v737
    %v1202 = vunpack.c.h.s8.bf16 %v738
    %v1203 = vunpack.c.h.s8.bf16 %v739
    %v1204 = vunpack.c.h.s8.bf16 %v740
    %v1205 = vunpack.c.h.s8.bf16 %v741
    %v1206 = vunpack.c.h.s8.bf16 %v742
    %v1207 = vunpack.c.h.s8.bf16 %v743
    %v1208 = vunpack.c.h.s8.bf16 %v744
    %v1209 = vunpack.c.l.s8.bf16 %v745
    %v1210 = vunpack.c.l.s8.bf16 %v746
    %v1211 = vunpack.c.l.s8.bf16 %v747
    %v1212 = vunpack.c.l.s8.bf16 %v748
    %v1213 = vunpack.c.l.s8.bf16 %v749
    %v1214 = vunpack.c.l.s8.bf16 %v750
    %v1215 = vunpack.c.l.s8.bf16 %v751
    %v1216 = vunpack.c.l.s8.bf16 %v752
    %v1217 = vunpack.c.h.s8.bf16 %v745
    %v1218 = vunpack.c.h.s8.bf16 %v746
    %v1219 = vunpack.c.h.s8.bf16 %v747
    %v1220 = vunpack.c.h.s8.bf16 %v748
    %v1221 = vunpack.c.h.s8.bf16 %v749
    %v1222 = vunpack.c.h.s8.bf16 %v750
    %v1223 = vunpack.c.h.s8.bf16 %v751
    %v1224 = vunpack.c.h.s8.bf16 %v752
    %v1225 = vunpack.c.l.s8.bf16 %v753
    %v1226 = vunpack.c.l.s8.bf16 %v754
    %v1227 = vunpack.c.l.s8.bf16 %v755
    %v1228 = vunpack.c.l.s8.bf16 %v756
    %v1229 = vunpack.c.l.s8.bf16 %v757
    %v1230 = vunpack.c.l.s8.bf16 %v758
    %v1231 = vunpack.c.l.s8.bf16 %v759
    %v1232 = vunpack.c.l.s8.bf16 %v760
    %v1233 = vunpack.c.h.s8.bf16 %v753
    %v1234 = vunpack.c.h.s8.bf16 %v754
    %v1235 = vunpack.c.h.s8.bf16 %v755
    %v1236 = vunpack.c.h.s8.bf16 %v756
    %v1237 = vunpack.c.h.s8.bf16 %v757
    %v1238 = vunpack.c.h.s8.bf16 %v758
    %v1239 = vunpack.c.h.s8.bf16 %v759
    %v1240 = vunpack.c.h.s8.bf16 %v760
    %v1241 = vunpack.c.l.s8.bf16 %v761
    %v1242 = vunpack.c.l.s8.bf16 %v762
    %v1243 = vunpack.c.l.s8.bf16 %v763
    %v1244 = vunpack.c.l.s8.bf16 %v764
    %v1245 = vunpack.c.l.s8.bf16 %v765
    %v1246 = vunpack.c.l.s8.bf16 %v766
    %v1247 = vunpack.c.l.s8.bf16 %v767
    %v1248 = vunpack.c.l.s8.bf16 %v768
    %v1249 = vunpack.c.h.s8.bf16 %v761
    %v1250 = vunpack.c.h.s8.bf16 %v762
    %v1251 = vunpack.c.h.s8.bf16 %v763
    %v1252 = vunpack.c.h.s8.bf16 %v764
    %v1253 = vunpack.c.h.s8.bf16 %v765
    %v1254 = vunpack.c.h.s8.bf16 %v766
    %v1255 = vunpack.c.h.s8.bf16 %v767
    %v1256 = vunpack.c.h.s8.bf16 %v768
    %v1257 = vunpack.c.l.s8.bf16 %v769
    %v1258 = vunpack.c.l.s8.bf16 %v770
    %v1259 = vunpack.c.l.s8.bf16 %v771
    %v1260 = vunpack.c.l.s8.bf16 %v772
    %v1261 = vunpack.c.l.s8.bf16 %v773
    %v1262 = vunpack.c.l.s8.bf16 %v774
    %v1263 = vunpack.c.l.s8.bf16 %v775
    %v1264 = vunpack.c.l.s8.bf16 %v776
    %v1265 = vunpack.c.h.s8.bf16 %v769
    %v1266 = vunpack.c.h.s8.bf16 %v770
    %v1267 = vunpack.c.h.s8.bf16 %v771
    %v1268 = vunpack.c.h.s8.bf16 %v772
    %v1269 = vunpack.c.h.s8.bf16 %v773
    %v1270 = vunpack.c.h.s8.bf16 %v774
    %v1271 = vunpack.c.h.s8.bf16 %v775
    %v1272 = vunpack.c.h.s8.bf16 %v776
    %v1273 = vunpack.c.l.s8.bf16 %v777
    %v1274 = vunpack.c.l.s8.bf16 %v778
    %v1275 = vunpack.c.l.s8.bf16 %v779
    %v1276 = vunpack.c.l.s8.bf16 %v780
    %v1277 = vunpack.c.l.s8.bf16 %v781
    %v1278 = vunpack.c.l.s8.bf16 %v782
    %v1279 = vunpack.c.l.s8.bf16 %v783
    %v1280 = vunpack.c.l.s8.bf16 %v784
    %v1281 = vunpack.c.h.s8.bf16 %v777
    %v1282 = vunpack.c.h.s8.bf16 %v778
    %v1283 = vunpack.c.h.s8.bf16 %v779
    %v1284 = vunpack.c.h.s8.bf16 %v780
    %v1285 = vunpack.c.h.s8.bf16 %v781
    %v1286 = vunpack.c.h.s8.bf16 %v782
    %v1287 = vunpack.c.h.s8.bf16 %v783
    %v1288 = vunpack.c.h.s8.bf16 %v784
    %v1289 = vunpack.c.l.s8.bf16 %v785
    %v1290 = vunpack.c.l.s8.bf16 %v786
    %v1291 = vunpack.c.l.s8.bf16 %v787
    %v1292 = vunpack.c.l.s8.bf16 %v788
    %v1293 = vunpack.c.l.s8.bf16 %v789
    %v1294 = vunpack.c.l.s8.bf16 %v790
    %v1295 = vunpack.c.l.s8.bf16 %v791
    %v1296 = vunpack.c.l.s8.bf16 %v792
    %v1297 = vunpack.c.h.s8.bf16 %v785
    %v1298 = vunpack.c.h.s8.bf16 %v786
    %v1299 = vunpack.c.h.s8.bf16 %v787
    %v1300 = vunpack.c.h.s8.bf16 %v788
    %v1301 = vunpack.c.h.s8.bf16 %v789
    %v1302 = vunpack.c.h.s8.bf16 %v790
    %v1303 = vunpack.c.h.s8.bf16 %v791
    %v1304 = vunpack.c.h.s8.bf16 %v792
    %v1305 = vld [vmem:[#allocation2] sm:$0xff]
    %v1306 = vld [vmem:[#allocation2 + $0x8] sm:$0xff]
    %v1309 = vcombine.high %v1305, %v1305
    %v1311 = vunpack.c.l.s4 1983009808
    %v1312 = vunpack.c.0.s8 %v1311
    %v1313 = vlaneseq
    %v1314 = vshrl.u32 %v1313, 7
    %v1315 = vsub.s32 %v1312, %v1314
    %v1316 = vrot.slane %v1305, %v1315
    %v1318 = vunpack.c.l.s4 1983009808
    %v1319 = vunpack.c.0.s8 %v1318
    %v1320 = vlaneseq
    %v1321 = vshrl.u32 %v1320, 7
    %v1322 = vsub.s32 %v1319, %v1321
    %v1323 = vrot.slane %v1309, %v1322
    %v1324 = vcombine.high %v1316, %v1316
    %v1325 = vcombine.high %v1323, %v1323
    %v1326 = vcombine.high %v1306, %v1306
    %v1328 = vunpack.c.l.s4 1983009808
    %v1329 = vunpack.c.0.s8 %v1328
    %v1330 = vlaneseq
    %v1331 = vshrl.u32 %v1330, 7
    %v1332 = vsub.s32 %v1329, %v1331
    %v1333 = vrot.slane %v1306, %v1332
    %v1335 = vunpack.c.l.s4 1983009808
    %v1336 = vunpack.c.0.s8 %v1335
    %v1337 = vlaneseq
    %v1338 = vshrl.u32 %v1337, 7
    %v1339 = vsub.s32 %v1336, %v1338
    %v1340 = vrot.slane %v1326, %v1339
    %v1341 = vcombine.high %v1333, %v1333
    %v1342 = vcombine.high %v1340, %v1340
    %1351 = vmatprep.subr.bf16.mxu0 %v794
    %1352 = vmatpush1.bf16.msra.mxu0 %v793
    %1353 = vmatprep.subr.bf16.mxu0 %v802
    %1354 = vmatpush1.bf16.msra.mxu0 %v801
    %1355 = vmatprep.subr.bf16.mxu0 %v810
    %1356 = vmatpush1.bf16.msra.mxu0 %v809
    %1357 = vmatprep.subr.bf16.mxu0 %v818
    %1358 = vmatpush1.bf16.msra.mxu0 %v817
    %1359 = vmatprep.subr.bf16.mxu0 %v826
    %1360 = vmatpush1.bf16.msra.mxu0 %v825
    %1361 = vmatprep.subr.bf16.mxu0 %v834
    %1362 = vmatpush1.bf16.msra.mxu0 %v833
    %1363 = vmatprep.subr.bf16.mxu0 %v842
    %1364 = vmatpush1.bf16.msra.mxu0 %v841
    %1365 = vmatprep.subr.bf16.mxu0 %v850
    %1366 = vmatpush1.bf16.msra.mxu0 %v849
    %1367 = vmatprep.subr.bf16.mxu0 %v858
    %1368 = vmatpush1.bf16.msra.mxu0 %v857
    %1369 = vmatprep.subr.bf16.mxu0 %v866
    %1370 = vmatpush1.bf16.msra.mxu0 %v865
    %1371 = vmatprep.subr.bf16.mxu0 %v874
    %1372 = vmatpush1.bf16.msra.mxu0 %v873
    %1373 = vmatprep.subr.bf16.mxu0 %v882
    %1374 = vmatpush1.bf16.msra.mxu0 %v881
    %1375 = vmatprep.subr.bf16.mxu0 %v890
    %1376 = vmatpush1.bf16.msra.mxu0 %v889
    %1377 = vmatprep.subr.bf16.mxu0 %v898
    %1378 = vmatpush1.bf16.msra.mxu0 %v897
    %1379 = vmatprep.subr.bf16.mxu0 %v906
    %1380 = vmatpush1.bf16.msra.mxu0 %v905
    %1381 = vmatprep.subr.bf16.mxu0 %v914
    %1382 = vmatpush1.bf16.msra.mxu0 %v913
    %1383 = vmatprep.mubr.bf16.mxu0 %v1324
    %1384 = vmatmul.mubr.bf16.gmra.mrb[0].mxu0 %v1316
    %v1385 = vpop.f32.mrb[0].mxu0
    %v1386 = vadd.f32 0.0, %v1385
    %v1387 = vpop.f32.mrb[0].mxu0
    %v1388 = vadd.f32 0.0, %v1387
    %v1389 = vpop.f32.mrb[0].mxu0
    %v1390 = vpop.f32.mrb[0].mxu0
    %1391 = vdwg.mxu0
    %1392 = vmatprep.subr.bf16.mxu0 %v922
    %1393 = vmatpush1.bf16.msra.mxu0 %v921
    %1394 = vmatprep.subr.bf16.mxu0 %v930
    %1395 = vmatpush1.bf16.msra.mxu0 %v929
    %1396 = vmatprep.subr.bf16.mxu0 %v938
    %1397 = vmatpush1.bf16.msra.mxu0 %v937
    %1398 = vmatprep.subr.bf16.mxu0 %v946
    %1399 = vmatpush1.bf16.msra.mxu0 %v945
    %1400 = vmatprep.subr.bf16.mxu0 %v954
    %1401 = vmatpush1.bf16.msra.mxu0 %v953
    %1402 = vmatprep.subr.bf16.mxu0 %v962
    %1403 = vmatpush1.bf16.msra.mxu0 %v961
    %1404 = vmatprep.subr.bf16.mxu0 %v970
    %1405 = vmatpush1.bf16.msra.mxu0 %v969
    %1406 = vmatprep.subr.bf16.mxu0 %v978
    %1407 = vmatpush1.bf16.msra.mxu0 %v977
    %1408 = vmatprep.subr.bf16.mxu0 %v986
    %1409 = vmatpush1.bf16.msra.mxu0 %v985
    %1410 = vmatprep.subr.bf16.mxu0 %v994
    %1411 = vmatpush1.bf16.msra.mxu0 %v993
    %1412 = vmatprep.subr.bf16.mxu0 %v1002
    %1413 = vmatpush1.bf16.msra.mxu0 %v1001
    %1414 = vmatprep.subr.bf16.mxu0 %v1010
    %1415 = vmatpush1.bf16.msra.mxu0 %v1009
    %1416 = vmatprep.subr.bf16.mxu0 %v1018
    %1417 = vmatpush1.bf16.msra.mxu0 %v1017
    %1418 = vmatprep.subr.bf16.mxu0 %v1026
    %1419 = vmatpush1.bf16.msra.mxu0 %v1025
    %1420 = vmatprep.subr.bf16.mxu0 %v1034
    %1421 = vmatpush1.bf16.msra.mxu0 %v1033
    %1422 = vmatprep.subr.bf16.mxu0 %v1042
    %1423 = vmatpush1.bf16.msra.mxu0 %v1041
    %1424 = vmatprep.mubr.bf16.mxu0 %v1325
    %1425 = vmatmul.mubr.bf16.gmra.mrb[0].mxu0 %v1323
    %v1426 = vpop.f32.mrb[0].mxu0
    %v1427 = vadd.f32 %v1386, %v1426
    %v1428 = vpop.f32.mrb[0].mxu0
    %v1429 = vadd.f32 %v1388, %v1428
    %v1430 = vpop.f32.mrb[0].mxu0
    %v1431 = vpop.f32.mrb[0].mxu0
    %1432 = vdwg.mxu0
    %1433 = vmatprep.subr.bf16.mxu0 %v1050
    %1434 = vmatpush1.bf16.msra.mxu0 %v1049
    %1435 = vmatprep.subr.bf16.mxu0 %v1058
    %1436 = vmatpush1.bf16.msra.mxu0 %v1057
    %1437 = vmatprep.subr.bf16.mxu0 %v1066
    %1438 = vmatpush1.bf16.msra.mxu0 %v1065
    %1439 = vmatprep.subr.bf16.mxu0 %v1074
    %1440 = vmatpush1.bf16.msra.mxu0 %v1073
    %1441 = vmatprep.subr.bf16.mxu0 %v1082
    %1442 = vmatpush1.bf16.msra.mxu0 %v1081
    %1443 = vmatprep.subr.bf16.mxu0 %v1090
    %1444 = vmatpush1.bf16.msra.mxu0 %v1089
    %1445 = vmatprep.subr.bf16.mxu0 %v1098
    %1446 = vmatpush1.bf16.msra.mxu0 %v1097
    %1447 = vmatprep.subr.bf16.mxu0 %v1106
    %1448 = vmatpush1.bf16.msra.mxu0 %v1105
    %1449 = vmatprep.subr.bf16.mxu0 %v1114
    %1450 = vmatpush1.bf16.msra.mxu0 %v1113
    %1451 = vmatprep.subr.bf16.mxu0 %v1122
    %1452 = vmatpush1.bf16.msra.mxu0 %v1121
    %1453 = vmatprep.subr.bf16.mxu0 %v1130
    %1454 = vmatpush1.bf16.msra.mxu0 %v1129
    %1455 = vmatprep.subr.bf16.mxu0 %v1138
    %1456 = vmatpush1.bf16.msra.mxu0 %v1137
    %1457 = vmatprep.subr.bf16.mxu0 %v1146
    %1458 = vmatpush1.bf16.msra.mxu0 %v1145
    %1459 = vmatprep.subr.bf16.mxu0 %v1154
    %1460 = vmatpush1.bf16.msra.mxu0 %v1153
    %1461 = vmatprep.subr.bf16.mxu0 %v1162
    %1462 = vmatpush1.bf16.msra.mxu0 %v1161
    %1463 = vmatprep.subr.bf16.mxu0 %v1170
    %1464 = vmatpush1.bf16.msra.mxu0 %v1169
    %1465 = vmatprep.mubr.bf16.mxu0 %v1341
    %1466 = vmatmul.mubr.bf16.gmra.mrb[0].mxu0 %v1333
    %v1467 = vpop.f32.mrb[0].mxu0
    %v1468 = vadd.f32 %v1427, %v1467
    %v1469 = vpop.f32.mrb[0].mxu0
    %v1470 = vadd.f32 %v1429, %v1469
    %v1471 = vpop.f32.mrb[0].mxu0
    %v1472 = vpop.f32.mrb[0].mxu0
    %1473 = vdwg.mxu0
    %1474 = vmatprep.subr.bf16.mxu0 %v1178
    %1475 = vmatpush1.bf16.msra.mxu0 %v1177
    %1476 = vmatprep.subr.bf16.mxu0 %v1186
    %1477 = vmatpush1.bf16.msra.mxu0 %v1185
    %1478 = vmatprep.subr.bf16.mxu0 %v1194
    %1479 = vmatpush1.bf16.msra.mxu0 %v1193
    %1480 = vmatprep.subr.bf16.mxu0 %v1202
    %1481 = vmatpush1.bf16.msra.mxu0 %v1201
    %1482 = vmatprep.subr.bf16.mxu0 %v1210
    %1483 = vmatpush1.bf16.msra.mxu0 %v1209
    %1484 = vmatprep.subr.bf16.mxu0 %v1218
    %1485 = vmatpush1.bf16.msra.mxu0 %v1217
    %1486 = vmatprep.subr.bf16.mxu0 %v1226
    %1487 = vmatpush1.bf16.msra.mxu0 %v1225
    %1488 = vmatprep.subr.bf16.mxu0 %v1234
    %1489 = vmatpush1.bf16.msra.mxu0 %v1233
    %1490 = vmatprep.subr.bf16.mxu0 %v1242
    %1491 = vmatpush1.bf16.msra.mxu0 %v1241
    %1492 = vmatprep.subr.bf16.mxu0 %v1250
    %1493 = vmatpush1.bf16.msra.mxu0 %v1249
    %1494 = vmatprep.subr.bf16.mxu0 %v1258
    %1495 = vmatpush1.bf16.msra.mxu0 %v1257
    %1496 = vmatprep.subr.bf16.mxu0 %v1266
    %1497 = vmatpush1.bf16.msra.mxu0 %v1265
    %1498 = vmatprep.subr.bf16.mxu0 %v1274
    %1499 = vmatpush1.bf16.msra.mxu0 %v1273
    %1500 = vmatprep.subr.bf16.mxu0 %v1282
    %1501 = vmatpush1.bf16.msra.mxu0 %v1281
    %1502 = vmatprep.subr.bf16.mxu0 %v1290
    %1503 = vmatpush1.bf16.msra.mxu0 %v1289
    %1504 = vmatprep.subr.bf16.mxu0 %v1298
    %1505 = vmatpush1.bf16.msra.mxu0 %v1297
    %1506 = vmatprep.mubr.bf16.mxu0 %v1342
    %1507 = vmatmul.mubr.bf16.gmra.mrb[0].mxu0 %v1340
    %v1508 = vpop.f32.mrb[0].mxu0
    %v1509 = vadd.f32 %v1468, %v1508
    %v1510 = vpop.f32.mrb[0].mxu0
    %v1511 = vadd.f32 %v1470, %v1510
    %v1512 = vpop.f32.mrb[0].mxu0
    %v1513 = vpop.f32.mrb[0].mxu0
    %1514 = vdwg.mxu0
    %1515 = vmatprep.subr.bf16.mxu0 %v796
    %1516 = vmatpush1.bf16.msra.mxu0 %v795
    %1517 = vmatprep.subr.bf16.mxu0 %v804
    %1518 = vmatpush1.bf16.msra.mxu0 %v803
    %1519 = vmatprep.subr.bf16.mxu0 %v812
    %1520 = vmatpush1.bf16.msra.mxu0 %v811
    %1521 = vmatprep.subr.bf16.mxu0 %v820
    %1522 = vmatpush1.bf16.msra.mxu0 %v819
    %1523 = vmatprep.subr.bf16.mxu0 %v828
    %1524 = vmatpush1.bf16.msra.mxu0 %v827
    %1525 = vmatprep.subr.bf16.mxu0 %v836
    %1526 = vmatpush1.bf16.msra.mxu0 %v835
    %1527 = vmatprep.subr.bf16.mxu0 %v844
    %1528 = vmatpush1.bf16.msra.mxu0 %v843
    %1529 = vmatprep.subr.bf16.mxu0 %v852
    %1530 = vmatpush1.bf16.msra.mxu0 %v851
    %1531 = vmatprep.subr.bf16.mxu0 %v860
    %1532 = vmatpush1.bf16.msra.mxu0 %v859
    %1533 = vmatprep.subr.bf16.mxu0 %v868
    %1534 = vmatpush1.bf16.msra.mxu0 %v867
    %1535 = vmatprep.subr.bf16.mxu0 %v876
    %1536 = vmatpush1.bf16.msra.mxu0 %v875
    %1537 = vmatprep.subr.bf16.mxu0 %v884
    %1538 = vmatpush1.bf16.msra.mxu0 %v883
    %1539 = vmatprep.subr.bf16.mxu0 %v892
    %1540 = vmatpush1.bf16.msra.mxu0 %v891
    %1541 = vmatprep.subr.bf16.mxu0 %v900
    %1542 = vmatpush1.bf16.msra.mxu0 %v899
    %1543 = vmatprep.subr.bf16.mxu0 %v908
    %1544 = vmatpush1.bf16.msra.mxu0 %v907
    %1545 = vmatprep.subr.bf16.mxu0 %v916
    %1546 = vmatpush1.bf16.msra.mxu0 %v915
    %1547 = vmatprep.mubr.bf16.mxu0 %v1324
    %1548 = vmatmul.mubr.bf16.gmra.mrb[0].mxu0 %v1316
    %v1549 = vpop.f32.mrb[0].mxu0
    %v1550 = vadd.f32 0.0, %v1549
    %v1551 = vpop.f32.mrb[0].mxu0
    %v1552 = vadd.f32 0.0, %v1551
    %v1553 = vpop.f32.mrb[0].mxu0
    %v1554 = vpop.f32.mrb[0].mxu0
    %1555 = vdwg.mxu0
    %1556 = vmatprep.subr.bf16.mxu0 %v924
    %1557 = vmatpush1.bf16.msra.mxu0 %v923
    %1558 = vmatprep.subr.bf16.mxu0 %v932
    %1559 = vmatpush1.bf16.msra.mxu0 %v931
    %1560 = vmatprep.subr.bf16.mxu0 %v940
    %1561 = vmatpush1.bf16.msra.mxu0 %v939
    %1562 = vmatprep.subr.bf16.mxu0 %v948
    %1563 = vmatpush1.bf16.msra.mxu0 %v947
    %1564 = vmatprep.subr.bf16.mxu0 %v956
    %1565 = vmatpush1.bf16.msra.mxu0 %v955
    %1566 = vmatprep.subr.bf16.mxu0 %v964
    %1567 = vmatpush1.bf16.msra.mxu0 %v963
    %1568 = vmatprep.subr.bf16.mxu0 %v972
    %1569 = vmatpush1.bf16.msra.mxu0 %v971
    %1570 = vmatprep.subr.bf16.mxu0 %v980
    %1571 = vmatpush1.bf16.msra.mxu0 %v979
    %1572 = vmatprep.subr.bf16.mxu0 %v988
    %1573 = vmatpush1.bf16.msra.mxu0 %v987
    %1574 = vmatprep.subr.bf16.mxu0 %v996
    %1575 = vmatpush1.bf16.msra.mxu0 %v995
    %1576 = vmatprep.subr.bf16.mxu0 %v1004
    %1577 = vmatpush1.bf16.msra.mxu0 %v1003
    %1578 = vmatprep.subr.bf16.mxu0 %v1012
    %1579 = vmatpush1.bf16.msra.mxu0 %v1011
    %1580 = vmatprep.subr.bf16.mxu0 %v1020
    %1581 = vmatpush1.bf16.msra.mxu0 %v1019
    %1582 = vmatprep.subr.bf16.mxu0 %v1028
    %1583 = vmatpush1.bf16.msra.mxu0 %v1027
    %1584 = vmatprep.subr.bf16.mxu0 %v1036
    %1585 = vmatpush1.bf16.msra.mxu0 %v1035
    %1586 = vmatprep.subr.bf16.mxu0 %v1044
    %1587 = vmatpush1.bf16.msra.mxu0 %v1043
    %1588 = vmatprep.mubr.bf16.mxu0 %v1325
    %1589 = vmatmul.mubr.bf16.gmra.mrb[0].mxu0 %v1323
    %v1590 = vpop.f32.mrb[0].mxu0
    %v1591 = vadd.f32 %v1550, %v1590
    %v1592 = vpop.f32.mrb[0].mxu0
    %v1593 = vadd.f32 %v1552, %v1592
    %v1594 = vpop.f32.mrb[0].mxu0
    %v1595 = vpop.f32.mrb[0].mxu0
    %1596 = vdwg.mxu0
    %1597 = vmatprep.subr.bf16.mxu0 %v1052
    %1598 = vmatpush1.bf16.msra.mxu0 %v1051
    %1599 = vmatprep.subr.bf16.mxu0 %v1060
    %1600 = vmatpush1.bf16.msra.mxu0 %v1059
    %1601 = vmatprep.subr.bf16.mxu0 %v1068
    %1602 = vmatpush1.bf16.msra.mxu0 %v1067
    %1603 = vmatprep.subr.bf16.mxu0 %v1076
    %1604 = vmatpush1.bf16.msra.mxu0 %v1075
    %1605 = vmatprep.subr.bf16.mxu0 %v1084
    %1606 = vmatpush1.bf16.msra.mxu0 %v1083
    %1607 = vmatprep.subr.bf16.mxu0 %v1092
    %1608 = vmatpush1.bf16.msra.mxu0 %v1091
    %1609 = vmatprep.subr.bf16.mxu0 %v1100
    %1610 = vmatpush1.bf16.msra.mxu0 %v1099
    %1611 = vmatprep.subr.bf16.mxu0 %v1108
    %1612 = vmatpush1.bf16.msra.mxu0 %v1107
    %1613 = vmatprep.subr.bf16.mxu0 %v1116
    %1614 = vmatpush1.bf16.msra.mxu0 %v1115
    %1615 = vmatprep.subr.bf16.mxu0 %v1124
    %1616 = vmatpush1.bf16.msra.mxu0 %v1123
    %1617 = vmatprep.subr.bf16.mxu0 %v1132
    %1618 = vmatpush1.bf16.msra.mxu0 %v1131
    %1619 = vmatprep.subr.bf16.mxu0 %v1140
    %1620 = vmatpush1.bf16.msra.mxu0 %v1139
    %1621 = vmatprep.subr.bf16.mxu0 %v1148
    %1622 = vmatpush1.bf16.msra.mxu0 %v1147
    %1623 = vmatprep.subr.bf16.mxu0 %v1156
    %1624 = vmatpush1.bf16.msra.mxu0 %v1155
    %1625 = vmatprep.subr.bf16.mxu0 %v1164
    %1626 = vmatpush1.bf16.msra.mxu0 %v1163
    %1627 = vmatprep.subr.bf16.mxu0 %v1172
    %1628 = vmatpush1.bf16.msra.mxu0 %v1171
    %1629 = vmatprep.mubr.bf16.mxu0 %v1341
    %1630 = vmatmul.mubr.bf16.gmra.mrb[0].mxu0 %v1333
    %v1631 = vpop.f32.mrb[0].mxu0
    %v1632 = vadd.f32 %v1591, %v1631
    %v1633 = vpop.f32.mrb[0].mxu0
    %v1634 = vadd.f32 %v1593, %v1633
    %v1635 = vpop.f32.mrb[0].mxu0
    %v1636 = vpop.f32.mrb[0].mxu0
    %1637 = vdwg.mxu0
    %1638 = vmatprep.subr.bf16.mxu0 %v1180
    %1639 = vmatpush1.bf16.msra.mxu0 %v1179
    %1640 = vmatprep.subr.bf16.mxu0 %v1188
    %1641 = vmatpush1.bf16.msra.mxu0 %v1187
    %1642 = vmatprep.subr.bf16.mxu0 %v1196
    %1643 = vmatpush1.bf16.msra.mxu0 %v1195
    %1644 = vmatprep.subr.bf16.mxu0 %v1204
    %1645 = vmatpush1.bf16.msra.mxu0 %v1203
    %1646 = vmatprep.subr.bf16.mxu0 %v1212
    %1647 = vmatpush1.bf16.msra.mxu0 %v1211
    %1648 = vmatprep.subr.bf16.mxu0 %v1220
    %1649 = vmatpush1.bf16.msra.mxu0 %v1219
    %1650 = vmatprep.subr.bf16.mxu0 %v1228
    %1651 = vmatpush1.bf16.msra.mxu0 %v1227
    %1652 = vmatprep.subr.bf16.mxu0 %v1236
    %1653 = vmatpush1.bf16.msra.mxu0 %v1235
    %1654 = vmatprep.subr.bf16.mxu0 %v1244
    %1655 = vmatpush1.bf16.msra.mxu0 %v1243
    %1656 = vmatprep.subr.bf16.mxu0 %v1252
    %1657 = vmatpush1.bf16.msra.mxu0 %v1251
    %1658 = vmatprep.subr.bf16.mxu0 %v1260
    %1659 = vmatpush1.bf16.msra.mxu0 %v1259
    %1660 = vmatprep.subr.bf16.mxu0 %v1268
    %1661 = vmatpush1.bf16.msra.mxu0 %v1267
    %1662 = vmatprep.subr.bf16.mxu0 %v1276
    %1663 = vmatpush1.bf16.msra.mxu0 %v1275
    %1664 = vmatprep.subr.bf16.mxu0 %v1284
    %1665 = vmatpush1.bf16.msra.mxu0 %v1283
    %1666 = vmatprep.subr.bf16.mxu0 %v1292
    %1667 = vmatpush1.bf16.msra.mxu0 %v1291
    %1668 = vmatprep.subr.bf16.mxu0 %v1300
    %1669 = vmatpush1.bf16.msra.mxu0 %v1299
    %1670 = vmatprep.mubr.bf16.mxu0 %v1342
    %1671 = vmatmul.mubr.bf16.gmra.mrb[0].mxu0 %v1340
    %v1672 = vpop.f32.mrb[0].mxu0
    %v1673 = vadd.f32 %v1632, %v1672
    %v1674 = vpop.f32.mrb[0].mxu0
    %v1675 = vadd.f32 %v1634, %v1674
    %v1676 = vpop.f32.mrb[0].mxu0
    %v1677 = vpop.f32.mrb[0].mxu0
    %1678 = vdwg.mxu0
    %1679 = vmatprep.subr.bf16.mxu0 %v798
    %1680 = vmatpush1.bf16.msra.mxu0 %v797
    %1681 = vmatprep.subr.bf16.mxu0 %v806
    %1682 = vmatpush1.bf16.msra.mxu0 %v805
    %1683 = vmatprep.subr.bf16.mxu0 %v814
    %1684 = vmatpush1.bf16.msra.mxu0 %v813
    %1685 = vmatprep.subr.bf16.mxu0 %v822
    %1686 = vmatpush1.bf16.msra.mxu0 %v821
    %1687 = vmatprep.subr.bf16.mxu0 %v830
    %1688 = vmatpush1.bf16.msra.mxu0 %v829
    %1689 = vmatprep.subr.bf16.mxu0 %v838
    %1690 = vmatpush1.bf16.msra.mxu0 %v837
    %1691 = vmatprep.subr.bf16.mxu0 %v846
    %1692 = vmatpush1.bf16.msra.mxu0 %v845
    %1693 = vmatprep.subr.bf16.mxu0 %v854
    %1694 = vmatpush1.bf16.msra.mxu0 %v853
    %1695 = vmatprep.subr.bf16.mxu0 %v862
    %1696 = vmatpush1.bf16.msra.mxu0 %v861
    %1697 = vmatprep.subr.bf16.mxu0 %v870
    %1698 = vmatpush1.bf16.msra.mxu0 %v869
    %1699 = vmatprep.subr.bf16.mxu0 %v878
    %1700 = vmatpush1.bf16.msra.mxu0 %v877
    %1701 = vmatprep.subr.bf16.mxu0 %v886
    %1702 = vmatpush1.bf16.msra.mxu0 %v885
    %1703 = vmatprep.subr.bf16.mxu0 %v894
    %1704 = vmatpush1.bf16.msra.mxu0 %v893
    %1705 = vmatprep.subr.bf16.mxu0 %v902
    %1706 = vmatpush1.bf16.msra.mxu0 %v901
    %1707 = vmatprep.subr.bf16.mxu0 %v910
    %1708 = vmatpush1.bf16.msra.mxu0 %v909
    %1709 = vmatprep.subr.bf16.mxu0 %v918
    %1710 = vmatpush1.bf16.msra.mxu0 %v917
    %1711 = vmatprep.mubr.bf16.mxu0 %v1324
    %1712 = vmatmul.mubr.bf16.gmra.mrb[0].mxu0 %v1316
    %v1713 = vpop.f32.mrb[0].mxu0
    %v1714 = vadd.f32 0.0, %v1713
    %v1715 = vpop.f32.mrb[0].mxu0
    %v1716 = vadd.f32 0.0, %v1715
    %v1717 = vpop.f32.mrb[0].mxu0
    %v1718 = vpop.f32.mrb[0].mxu0
    %1719 = vdwg.mxu0
    %1720 = vmatprep.subr.bf16.mxu0 %v926
    %1721 = vmatpush1.bf16.msra.mxu0 %v925
    %1722 = vmatprep.subr.bf16.mxu0 %v934
    %1723 = vmatpush1.bf16.msra.mxu0 %v933
    %1724 = vmatprep.subr.bf16.mxu0 %v942
    %1725 = vmatpush1.bf16.msra.mxu0 %v941
    %1726 = vmatprep.subr.bf16.mxu0 %v950
    %1727 = vmatpush1.bf16.msra.mxu0 %v949
    %1728 = vmatprep.subr.bf16.mxu0 %v958
    %1729 = vmatpush1.bf16.msra.mxu0 %v957
    %1730 = vmatprep.subr.bf16.mxu0 %v966
    %1731 = vmatpush1.bf16.msra.mxu0 %v965
    %1732 = vmatprep.subr.bf16.mxu0 %v974
    %1733 = vmatpush1.bf16.msra.mxu0 %v973
    %1734 = vmatprep.subr.bf16.mxu0 %v982
    %1735 = vmatpush1.bf16.msra.mxu0 %v981
    %1736 = vmatprep.subr.bf16.mxu0 %v990
    %1737 = vmatpush1.bf16.msra.mxu0 %v989
    %1738 = vmatprep.subr.bf16.mxu0 %v998
    %1739 = vmatpush1.bf16.msra.mxu0 %v997
    %1740 = vmatprep.subr.bf16.mxu0 %v1006
    %1741 = vmatpush1.bf16.msra.mxu0 %v1005
    %1742 = vmatprep.subr.bf16.mxu0 %v1014
    %1743 = vmatpush1.bf16.msra.mxu0 %v1013
    %1744 = vmatprep.subr.bf16.mxu0 %v1022
    %1745 = vmatpush1.bf16.msra.mxu0 %v1021
    %1746 = vmatprep.subr.bf16.mxu0 %v1030
    %1747 = vmatpush1.bf16.msra.mxu0 %v1029
    %1748 = vmatprep.subr.bf16.mxu0 %v1038
    %1749 = vmatpush1.bf16.msra.mxu0 %v1037
    %1750 = vmatprep.subr.bf16.mxu0 %v1046
    %1751 = vmatpush1.bf16.msra.mxu0 %v1045
    %1752 = vmatprep.mubr.bf16.mxu0 %v1325
    %1753 = vmatmul.mubr.bf16.gmra.mrb[0].mxu0 %v1323
    %v1754 = vpop.f32.mrb[0].mxu0
    %v1755 = vadd.f32 %v1714, %v1754
    %v1756 = vpop.f32.mrb[0].mxu0
    %v1757 = vadd.f32 %v1716, %v1756
    %v1758 = vpop.f32.mrb[0].mxu0
    %v1759 = vpop.f32.mrb[0].mxu0
    %1760 = vdwg.mxu0
    %1761 = vmatprep.subr.bf16.mxu0 %v1054
    %1762 = vmatpush1.bf16.msra.mxu0 %v1053
    %1763 = vmatprep.subr.bf16.mxu0 %v1062
    %1764 = vmatpush1.bf16.msra.mxu0 %v1061
    %1765 = vmatprep.subr.bf16.mxu0 %v1070
    %1766 = vmatpush1.bf16.msra.mxu0 %v1069
    %1767 = vmatprep.subr.bf16.mxu0 %v1078
    %1768 = vmatpush1.bf16.msra.mxu0 %v1077
    %1769 = vmatprep.subr.bf16.mxu0 %v1086
    %1770 = vmatpush1.bf16.msra.mxu0 %v1085
    %1771 = vmatprep.subr.bf16.mxu0 %v1094
    %1772 = vmatpush1.bf16.msra.mxu0 %v1093
    %1773 = vmatprep.subr.bf16.mxu0 %v1102
    %1774 = vmatpush1.bf16.msra.mxu0 %v1101
    %1775 = vmatprep.subr.bf16.mxu0 %v1110
    %1776 = vmatpush1.bf16.msra.mxu0 %v1109
    %1777 = vmatprep.subr.bf16.mxu0 %v1118
    %1778 = vmatpush1.bf16.msra.mxu0 %v1117
    %1779 = vmatprep.subr.bf16.mxu0 %v1126
    %1780 = vmatpush1.bf16.msra.mxu0 %v1125
    %1781 = vmatprep.subr.bf16.mxu0 %v1134
    %1782 = vmatpush1.bf16.msra.mxu0 %v1133
    %1783 = vmatprep.subr.bf16.mxu0 %v1142
    %1784 = vmatpush1.bf16.msra.mxu0 %v1141
    %1785 = vmatprep.subr.bf16.mxu0 %v1150
    %1786 = vmatpush1.bf16.msra.mxu0 %v1149
    %1787 = vmatprep.subr.bf16.mxu0 %v1158
    %1788 = vmatpush1.bf16.msra.mxu0 %v1157
    %1789 = vmatprep.subr.bf16.mxu0 %v1166
    %1790 = vmatpush1.bf16.msra.mxu0 %v1165
    %1791 = vmatprep.subr.bf16.mxu0 %v1174
    %1792 = vmatpush1.bf16.msra.mxu0 %v1173
    %1793 = vmatprep.mubr.bf16.mxu0 %v1341
    %1794 = vmatmul.mubr.bf16.gmra.mrb[0].mxu0 %v1333
    %v1795 = vpop.f32.mrb[0].mxu0
    %v1796 = vadd.f32 %v1755, %v1795
    %v1797 = vpop.f32.mrb[0].mxu0
    %v1798 = vadd.f32 %v1757, %v1797
    %v1799 = vpop.f32.mrb[0].mxu0
    %v1800 = vpop.f32.mrb[0].mxu0
    %1801 = vdwg.mxu0
    %1802 = vmatprep.subr.bf16.mxu0 %v1182
    %1803 = vmatpush1.bf16.msra.mxu0 %v1181
    %1804 = vmatprep.subr.bf16.mxu0 %v1190
    %1805 = vmatpush1.bf16.msra.mxu0 %v1189
    %1806 = vmatprep.subr.bf16.mxu0 %v1198
    %1807 = vmatpush1.bf16.msra.mxu0 %v1197
    %1808 = vmatprep.subr.bf16.mxu0 %v1206
    %1809 = vmatpush1.bf16.msra.mxu0 %v1205
    %1810 = vmatprep.subr.bf16.mxu0 %v1214
    %1811 = vmatpush1.bf16.msra.mxu0 %v1213
    %1812 = vmatprep.subr.bf16.mxu0 %v1222
    %1813 = vmatpush1.bf16.msra.mxu0 %v1221
    %1814 = vmatprep.subr.bf16.mxu0 %v1230
    %1815 = vmatpush1.bf16.msra.mxu0 %v1229
    %1816 = vmatprep.subr.bf16.mxu0 %v1238
    %1817 = vmatpush1.bf16.msra.mxu0 %v1237
    %1818 = vmatprep.subr.bf16.mxu0 %v1246
    %1819 = vmatpush1.bf16.msra.mxu0 %v1245
    %1820 = vmatprep.subr.bf16.mxu0 %v1254
    %1821 = vmatpush1.bf16.msra.mxu0 %v1253
    %1822 = vmatprep.subr.bf16.mxu0 %v1262
    %1823 = vmatpush1.bf16.msra.mxu0 %v1261
    %1824 = vmatprep.subr.bf16.mxu0 %v1270
    %1825 = vmatpush1.bf16.msra.mxu0 %v1269
    %1826 = vmatprep.subr.bf16.mxu0 %v1278
    %1827 = vmatpush1.bf16.msra.mxu0 %v1277
    %1828 = vmatprep.subr.bf16.mxu0 %v1286
    %1829 = vmatpush1.bf16.msra.mxu0 %v1285
    %1830 = vmatprep.subr.bf16.mxu0 %v1294
    %1831 = vmatpush1.bf16.msra.mxu0 %v1293
    %1832 = vmatprep.subr.bf16.mxu0 %v1302
    %1833 = vmatpush1.bf16.msra.mxu0 %v1301
    %1834 = vmatprep.mubr.bf16.mxu0 %v1342
    %1835 = vmatmul.mubr.bf16.gmra.mrb[0].mxu0 %v1340
    %v1836 = vpop.f32.mrb[0].mxu0
    %v1837 = vadd.f32 %v1796, %v1836
    %v1838 = vpop.f32.mrb[0].mxu0
    %v1839 = vadd.f32 %v1798, %v1838
    %v1840 = vpop.f32.mrb[0].mxu0
    %v1841 = vpop.f32.mrb[0].mxu0
    %1842 = vdwg.mxu0
    %1843 = vmatprep.subr.bf16.mxu0 %v800
    %1844 = vmatpush1.bf16.msra.mxu0 %v799
    %1845 = vmatprep.subr.bf16.mxu0 %v808
    %1846 = vmatpush1.bf16.msra.mxu0 %v807
    %1847 = vmatprep.subr.bf16.mxu0 %v816
    %1848 = vmatpush1.bf16.msra.mxu0 %v815
    %1849 = vmatprep.subr.bf16.mxu0 %v824
    %1850 = vmatpush1.bf16.msra.mxu0 %v823
    %1851 = vmatprep.subr.bf16.mxu0 %v832
    %1852 = vmatpush1.bf16.msra.mxu0 %v831
    %1853 = vmatprep.subr.bf16.mxu0 %v840
    %1854 = vmatpush1.bf16.msra.mxu0 %v839
    %1855 = vmatprep.subr.bf16.mxu0 %v848
    %1856 = vmatpush1.bf16.msra.mxu0 %v847
    %1857 = vmatprep.subr.bf16.mxu0 %v856
    %1858 = vmatpush1.bf16.msra.mxu0 %v855
    %1859 = vmatprep.subr.bf16.mxu0 %v864
    %1860 = vmatpush1.bf16.msra.mxu0 %v863
    %1861 = vmatprep.subr.bf16.mxu0 %v872
    %1862 = vmatpush1.bf16.msra.mxu0 %v871
    %1863 = vmatprep.subr.bf16.mxu0 %v880
    %1864 = vmatpush1.bf16.msra.mxu0 %v879
    %1865 = vmatprep.subr.bf16.mxu0 %v888
    %1866 = vmatpush1.bf16.msra.mxu0 %v887
    %1867 = vmatprep.subr.bf16.mxu0 %v896
    %1868 = vmatpush1.bf16.msra.mxu0 %v895
    %1869 = vmatprep.subr.bf16.mxu0 %v904
    %1870 = vmatpush1.bf16.msra.mxu0 %v903
    %1871 = vmatprep.subr.bf16.mxu0 %v912
    %1872 = vmatpush1.bf16.msra.mxu0 %v911
    %1873 = vmatprep.subr.bf16.mxu0 %v920
    %1874 = vmatpush1.bf16.msra.mxu0 %v919
    %1875 = vmatprep.mubr.bf16.mxu0 %v1324
    %1876 = vmatmul.mubr.bf16.gmra.mrb[0].mxu0 %v1316
    %v1877 = vpop.f32.mrb[0].mxu0
    %v1878 = vadd.f32 0.0, %v1877
    %v1879 = vpop.f32.mrb[0].mxu0
    %v1880 = vadd.f32 0.0, %v1879
    %v1881 = vpop.f32.mrb[0].mxu0
    %v1882 = vpop.f32.mrb[0].mxu0
    %1883 = vdwg.mxu0
    %1884 = vmatprep.subr.bf16.mxu0 %v928
    %1885 = vmatpush1.bf16.msra.mxu0 %v927
    %1886 = vmatprep.subr.bf16.mxu0 %v936
    %1887 = vmatpush1.bf16.msra.mxu0 %v935
    %1888 = vmatprep.subr.bf16.mxu0 %v944
    %1889 = vmatpush1.bf16.msra.mxu0 %v943
    %1890 = vmatprep.subr.bf16.mxu0 %v952
    %1891 = vmatpush1.bf16.msra.mxu0 %v951
    %1892 = vmatprep.subr.bf16.mxu0 %v960
    %1893 = vmatpush1.bf16.msra.mxu0 %v959
    %1894 = vmatprep.subr.bf16.mxu0 %v968
    %1895 = vmatpush1.bf16.msra.mxu0 %v967
    %1896 = vmatprep.subr.bf16.mxu0 %v976
    %1897 = vmatpush1.bf16.msra.mxu0 %v975
    %1898 = vmatprep.subr.bf16.mxu0 %v984
    %1899 = vmatpush1.bf16.msra.mxu0 %v983
    %1900 = vmatprep.subr.bf16.mxu0 %v992
    %1901 = vmatpush1.bf16.msra.mxu0 %v991
    %1902 = vmatprep.subr.bf16.mxu0 %v1000
    %1903 = vmatpush1.bf16.msra.mxu0 %v999
    %1904 = vmatprep.subr.bf16.mxu0 %v1008
    %1905 = vmatpush1.bf16.msra.mxu0 %v1007
    %1906 = vmatprep.subr.bf16.mxu0 %v1016
    %1907 = vmatpush1.bf16.msra.mxu0 %v1015
    %1908 = vmatprep.subr.bf16.mxu0 %v1024
    %1909 = vmatpush1.bf16.msra.mxu0 %v1023
    %1910 = vmatprep.subr.bf16.mxu0 %v1032
    %1911 = vmatpush1.bf16.msra.mxu0 %v1031
    %1912 = vmatprep.subr.bf16.mxu0 %v1040
    %1913 = vmatpush1.bf16.msra.mxu0 %v1039
    %1914 = vmatprep.subr.bf16.mxu0 %v1048
    %1915 = vmatpush1.bf16.msra.mxu0 %v1047
    %1916 = vmatprep.mubr.bf16.mxu0 %v1325
    %1917 = vmatmul.mubr.bf16.gmra.mrb[0].mxu0 %v1323
    %v1918 = vpop.f32.mrb[0].mxu0
    %v1919 = vadd.f32 %v1878, %v1918
    %v1920 = vpop.f32.mrb[0].mxu0
    %v1921 = vadd.f32 %v1880, %v1920
    %v1922 = vpop.f32.mrb[0].mxu0
    %v1923 = vpop.f32.mrb[0].mxu0
    %1924 = vdwg.mxu0
    %1925 = vmatprep.subr.bf16.mxu0 %v1056
    %1926 = vmatpush1.bf16.msra.mxu0 %v1055
    %1927 = vmatprep.subr.bf16.mxu0 %v1064
    %1928 = vmatpush1.bf16.msra.mxu0 %v1063
    %1929 = vmatprep.subr.bf16.mxu0 %v1072
    %1930 = vmatpush1.bf16.msra.mxu0 %v1071
    %1931 = vmatprep.subr.bf16.mxu0 %v1080
    %1932 = vmatpush1.bf16.msra.mxu0 %v1079
    %1933 = vmatprep.subr.bf16.mxu0 %v1088
    %1934 = vmatpush1.bf16.msra.mxu0 %v1087
    %1935 = vmatprep.subr.bf16.mxu0 %v1096
    %1936 = vmatpush1.bf16.msra.mxu0 %v1095
    %1937 = vmatprep.subr.bf16.mxu0 %v1104
    %1938 = vmatpush1.bf16.msra.mxu0 %v1103
    %1939 = vmatprep.subr.bf16.mxu0 %v1112
    %1940 = vmatpush1.bf16.msra.mxu0 %v1111
    %1941 = vmatprep.subr.bf16.mxu0 %v1120
    %1942 = vmatpush1.bf16.msra.mxu0 %v1119
    %1943 = vmatprep.subr.bf16.mxu0 %v1128
    %1944 = vmatpush1.bf16.msra.mxu0 %v1127
    %1945 = vmatprep.subr.bf16.mxu0 %v1136
    %1946 = vmatpush1.bf16.msra.mxu0 %v1135
    %1947 = vmatprep.subr.bf16.mxu0 %v1144
    %1948 = vmatpush1.bf16.msra.mxu0 %v1143
    %1949 = vmatprep.subr.bf16.mxu0 %v1152
    %1950 = vmatpush1.bf16.msra.mxu0 %v1151
    %1951 = vmatprep.subr.bf16.mxu0 %v1160
    %1952 = vmatpush1.bf16.msra.mxu0 %v1159
    %1953 = vmatprep.subr.bf16.mxu0 %v1168
    %1954 = vmatpush1.bf16.msra.mxu0 %v1167
    %1955 = vmatprep.subr.bf16.mxu0 %v1176
    %1956 = vmatpush1.bf16.msra.mxu0 %v1175
    %1957 = vmatprep.mubr.bf16.mxu0 %v1341
    %1958 = vmatmul.mubr.bf16.gmra.mrb[0].mxu0 %v1333
    %v1959 = vpop.f32.mrb[0].mxu0
    %v1960 = vadd.f32 %v1919, %v1959
    %v1961 = vpop.f32.mrb[0].mxu0
    %v1962 = vadd.f32 %v1921, %v1961
    %v1963 = vpop.f32.mrb[0].mxu0
    %v1964 = vpop.f32.mrb[0].mxu0
    %1965 = vdwg.mxu0
    %1966 = vmatprep.subr.bf16.mxu0 %v1184
    %1967 = vmatpush1.bf16.msra.mxu0 %v1183
    %1968 = vmatprep.subr.bf16.mxu0 %v1192
    %1969 = vmatpush1.bf16.msra.mxu0 %v1191
    %1970 = vmatprep.subr.bf16.mxu0 %v1200
    %1971 = vmatpush1.bf16.msra.mxu0 %v1199
    %1972 = vmatprep.subr.bf16.mxu0 %v1208
    %1973 = vmatpush1.bf16.msra.mxu0 %v1207
    %1974 = vmatprep.subr.bf16.mxu0 %v1216
    %1975 = vmatpush1.bf16.msra.mxu0 %v1215
    %1976 = vmatprep.subr.bf16.mxu0 %v1224
    %1977 = vmatpush1.bf16.msra.mxu0 %v1223
    %1978 = vmatprep.subr.bf16.mxu0 %v1232
    %1979 = vmatpush1.bf16.msra.mxu0 %v1231
    %1980 = vmatprep.subr.bf16.mxu0 %v1240
    %1981 = vmatpush1.bf16.msra.mxu0 %v1239
    %1982 = vmatprep.subr.bf16.mxu0 %v1248
    %1983 = vmatpush1.bf16.msra.mxu0 %v1247
    %1984 = vmatprep.subr.bf16.mxu0 %v1256
    %1985 = vmatpush1.bf16.msra.mxu0 %v1255
    %1986 = vmatprep.subr.bf16.mxu0 %v1264
    %1987 = vmatpush1.bf16.msra.mxu0 %v1263
    %1988 = vmatprep.subr.bf16.mxu0 %v1272
    %1989 = vmatpush1.bf16.msra.mxu0 %v1271
    %1990 = vmatprep.subr.bf16.mxu0 %v1280
    %1991 = vmatpush1.bf16.msra.mxu0 %v1279
    %1992 = vmatprep.subr.bf16.mxu0 %v1288
    %1993 = vmatpush1.bf16.msra.mxu0 %v1287
    %1994 = vmatprep.subr.bf16.mxu0 %v1296
    %1995 = vmatpush1.bf16.msra.mxu0 %v1295
    %1996 = vmatprep.subr.bf16.mxu0 %v1304
    %1997 = vmatpush1.bf16.msra.mxu0 %v1303
    %1998 = vmatprep.mubr.bf16.mxu0 %v1342
    %1999 = vmatmul.mubr.bf16.gmra.mrb[0].mxu0 %v1340
    %v2000 = vpop.f32.mrb[0].mxu0
    %v2001 = vadd.f32 %v1960, %v2000
    %v2002 = vpop.f32.mrb[0].mxu0
    %v2003 = vadd.f32 %v1962, %v2002
    %v2004 = vpop.f32.mrb[0].mxu0
    %v2005 = vpop.f32.mrb[0].mxu0
    %2006 = vdwg.mxu0
    %v2007 = vld [vmem:[%s4] sm:$0xff]
    %v2009 = vlaneseq
    %v2010 = vshrl.u32 %v2009, 7
    %v2011 = vsub.s32 0, %v2010
    %v2012 = vrot.slane %v2007, %v2011
    %v2013 = vlaneseq
    %v2014 = vshrl.u32 %v2013, 7
    %v2015 = vsub.s32 1, %v2014
    %v2016 = vrot.slane %v2007, %v2015
    %v2017 = vlaneseq
    %v2018 = vshrl.u32 %v2017, 7
    %v2019 = vsub.s32 2, %v2018
    %v2020 = vrot.slane %v2007, %v2019
    %v2021 = vlaneseq
    %v2022 = vshrl.u32 %v2021, 7
    %v2023 = vsub.s32 3, %v2022
    %v2024 = vrot.slane %v2007, %v2023
    %v2025 = vlaneseq
    %v2026 = vshrl.u32 %v2025, 7
    %v2027 = vsub.s32 4, %v2026
    %v2028 = vrot.slane %v2007, %v2027
    %v2029 = vlaneseq
    %v2030 = vshrl.u32 %v2029, 7
    %v2031 = vsub.s32 5, %v2030
    %v2032 = vrot.slane %v2007, %v2031
    %v2033 = vlaneseq
    %v2034 = vshrl.u32 %v2033, 7
    %v2035 = vsub.s32 6, %v2034
    %v2036 = vrot.slane %v2007, %v2035
    %v2037 = vlaneseq
    %v2038 = vshrl.u32 %v2037, 7
    %v2039 = vsub.s32 7, %v2038
    %v2040 = vrot.slane %v2007, %v2039
    %v2049 = vmul.f32 %v1509, %v2012
    %v2050 = vmul.f32 %v1511, %v2016
    %v2051 = vmul.f32 %v1673, %v2020
    %v2052 = vmul.f32 %v1675, %v2024
    %v2053 = vmul.f32 %v1837, %v2028
    %v2054 = vmul.f32 %v1839, %v2032
    %v2055 = vmul.f32 %v2001, %v2036
    %v2056 = vmul.f32 %v2003, %v2040
    %v2057 = vld [vmem:[%s5] sm:$0xff]
    %v2059 = vlaneseq
    %v2060 = vshrl.u32 %v2059, 7
    %v2061 = vsub.s32 0, %v2060
    %v2062 = vrot.slane %v2057, %v2061
    %v2063 = vlaneseq
    %v2064 = vshrl.u32 %v2063, 7
    %v2065 = vsub.s32 1, %v2064
    %v2066 = vrot.slane %v2057, %v2065
    %v2067 = vlaneseq
    %v2068 = vshrl.u32 %v2067, 7
    %v2069 = vsub.s32 2, %v2068
    %v2070 = vrot.slane %v2057, %v2069
    %v2071 = vlaneseq
    %v2072 = vshrl.u32 %v2071, 7
    %v2073 = vsub.s32 3, %v2072
    %v2074 = vrot.slane %v2057, %v2073
    %v2075 = vlaneseq
    %v2076 = vshrl.u32 %v2075, 7
    %v2077 = vsub.s32 4, %v2076
    %v2078 = vrot.slane %v2057, %v2077
    %v2079 = vlaneseq
    %v2080 = vshrl.u32 %v2079, 7
    %v2081 = vsub.s32 5, %v2080
    %v2082 = vrot.slane %v2057, %v2081
    %v2083 = vlaneseq
    %v2084 = vshrl.u32 %v2083, 7
    %v2085 = vsub.s32 6, %v2084
    %v2086 = vrot.slane %v2057, %v2085
    %v2087 = vlaneseq
    %v2088 = vshrl.u32 %v2087, 7
    %v2089 = vsub.s32 7, %v2088
    %v2090 = vrot.slane %v2057, %v2089
    %v2099 = vadd.f32 %v2049, %v2062
    %v2100 = vadd.f32 %v2050, %v2066
    %v2101 = vadd.f32 %v2051, %v2070
    %v2102 = vadd.f32 %v2052, %v2074
    %v2103 = vadd.f32 %v2053, %v2078
    %v2104 = vadd.f32 %v2054, %v2082
    %v2105 = vadd.f32 %v2055, %v2086
    %v2106 = vadd.f32 %v2056, %v2090
    %v2107 = vmax.f32 %v2099, 0.0
    %v2108 = vmax.f32 %v2100, 0.0
    %v2109 = vmax.f32 %v2101, 0.0
    %v2110 = vmax.f32 %v2102, 0.0
    %v2111 = vmax.f32 %v2103, 0.0
    %v2112 = vmax.f32 %v2104, 0.0
    %v2113 = vmax.f32 %v2105, 0.0
    %v2114 = vmax.f32 %v2106, 0.0
    %v2115 = vpack.c.bf16 %v2107, %v2107
    %v2116 = vpack.c.bf16 %v2108, %v2108
    %v2117 = vpack.c.bf16 %v2109, %v2109
    %v2118 = vpack.c.bf16 %v2110, %v2110
    %v2119 = vpack.c.bf16 %v2111, %v2111
    %v2120 = vpack.c.bf16 %v2112, %v2112
    %v2121 = vpack.c.bf16 %v2113, %v2113
    %v2122 = vpack.c.bf16 %v2114, %v2114
    %v2123 = vld [vmem:[#allocation3] sm:$0xff]
    %v2124 = vld [vmem:[#allocation12] sm:$0xff]
    %v2125 = vld [vmem:[#allocation12 + $0x8] sm:$0xff]
    %v2126 = vld [vmem:[#allocation12 + $0x10] sm:$0xff]
    %v2127 = vld [vmem:[#allocation12 + $0x18] sm:$0xff]
    %v2128 = vld [vmem:[#allocation12 + $0x20] sm:$0xff]
    %v2129 = vld [vmem:[#allocation12 + $0x28] sm:$0xff]
    %v2130 = vld [vmem:[#allocation12 + $0x30] sm:$0xff]
    %v2131 = vld [vmem:[#allocation12 + $0x38] sm:$0xff]
    %v2132 = vld [vmem:[#allocation12 + $0x40] sm:$0xff]
    %v2133 = vld [vmem:[#allocation12 + $0x48] sm:$0xff]
    %v2134 = vld [vmem:[#allocation12 + $0x50] sm:$0xff]
    %v2135 = vld [vmem:[#allocation12 + $0x58] sm:$0xff]
    %v2136 = vld [vmem:[#allocation12 + $0x60] sm:$0xff]
    %v2137 = vld [vmem:[#allocation12 + $0x68] sm:$0xff]
    %v2138 = vld [vmem:[#allocation12 + $0x70] sm:$0xff]
    %v2139 = vld [vmem:[#allocation12 + $0x78] sm:$0xff]
    %v2140 = vld [vmem:[#allocation12 + $0x80] sm:$0xff]
    %v2141 = vld [vmem:[#allocation12 + $0x88] sm:$0xff]
    %v2142 = vld [vmem:[#allocation12 + $0x90] sm:$0xff]
    %v2143 = vld [vmem:[#allocation12 + $0x98] sm:$0xff]
    %v2144 = vld [vmem:[#allocation12 + $0xa0] sm:$0xff]
    %v2145 = vld [vmem:[#allocation12 + $0xa8] sm:$0xff]
    %v2146 = vld [vmem:[#allocation12 + $0xb0] sm:$0xff]
    %v2147 = vld [vmem:[#allocation12 + $0xb8] sm:$0xff]
    %v2148 = vld [vmem:[#allocation12 + $0xc0] sm:$0xff]
    %v2149 = vld [vmem:[#allocation12 + $0xc8] sm:$0xff]
    %v2150 = vld [vmem:[#allocation12 + $0xd0] sm:$0xff]
    %v2151 = vld [vmem:[#allocation12 + $0xd8] sm:$0xff]
    %v2152 = vld [vmem:[#allocation12 + $0xe0] sm:$0xff]
    %v2153 = vld [vmem:[#allocation12 + $0xe8] sm:$0xff]
    %v2154 = vld [vmem:[#allocation12 + $0xf0] sm:$0xff]
    %v2155 = vld [vmem:[#allocation12 + $0xf8] sm:$0xff]
    %v2156 = vld [vmem:[#allocation12 + $0x100] sm:$0xff]
    %v2157 = vld [vmem:[#allocation12 + $0x108] sm:$0xff]
    %v2158 = vld [vmem:[#allocation12 + $0x110] sm:$0xff]
    %v2159 = vld [vmem:[#allocation12 + $0x118] sm:$0xff]
    %v2160 = vld [vmem:[#allocation12 + $0x120] sm:$0xff]
    %v2161 = vld [vmem:[#allocation12 + $0x128] sm:$0xff]
    %v2162 = vld [vmem:[#allocation12 + $0x130] sm:$0xff]
    %v2163 = vld [vmem:[#allocation12 + $0x138] sm:$0xff]
    %v2164 = vld [vmem:[#allocation12 + $0x140] sm:$0xff]
    %v2165 = vld [vmem:[#allocation12 + $0x148] sm:$0xff]
    %v2166 = vld [vmem:[#allocation12 + $0x150] sm:$0xff]
    %v2167 = vld [vmem:[#allocation12 + $0x158] sm:$0xff]
    %v2168 = vld [vmem:[#allocation12 + $0x160] sm:$0xff]
    %v2169 = vld [vmem:[#allocation12 + $0x168] sm:$0xff]
    %v2170 = vld [vmem:[#allocation12 + $0x170] sm:$0xff]
    %v2171 = vld [vmem:[#allocation12 + $0x178] sm:$0xff]
    %v2172 = vld [vmem:[#allocation12 + $0x180] sm:$0xff]
    %v2173 = vld [vmem:[#allocation12 + $0x188] sm:$0xff]
    %v2174 = vld [vmem:[#allocation12 + $0x190] sm:$0xff]
    %v2175 = vld [vmem:[#allocation12 + $0x198] sm:$0xff]
    %v2176 = vld [vmem:[#allocation12 + $0x1a0] sm:$0xff]
    %v2177 = vld [vmem:[#allocation12 + $0x1a8] sm:$0xff]
    %v2178 = vld [vmem:[#allocation12 + $0x1b0] sm:$0xff]
    %v2179 = vld [vmem:[#allocation12 + $0x1b8] sm:$0xff]
    %v2180 = vld [vmem:[#allocation12 + $0x1c0] sm:$0xff]
    %v2181 = vld [vmem:[#allocation12 + $0x1c8] sm:$0xff]
    %v2182 = vld [vmem:[#allocation12 + $0x1d0] sm:$0xff]
    %v2183 = vld [vmem:[#allocation12 + $0x1d8] sm:$0xff]
    %v2184 = vld [vmem:[#allocation12 + $0x1e0] sm:$0xff]
    %v2185 = vld [vmem:[#allocation12 + $0x1e8] sm:$0xff]
    %v2186 = vld [vmem:[#allocation12 + $0x1f0] sm:$0xff]
    %v2187 = vld [vmem:[#allocation12 + $0x1f8] sm:$0xff]
    %v2188 = vld [vmem:[#allocation12 + $0x200] sm:$0xff]
    %v2189 = vld [vmem:[#allocation12 + $0x208] sm:$0xff]
    %v2190 = vld [vmem:[#allocation12 + $0x210] sm:$0xff]
    %v2191 = vld [vmem:[#allocation12 + $0x218] sm:$0xff]
    %v2192 = vld [vmem:[#allocation12 + $0x220] sm:$0xff]
    %v2193 = vld [vmem:[#allocation12 + $0x228] sm:$0xff]
    %v2194 = vld [vmem:[#allocation12 + $0x230] sm:$0xff]
    %v2195 = vld [vmem:[#allocation12 + $0x238] sm:$0xff]
    %v2196 = vld [vmem:[#allocation12 + $0x240] sm:$0xff]
    %v2197 = vld [vmem:[#allocation12 + $0x248] sm:$0xff]
    %v2198 = vld [vmem:[#allocation12 + $0x250] sm:$0xff]
    %v2199 = vld [vmem:[#allocation12 + $0x258] sm:$0xff]
    %v2200 = vld [vmem:[#allocation12 + $0x260] sm:$0xff]
    %v2201 = vld [vmem:[#allocation12 + $0x268] sm:$0xff]
    %v2202 = vld [vmem:[#allocation12 + $0x270] sm:$0xff]
    %v2203 = vld [vmem:[#allocation12 + $0x278] sm:$0xff]
    %v2204 = vld [vmem:[#allocation12 + $0x280] sm:$0xff]
    %v2205 = vld [vmem:[#allocation12 + $0x288] sm:$0xff]
    %v2206 = vld [vmem:[#allocation12 + $0x290] sm:$0xff]
    %v2207 = vld [vmem:[#allocation12 + $0x298] sm:$0xff]
    %v2208 = vld [vmem:[#allocation12 + $0x2a0] sm:$0xff]
    %v2209 = vld [vmem:[#allocation12 + $0x2a8] sm:$0xff]
    %v2210 = vld [vmem:[#allocation12 + $0x2b0] sm:$0xff]
    %v2211 = vld [vmem:[#allocation12 + $0x2b8] sm:$0xff]
    %v2212 = vld [vmem:[#allocation12 + $0x2c0] sm:$0xff]
    %v2213 = vld [vmem:[#allocation12 + $0x2c8] sm:$0xff]
    %v2214 = vld [vmem:[#allocation12 + $0x2d0] sm:$0xff]
    %v2215 = vld [vmem:[#allocation12 + $0x2d8] sm:$0xff]
    %v2216 = vld [vmem:[#allocation12 + $0x2e0] sm:$0xff]
    %v2217 = vld [vmem:[#allocation12 + $0x2e8] sm:$0xff]
    %v2218 = vld [vmem:[#allocation12 + $0x2f0] sm:$0xff]
    %v2219 = vld [vmem:[#allocation12 + $0x2f8] sm:$0xff]
    %v2220 = vld [vmem:[#allocation12 + $0x300] sm:$0xff]
    %v2221 = vld [vmem:[#allocation12 + $0x308] sm:$0xff]
    %v2222 = vld [vmem:[#allocation12 + $0x310] sm:$0xff]
    %v2223 = vld [vmem:[#allocation12 + $0x318] sm:$0xff]
    %v2224 = vld [vmem:[#allocation12 + $0x320] sm:$0xff]
    %v2225 = vld [vmem:[#allocation12 + $0x328] sm:$0xff]
    %v2226 = vld [vmem:[#allocation12 + $0x330] sm:$0xff]
    %v2227 = vld [vmem:[#allocation12 + $0x338] sm:$0xff]
    %v2228 = vld [vmem:[#allocation12 + $0x340] sm:$0xff]
    %v2229 = vld [vmem:[#allocation12 + $0x348] sm:$0xff]
    %v2230 = vld [vmem:[#allocation12 + $0x350] sm:$0xff]
    %v2231 = vld [vmem:[#allocation12 + $0x358] sm:$0xff]
    %v2232 = vld [vmem:[#allocation12 + $0x360] sm:$0xff]
    %v2233 = vld [vmem:[#allocation12 + $0x368] sm:$0xff]
    %v2234 = vld [vmem:[#allocation12 + $0x370] sm:$0xff]
    %v2235 = vld [vmem:[#allocation12 + $0x378] sm:$0xff]
    %v2236 = vld [vmem:[#allocation12 + $0x380] sm:$0xff]
    %v2237 = vld [vmem:[#allocation12 + $0x388] sm:$0xff]
    %v2238 = vld [vmem:[#allocation12 + $0x390] sm:$0xff]
    %v2239 = vld [vmem:[#allocation12 + $0x398] sm:$0xff]
    %v2240 = vld [vmem:[#allocation12 + $0x3a0] sm:$0xff]
    %v2241 = vld [vmem:[#allocation12 + $0x3a8] sm:$0xff]
    %v2242 = vld [vmem:[#allocation12 + $0x3b0] sm:$0xff]
    %v2243 = vld [vmem:[#allocation12 + $0x3b8] sm:$0xff]
    %v2244 = vld [vmem:[#allocation12 + $0x3c0] sm:$0xff]
    %v2245 = vld [vmem:[#allocation12 + $0x3c8] sm:$0xff]
    %v2246 = vld [vmem:[#allocation12 + $0x3d0] sm:$0xff]
    %v2247 = vld [vmem:[#allocation12 + $0x3d8] sm:$0xff]
    %v2248 = vld [vmem:[#allocation12 + $0x3e0] sm:$0xff]
    %v2249 = vld [vmem:[#allocation12 + $0x3e8] sm:$0xff]
    %v2250 = vld [vmem:[#allocation12 + $0x3f0] sm:$0xff]
    %v2251 = vld [vmem:[#allocation12 + $0x3f8] sm:$0xff]
    %v2380 = vunpack.c.l.b16 %v2124
    %v2381 = vunpack.c.h.b16 %v2124
    %v2382 = vunpack.c.l.b16 %v2125
    %v2383 = vunpack.c.h.b16 %v2125
    %v2384 = vunpack.c.l.b16 %v2126
    %v2385 = vunpack.c.h.b16 %v2126
    %v2386 = vunpack.c.l.b16 %v2127
    %v2387 = vunpack.c.h.b16 %v2127
    %v2388 = vunpack.c.l.b16 %v2128
    %v2389 = vunpack.c.h.b16 %v2128
    %v2390 = vunpack.c.l.b16 %v2129
    %v2391 = vunpack.c.h.b16 %v2129
    %v2392 = vunpack.c.l.b16 %v2130
    %v2393 = vunpack.c.h.b16 %v2130
    %v2394 = vunpack.c.l.b16 %v2131
    %v2395 = vunpack.c.h.b16 %v2131
    %v2396 = vunpack.c.l.b16 %v2132
    %v2397 = vunpack.c.h.b16 %v2132
    %v2398 = vunpack.c.l.b16 %v2133
    %v2399 = vunpack.c.h.b16 %v2133
    %v2400 = vunpack.c.l.b16 %v2134
    %v2401 = vunpack.c.h.b16 %v2134
    %v2402 = vunpack.c.l.b16 %v2135
    %v2403 = vunpack.c.h.b16 %v2135
    %v2404 = vunpack.c.l.b16 %v2136
    %v2405 = vunpack.c.h.b16 %v2136
    %v2406 = vunpack.c.l.b16 %v2137
    %v2407 = vunpack.c.h.b16 %v2137
    %v2408 = vunpack.c.l.b16 %v2138
    %v2409 = vunpack.c.h.b16 %v2138
    %v2410 = vunpack.c.l.b16 %v2139
    %v2411 = vunpack.c.h.b16 %v2139
    %v2412 = vunpack.c.l.b16 %v2140
    %v2413 = vunpack.c.h.b16 %v2140
    %v2414 = vunpack.c.l.b16 %v2141
    %v2415 = vunpack.c.h.b16 %v2141
    %v2416 = vunpack.c.l.b16 %v2142
    %v2417 = vunpack.c.h.b16 %v2142
    %v2418 = vunpack.c.l.b16 %v2143
    %v2419 = vunpack.c.h.b16 %v2143
    %v2420 = vunpack.c.l.b16 %v2144
    %v2421 = vunpack.c.h.b16 %v2144
    %v2422 = vunpack.c.l.b16 %v2145
    %v2423 = vunpack.c.h.b16 %v2145
    %v2424 = vunpack.c.l.b16 %v2146
    %v2425 = vunpack.c.h.b16 %v2146
    %v2426 = vunpack.c.l.b16 %v2147
    %v2427 = vunpack.c.h.b16 %v2147
    %v2428 = vunpack.c.l.b16 %v2148
    %v2429 = vunpack.c.h.b16 %v2148
    %v2430 = vunpack.c.l.b16 %v2149
    %v2431 = vunpack.c.h.b16 %v2149
    %v2432 = vunpack.c.l.b16 %v2150
    %v2433 = vunpack.c.h.b16 %v2150
    %v2434 = vunpack.c.l.b16 %v2151
    %v2435 = vunpack.c.h.b16 %v2151
    %v2436 = vunpack.c.l.b16 %v2152
    %v2437 = vunpack.c.h.b16 %v2152
    %v2438 = vunpack.c.l.b16 %v2153
    %v2439 = vunpack.c.h.b16 %v2153
    %v2440 = vunpack.c.l.b16 %v2154
    %v2441 = vunpack.c.h.b16 %v2154
    %v2442 = vunpack.c.l.b16 %v2155
    %v2443 = vunpack.c.h.b16 %v2155
    %v2444 = vunpack.c.l.b16 %v2156
    %v2445 = vunpack.c.h.b16 %v2156
    %v2446 = vunpack.c.l.b16 %v2157
    %v2447 = vunpack.c.h.b16 %v2157
    %v2448 = vunpack.c.l.b16 %v2158
    %v2449 = vunpack.c.h.b16 %v2158
    %v2450 = vunpack.c.l.b16 %v2159
    %v2451 = vunpack.c.h.b16 %v2159
    %v2452 = vunpack.c.l.b16 %v2160
    %v2453 = vunpack.c.h.b16 %v2160
    %v2454 = vunpack.c.l.b16 %v2161
    %v2455 = vunpack.c.h.b16 %v2161
    %v2456 = vunpack.c.l.b16 %v2162
    %v2457 = vunpack.c.h.b16 %v2162
    %v2458 = vunpack.c.l.b16 %v2163
    %v2459 = vunpack.c.h.b16 %v2163
    %v2460 = vunpack.c.l.b16 %v2164
    %v2461 = vunpack.c.h.b16 %v2164
    %v2462 = vunpack.c.l.b16 %v2165
    %v2463 = vunpack.c.h.b16 %v2165
    %v2464 = vunpack.c.l.b16 %v2166
    %v2465 = vunpack.c.h.b16 %v2166
    %v2466 = vunpack.c.l.b16 %v2167
    %v2467 = vunpack.c.h.b16 %v2167
    %v2468 = vunpack.c.l.b16 %v2168
    %v2469 = vunpack.c.h.b16 %v2168
    %v2470 = vunpack.c.l.b16 %v2169
    %v2471 = vunpack.c.h.b16 %v2169
    %v2472 = vunpack.c.l.b16 %v2170
    %v2473 = vunpack.c.h.b16 %v2170
    %v2474 = vunpack.c.l.b16 %v2171
    %v2475 = vunpack.c.h.b16 %v2171
    %v2476 = vunpack.c.l.b16 %v2172
    %v2477 = vunpack.c.h.b16 %v2172
    %v2478 = vunpack.c.l.b16 %v2173
    %v2479 = vunpack.c.h.b16 %v2173
    %v2480 = vunpack.c.l.b16 %v2174
    %v2481 = vunpack.c.h.b16 %v2174
    %v2482 = vunpack.c.l.b16 %v2175
    %v2483 = vunpack.c.h.b16 %v2175
    %v2484 = vunpack.c.l.b16 %v2176
    %v2485 = vunpack.c.h.b16 %v2176
    %v2486 = vunpack.c.l.b16 %v2177
    %v2487 = vunpack.c.h.b16 %v2177
    %v2488 = vunpack.c.l.b16 %v2178
    %v2489 = vunpack.c.h.b16 %v2178
    %v2490 = vunpack.c.l.b16 %v2179
    %v2491 = vunpack.c.h.b16 %v2179
    %v2492 = vunpack.c.l.b16 %v2180
    %v2493 = vunpack.c.h.b16 %v2180
    %v2494 = vunpack.c.l.b16 %v2181
    %v2495 = vunpack.c.h.b16 %v2181
    %v2496 = vunpack.c.l.b16 %v2182
    %v2497 = vunpack.c.h.b16 %v2182
    %v2498 = vunpack.c.l.b16 %v2183
    %v2499 = vunpack.c.h.b16 %v2183
    %v2500 = vunpack.c.l.b16 %v2184
    %v2501 = vunpack.c.h.b16 %v2184
    %v2502 = vunpack.c.l.b16 %v2185
    %v2503 = vunpack.c.h.b16 %v2185
    %v2504 = vunpack.c.l.b16 %v2186
    %v2505 = vunpack.c.h.b16 %v2186
    %v2506 = vunpack.c.l.b16 %v2187
    %v2507 = vunpack.c.h.b16 %v2187
    %v2508 = vunpack.c.l.b16 %v2188
    %v2509 = vunpack.c.h.b16 %v2188
    %v2510 = vunpack.c.l.b16 %v2189
    %v2511 = vunpack.c.h.b16 %v2189
    %v2512 = vunpack.c.l.b16 %v2190
    %v2513 = vunpack.c.h.b16 %v2190
    %v2514 = vunpack.c.l.b16 %v2191
    %v2515 = vunpack.c.h.b16 %v2191
    %v2516 = vunpack.c.l.b16 %v2192
    %v2517 = vunpack.c.h.b16 %v2192
    %v2518 = vunpack.c.l.b16 %v2193
    %v2519 = vunpack.c.h.b16 %v2193
    %v2520 = vunpack.c.l.b16 %v2194
    %v2521 = vunpack.c.h.b16 %v2194
    %v2522 = vunpack.c.l.b16 %v2195
    %v2523 = vunpack.c.h.b16 %v2195
    %v2524 = vunpack.c.l.b16 %v2196
    %v2525 = vunpack.c.h.b16 %v2196
    %v2526 = vunpack.c.l.b16 %v2197
    %v2527 = vunpack.c.h.b16 %v2197
    %v2528 = vunpack.c.l.b16 %v2198
    %v2529 = vunpack.c.h.b16 %v2198
    %v2530 = vunpack.c.l.b16 %v2199
    %v2531 = vunpack.c.h.b16 %v2199
    %v2532 = vunpack.c.l.b16 %v2200
    %v2533 = vunpack.c.h.b16 %v2200
    %v2534 = vunpack.c.l.b16 %v2201
    %v2535 = vunpack.c.h.b16 %v2201
    %v2536 = vunpack.c.l.b16 %v2202
    %v2537 = vunpack.c.h.b16 %v2202
    %v2538 = vunpack.c.l.b16 %v2203
    %v2539 = vunpack.c.h.b16 %v2203
    %v2540 = vunpack.c.l.b16 %v2204
    %v2541 = vunpack.c.h.b16 %v2204
    %v2542 = vunpack.c.l.b16 %v2205
    %v2543 = vunpack.c.h.b16 %v2205
    %v2544 = vunpack.c.l.b16 %v2206
    %v2545 = vunpack.c.h.b16 %v2206
    %v2546 = vunpack.c.l.b16 %v2207
    %v2547 = vunpack.c.h.b16 %v2207
    %v2548 = vunpack.c.l.b16 %v2208
    %v2549 = vunpack.c.h.b16 %v2208
    %v2550 = vunpack.c.l.b16 %v2209
    %v2551 = vunpack.c.h.b16 %v2209
    %v2552 = vunpack.c.l.b16 %v2210
    %v2553 = vunpack.c.h.b16 %v2210
    %v2554 = vunpack.c.l.b16 %v2211
    %v2555 = vunpack.c.h.b16 %v2211
    %v2556 = vunpack.c.l.b16 %v2212
    %v2557 = vunpack.c.h.b16 %v2212
    %v2558 = vunpack.c.l.b16 %v2213
    %v2559 = vunpack.c.h.b16 %v2213
    %v2560 = vunpack.c.l.b16 %v2214
    %v2561 = vunpack.c.h.b16 %v2214
    %v2562 = vunpack.c.l.b16 %v2215
    %v2563 = vunpack.c.h.b16 %v2215
    %v2564 = vunpack.c.l.b16 %v2216
    %v2565 = vunpack.c.h.b16 %v2216
    %v2566 = vunpack.c.l.b16 %v2217
    %v2567 = vunpack.c.h.b16 %v2217
    %v2568 = vunpack.c.l.b16 %v2218
    %v2569 = vunpack.c.h.b16 %v2218
    %v2570 = vunpack.c.l.b16 %v2219
    %v2571 = vunpack.c.h.b16 %v2219
    %v2572 = vunpack.c.l.b16 %v2220
    %v2573 = vunpack.c.h.b16 %v2220
    %v2574 = vunpack.c.l.b16 %v2221
    %v2575 = vunpack.c.h.b16 %v2221
    %v2576 = vunpack.c.l.b16 %v2222
    %v2577 = vunpack.c.h.b16 %v2222
    %v2578 = vunpack.c.l.b16 %v2223
    %v2579 = vunpack.c.h.b16 %v2223
    %v2580 = vunpack.c.l.b16 %v2224
    %v2581 = vunpack.c.h.b16 %v2224
    %v2582 = vunpack.c.l.b16 %v2225
    %v2583 = vunpack.c.h.b16 %v2225
    %v2584 = vunpack.c.l.b16 %v2226
    %v2585 = vunpack.c.h.b16 %v2226
    %v2586 = vunpack.c.l.b16 %v2227
    %v2587 = vunpack.c.h.b16 %v2227
    %v2588 = vunpack.c.l.b16 %v2228
    %v2589 = vunpack.c.h.b16 %v2228
    %v2590 = vunpack.c.l.b16 %v2229
    %v2591 = vunpack.c.h.b16 %v2229
    %v2592 = vunpack.c.l.b16 %v2230
    %v2593 = vunpack.c.h.b16 %v2230
    %v2594 = vunpack.c.l.b16 %v2231
    %v2595 = vunpack.c.h.b16 %v2231
    %v2596 = vunpack.c.l.b16 %v2232
    %v2597 = vunpack.c.h.b16 %v2232
    %v2598 = vunpack.c.l.b16 %v2233
    %v2599 = vunpack.c.h.b16 %v2233
    %v2600 = vunpack.c.l.b16 %v2234
    %v2601 = vunpack.c.h.b16 %v2234
    %v2602 = vunpack.c.l.b16 %v2235
    %v2603 = vunpack.c.h.b16 %v2235
    %v2604 = vunpack.c.l.b16 %v2236
    %v2605 = vunpack.c.h.b16 %v2236
    %v2606 = vunpack.c.l.b16 %v2237
    %v2607 = vunpack.c.h.b16 %v2237
    %v2608 = vunpack.c.l.b16 %v2238
    %v2609 = vunpack.c.h.b16 %v2238
    %v2610 = vunpack.c.l.b16 %v2239
    %v2611 = vunpack.c.h.b16 %v2239
    %v2612 = vunpack.c.l.b16 %v2240
    %v2613 = vunpack.c.h.b16 %v2240
    %v2614 = vunpack.c.l.b16 %v2241
    %v2615 = vunpack.c.h.b16 %v2241
    %v2616 = vunpack.c.l.b16 %v2242
    %v2617 = vunpack.c.h.b16 %v2242
    %v2618 = vunpack.c.l.b16 %v2243
    %v2619 = vunpack.c.h.b16 %v2243
    %v2620 = vunpack.c.l.b16 %v2244
    %v2621 = vunpack.c.h.b16 %v2244
    %v2622 = vunpack.c.l.b16 %v2245
    %v2623 = vunpack.c.h.b16 %v2245
    %v2624 = vunpack.c.l.b16 %v2246
    %v2625 = vunpack.c.h.b16 %v2246
    %v2626 = vunpack.c.l.b16 %v2247
    %v2627 = vunpack.c.h.b16 %v2247
    %v2628 = vunpack.c.l.b16 %v2248
    %v2629 = vunpack.c.h.b16 %v2248
    %v2630 = vunpack.c.l.b16 %v2249
    %v2631 = vunpack.c.h.b16 %v2249
    %v2632 = vunpack.c.l.b16 %v2250
    %v2633 = vunpack.c.h.b16 %v2250
    %v2634 = vunpack.c.l.b16 %v2251
    %v2635 = vunpack.c.h.b16 %v2251
    %v2636 = vpack.c.b16 %v2382, %v2380
    %v2637 = vpack.c.b16 %v2383, %v2381
    %v2638 = vpack.c.b16 %v2386, %v2384
    %v2639 = vpack.c.b16 %v2387, %v2385
    %v2640 = vpack.c.b16 %v2390, %v2388
    %v2641 = vpack.c.b16 %v2391, %v2389
    %v2642 = vpack.c.b16 %v2394, %v2392
    %v2643 = vpack.c.b16 %v2395, %v2393
    %v2644 = vpack.c.b16 %v2398, %v2396
    %v2645 = vpack.c.b16 %v2399, %v2397
    %v2646 = vpack.c.b16 %v2402, %v2400
    %v2647 = vpack.c.b16 %v2403, %v2401
    %v2648 = vpack.c.b16 %v2406, %v2404
    %v2649 = vpack.c.b16 %v2407, %v2405
    %v2650 = vpack.c.b16 %v2410, %v2408
    %v2651 = vpack.c.b16 %v2411, %v2409
    %v2652 = vpack.c.b16 %v2414, %v2412
    %v2653 = vpack.c.b16 %v2415, %v2413
    %v2654 = vpack.c.b16 %v2418, %v2416
    %v2655 = vpack.c.b16 %v2419, %v2417
    %v2656 = vpack.c.b16 %v2422, %v2420
    %v2657 = vpack.c.b16 %v2423, %v2421
    %v2658 = vpack.c.b16 %v2426, %v2424
    %v2659 = vpack.c.b16 %v2427, %v2425
    %v2660 = vpack.c.b16 %v2430, %v2428
    %v2661 = vpack.c.b16 %v2431, %v2429
    %v2662 = vpack.c.b16 %v2434, %v2432
    %v2663 = vpack.c.b16 %v2435, %v2433
    %v2664 = vpack.c.b16 %v2438, %v2436
    %v2665 = vpack.c.b16 %v2439, %v2437
    %v2666 = vpack.c.b16 %v2442, %v2440
    %v2667 = vpack.c.b16 %v2443, %v2441
    %v2668 = vpack.c.b16 %v2446, %v2444
    %v2669 = vpack.c.b16 %v2447, %v2445
    %v2670 = vpack.c.b16 %v2450, %v2448
    %v2671 = vpack.c.b16 %v2451, %v2449
    %v2672 = vpack.c.b16 %v2454, %v2452
    %v2673 = vpack.c.b16 %v2455, %v2453
    %v2674 = vpack.c.b16 %v2458, %v2456
    %v2675 = vpack.c.b16 %v2459, %v2457
    %v2676 = vpack.c.b16 %v2462, %v2460
    %v2677 = vpack.c.b16 %v2463, %v2461
    %v2678 = vpack.c.b16 %v2466, %v2464
    %v2679 = vpack.c.b16 %v2467, %v2465
    %v2680 = vpack.c.b16 %v2470, %v2468
    %v2681 = vpack.c.b16 %v2471, %v2469
    %v2682 = vpack.c.b16 %v2474, %v2472
    %v2683 = vpack.c.b16 %v2475, %v2473
    %v2684 = vpack.c.b16 %v2478, %v2476
    %v2685 = vpack.c.b16 %v2479, %v2477
    %v2686 = vpack.c.b16 %v2482, %v2480
    %v2687 = vpack.c.b16 %v2483, %v2481
    %v2688 = vpack.c.b16 %v2486, %v2484
    %v2689 = vpack.c.b16 %v2487, %v2485
    %v2690 = vpack.c.b16 %v2490, %v2488
    %v2691 = vpack.c.b16 %v2491, %v2489
    %v2692 = vpack.c.b16 %v2494, %v2492
    %v2693 = vpack.c.b16 %v2495, %v2493
    %v2694 = vpack.c.b16 %v2498, %v2496
    %v2695 = vpack.c.b16 %v2499, %v2497
    %v2696 = vpack.c.b16 %v2502, %v2500
    %v2697 = vpack.c.b16 %v2503, %v2501
    %v2698 = vpack.c.b16 %v2506, %v2504
    %v2699 = vpack.c.b16 %v2507, %v2505
    %v2700 = vpack.c.b16 %v2510, %v2508
    %v2701 = vpack.c.b16 %v2511, %v2509
    %v2702 = vpack.c.b16 %v2514, %v2512
    %v2703 = vpack.c.b16 %v2515, %v2513
    %v2704 = vpack.c.b16 %v2518, %v2516
    %v2705 = vpack.c.b16 %v2519, %v2517
    %v2706 = vpack.c.b16 %v2522, %v2520
    %v2707 = vpack.c.b16 %v2523, %v2521
    %v2708 = vpack.c.b16 %v2526, %v2524
    %v2709 = vpack.c.b16 %v2527, %v2525
    %v2710 = vpack.c.b16 %v2530, %v2528
    %v2711 = vpack.c.b16 %v2531, %v2529
    %v2712 = vpack.c.b16 %v2534, %v2532
    %v2713 = vpack.c.b16 %v2535, %v2533
    %v2714 = vpack.c.b16 %v2538, %v2536
    %v2715 = vpack.c.b16 %v2539, %v2537
    %v2716 = vpack.c.b16 %v2542, %v2540
    %v2717 = vpack.c.b16 %v2543, %v2541
    %v2718 = vpack.c.b16 %v2546, %v2544
    %v2719 = vpack.c.b16 %v2547, %v2545
    %v2720 = vpack.c.b16 %v2550, %v2548
    %v2721 = vpack.c.b16 %v2551, %v2549
    %v2722 = vpack.c.b16 %v2554, %v2552
    %v2723 = vpack.c.b16 %v2555, %v2553
    %v2724 = vpack.c.b16 %v2558, %v2556
    %v2725 = vpack.c.b16 %v2559, %v2557
    %v2726 = vpack.c.b16 %v2562, %v2560
    %v2727 = vpack.c.b16 %v2563, %v2561
    %v2728 = vpack.c.b16 %v2566, %v2564
    %v2729 = vpack.c.b16 %v2567, %v2565
    %v2730 = vpack.c.b16 %v2570, %v2568
    %v2731 = vpack.c.b16 %v2571, %v2569
    %v2732 = vpack.c.b16 %v2574, %v2572
    %v2733 = vpack.c.b16 %v2575, %v2573
    %v2734 = vpack.c.b16 %v2578, %v2576
    %v2735 = vpack.c.b16 %v2579, %v2577
    %v2736 = vpack.c.b16 %v2582, %v2580
    %v2737 = vpack.c.b16 %v2583, %v2581
    %v2738 = vpack.c.b16 %v2586, %v2584
    %v2739 = vpack.c.b16 %v2587, %v2585
    %v2740 = vpack.c.b16 %v2590, %v2588
    %v2741 = vpack.c.b16 %v2591, %v2589
    %v2742 = vpack.c.b16 %v2594, %v2592
    %v2743 = vpack.c.b16 %v2595, %v2593
    %v2744 = vpack.c.b16 %v2598, %v2596
    %v2745 = vpack.c.b16 %v2599, %v2597
    %v2746 = vpack.c.b16 %v2602, %v2600
    %v2747 = vpack.c.b16 %v2603, %v2601
    %v2748 = vpack.c.b16 %v2606, %v2604
    %v2749 = vpack.c.b16 %v2607, %v2605
    %v2750 = vpack.c.b16 %v2610, %v2608
    %v2751 = vpack.c.b16 %v2611, %v2609
    %v2752 = vpack.c.b16 %v2614, %v2612
    %v2753 = vpack.c.b16 %v2615, %v2613
    %v2754 = vpack.c.b16 %v2618, %v2616
    %v2755 = vpack.c.b16 %v2619, %v2617
    %v2756 = vpack.c.b16 %v2622, %v2620
    %v2757 = vpack.c.b16 %v2623, %v2621
    %v2758 = vpack.c.b16 %v2626, %v2624
    %v2759 = vpack.c.b16 %v2627, %v2625
    %v2760 = vpack.c.b16 %v2630, %v2628
    %v2761 = vpack.c.b16 %v2631, %v2629
    %v2762 = vpack.c.b16 %v2634, %v2632
    %v2763 = vpack.c.b16 %v2635, %v2633
    %2892 = vmatprep.subr.bf16.mxu0 %v2637
    %2893 = vmatpush1.bf16.msra.mxu0 %v2636
    %2894 = vmatprep.subr.bf16.mxu0 %v2639
    %2895 = vmatpush1.bf16.msra.mxu0 %v2638
    %2896 = vmatprep.subr.bf16.mxu0 %v2641
    %2897 = vmatpush1.bf16.msra.mxu0 %v2640
    %2898 = vmatprep.subr.bf16.mxu0 %v2643
    %2899 = vmatpush1.bf16.msra.mxu0 %v2642
    %2900 = vmatprep.subr.bf16.mxu0 %v2645
    %2901 = vmatpush1.bf16.msra.mxu0 %v2644
    %2902 = vmatprep.subr.bf16.mxu0 %v2647
    %2903 = vmatpush1.bf16.msra.mxu0 %v2646
    %2904 = vmatprep.subr.bf16.mxu0 %v2649
    %2905 = vmatpush1.bf16.msra.mxu0 %v2648
    %2906 = vmatprep.subr.bf16.mxu0 %v2651
    %2907 = vmatpush1.bf16.msra.mxu0 %v2650
    %2908 = vmatprep.subr.bf16.mxu0 %v2653
    %2909 = vmatpush1.bf16.msra.mxu0 %v2652
    %2910 = vmatprep.subr.bf16.mxu0 %v2655
    %2911 = vmatpush1.bf16.msra.mxu0 %v2654
    %2912 = vmatprep.subr.bf16.mxu0 %v2657
    %2913 = vmatpush1.bf16.msra.mxu0 %v2656
    %2914 = vmatprep.subr.bf16.mxu0 %v2659
    %2915 = vmatpush1.bf16.msra.mxu0 %v2658
    %2916 = vmatprep.subr.bf16.mxu0 %v2661
    %2917 = vmatpush1.bf16.msra.mxu0 %v2660
    %2918 = vmatprep.subr.bf16.mxu0 %v2663
    %2919 = vmatpush1.bf16.msra.mxu0 %v2662
    %2920 = vmatprep.subr.bf16.mxu0 %v2665
    %2921 = vmatpush1.bf16.msra.mxu0 %v2664
    %2922 = vmatprep.subr.bf16.mxu0 %v2667
    %2923 = vmatpush1.bf16.msra.mxu0 %v2666
    %2924 = vmatprep.mubr.bf16.mxu0 %v2116
    %2925 = vmatmul.mubr.bf16.gmra.mrb[0].mxu0 %v2115
    %v2926 = vpop.f32.mrb[0].mxu0
    %v2927 = vadd.f32 0.0, %v2926
    %v2928 = vpop.f32.mrb[0].mxu0
    %v2929 = vadd.f32 0.0, %v2928
    %v2930 = vpop.f32.mrb[0].mxu0
    %v2931 = vpop.f32.mrb[0].mxu0
    %2932 = vdwg.mxu0
    %2933 = vmatprep.subr.bf16.mxu0 %v2669
    %2934 = vmatpush1.bf16.msra.mxu0 %v2668
    %2935 = vmatprep.subr.bf16.mxu0 %v2671
    %2936 = vmatpush1.bf16.msra.mxu0 %v2670
    %2937 = vmatprep.subr.bf16.mxu0 %v2673
    %2938 = vmatpush1.bf16.msra.mxu0 %v2672
    %2939 = vmatprep.subr.bf16.mxu0 %v2675
    %2940 = vmatpush1.bf16.msra.mxu0 %v2674
    %2941 = vmatprep.subr.bf16.mxu0 %v2677
    %2942 = vmatpush1.bf16.msra.mxu0 %v2676
    %2943 = vmatprep.subr.bf16.mxu0 %v2679
    %2944 = vmatpush1.bf16.msra.mxu0 %v2678
    %2945 = vmatprep.subr.bf16.mxu0 %v2681
    %2946 = vmatpush1.bf16.msra.mxu0 %v2680
    %2947 = vmatprep.subr.bf16.mxu0 %v2683
    %2948 = vmatpush1.bf16.msra.mxu0 %v2682
    %2949 = vmatprep.subr.bf16.mxu0 %v2685
    %2950 = vmatpush1.bf16.msra.mxu0 %v2684
    %2951 = vmatprep.subr.bf16.mxu0 %v2687
    %2952 = vmatpush1.bf16.msra.mxu0 %v2686
    %2953 = vmatprep.subr.bf16.mxu0 %v2689
    %2954 = vmatpush1.bf16.msra.mxu0 %v2688
    %2955 = vmatprep.subr.bf16.mxu0 %v2691
    %2956 = vmatpush1.bf16.msra.mxu0 %v2690
    %2957 = vmatprep.subr.bf16.mxu0 %v2693
    %2958 = vmatpush1.bf16.msra.mxu0 %v2692
    %2959 = vmatprep.subr.bf16.mxu0 %v2695
    %2960 = vmatpush1.bf16.msra.mxu0 %v2694
    %2961 = vmatprep.subr.bf16.mxu0 %v2697
    %2962 = vmatpush1.bf16.msra.mxu0 %v2696
    %2963 = vmatprep.subr.bf16.mxu0 %v2699
    %2964 = vmatpush1.bf16.msra.mxu0 %v2698
    %2965 = vmatprep.mubr.bf16.mxu0 %v2118
    %2966 = vmatmul.mubr.bf16.gmra.mrb[0].mxu0 %v2117
    %v2967 = vpop.f32.mrb[0].mxu0
    %v2968 = vadd.f32 %v2927, %v2967
    %v2969 = vpop.f32.mrb[0].mxu0
    %v2970 = vadd.f32 %v2929, %v2969
    %v2971 = vpop.f32.mrb[0].mxu0
    %v2972 = vpop.f32.mrb[0].mxu0
    %2973 = vdwg.mxu0
    %2974 = vmatprep.subr.bf16.mxu0 %v2701
    %2975 = vmatpush1.bf16.msra.mxu0 %v2700
    %2976 = vmatprep.subr.bf16.mxu0 %v2703
    %2977 = vmatpush1.bf16.msra.mxu0 %v2702
    %2978 = vmatprep.subr.bf16.mxu0 %v2705
    %2979 = vmatpush1.bf16.msra.mxu0 %v2704
    %2980 = vmatprep.subr.bf16.mxu0 %v2707
    %2981 = vmatpush1.bf16.msra.mxu0 %v2706
    %2982 = vmatprep.subr.bf16.mxu0 %v2709
    %2983 = vmatpush1.bf16.msra.mxu0 %v2708
    %2984 = vmatprep.subr.bf16.mxu0 %v2711
    %2985 = vmatpush1.bf16.msra.mxu0 %v2710
    %2986 = vmatprep.subr.bf16.mxu0 %v2713
    %2987 = vmatpush1.bf16.msra.mxu0 %v2712
    %2988 = vmatprep.subr.bf16.mxu0 %v2715
    %2989 = vmatpush1.bf16.msra.mxu0 %v2714
    %2990 = vmatprep.subr.bf16.mxu0 %v2717
    %2991 = vmatpush1.bf16.msra.mxu0 %v2716
    %2992 = vmatprep.subr.bf16.mxu0 %v2719
    %2993 = vmatpush1.bf16.msra.mxu0 %v2718
    %2994 = vmatprep.subr.bf16.mxu0 %v2721
    %2995 = vmatpush1.bf16.msra.mxu0 %v2720
    %2996 = vmatprep.subr.bf16.mxu0 %v2723
    %2997 = vmatpush1.bf16.msra.mxu0 %v2722
    %2998 = vmatprep.subr.bf16.mxu0 %v2725
    %2999 = vmatpush1.bf16.msra.mxu0 %v2724
    %3000 = vmatprep.subr.bf16.mxu0 %v2727
    %3001 = vmatpush1.bf16.msra.mxu0 %v2726
    %3002 = vmatprep.subr.bf16.mxu0 %v2729
    %3003 = vmatpush1.bf16.msra.mxu0 %v2728
    %3004 = vmatprep.subr.bf16.mxu0 %v2731
    %3005 = vmatpush1.bf16.msra.mxu0 %v2730
    %3006 = vmatprep.mubr.bf16.mxu0 %v2120
    %3007 = vmatmul.mubr.bf16.gmra.mrb[0].mxu0 %v2119
    %v3008 = vpop.f32.mrb[0].mxu0
    %v3009 = vadd.f32 %v2968, %v3008
    %v3010 = vpop.f32.mrb[0].mxu0
    %v3011 = vadd.f32 %v2970, %v3010
    %v3012 = vpop.f32.mrb[0].mxu0
    %v3013 = vpop.f32.mrb[0].mxu0
    %3014 = vdwg.mxu0
    %3015 = vmatprep.subr.bf16.mxu0 %v2733
    %3016 = vmatpush1.bf16.msra.mxu0 %v2732
    %3017 = vmatprep.subr.bf16.mxu0 %v2735
    %3018 = vmatpush1.bf16.msra.mxu0 %v2734
    %3019 = vmatprep.subr.bf16.mxu0 %v2737
    %3020 = vmatpush1.bf16.msra.mxu0 %v2736
    %3021 = vmatprep.subr.bf16.mxu0 %v2739
    %3022 = vmatpush1.bf16.msra.mxu0 %v2738
    %3023 = vmatprep.subr.bf16.mxu0 %v2741
    %3024 = vmatpush1.bf16.msra.mxu0 %v2740
    %3025 = vmatprep.subr.bf16.mxu0 %v2743
    %3026 = vmatpush1.bf16.msra.mxu0 %v2742
    %3027 = vmatprep.subr.bf16.mxu0 %v2745
    %3028 = vmatpush1.bf16.msra.mxu0 %v2744
    %3029 = vmatprep.subr.bf16.mxu0 %v2747
    %3030 = vmatpush1.bf16.msra.mxu0 %v2746
    %3031 = vmatprep.subr.bf16.mxu0 %v2749
    %3032 = vmatpush1.bf16.msra.mxu0 %v2748
    %3033 = vmatprep.subr.bf16.mxu0 %v2751
    %3034 = vmatpush1.bf16.msra.mxu0 %v2750
    %3035 = vmatprep.subr.bf16.mxu0 %v2753
    %3036 = vmatpush1.bf16.msra.mxu0 %v2752
    %3037 = vmatprep.subr.bf16.mxu0 %v2755
    %3038 = vmatpush1.bf16.msra.mxu0 %v2754
    %3039 = vmatprep.subr.bf16.mxu0 %v2757
    %3040 = vmatpush1.bf16.msra.mxu0 %v2756
    %3041 = vmatprep.subr.bf16.mxu0 %v2759
    %3042 = vmatpush1.bf16.msra.mxu0 %v2758
    %3043 = vmatprep.subr.bf16.mxu0 %v2761
    %3044 = vmatpush1.bf16.msra.mxu0 %v2760
    %3045 = vmatprep.subr.bf16.mxu0 %v2763
    %3046 = vmatpush1.bf16.msra.mxu0 %v2762
    %3047 = vmatprep.mubr.bf16.mxu0 %v2122
    %3048 = vmatmul.mubr.bf16.gmra.mrb[0].mxu0 %v2121
    %v3049 = vpop.f32.mrb[0].mxu0
    %v3050 = vadd.f32 %v3009, %v3049
    %v3051 = vpop.f32.mrb[0].mxu0
    %v3052 = vadd.f32 %v3011, %v3051
    %v3053 = vpop.f32.mrb[0].mxu0
    %v3054 = vpop.f32.mrb[0].mxu0
    %3055 = vdwg.mxu0
    %v3058 = vcombine.low %v3050, %v3052
    %v3060 = vadd.f32 %v2123, %v3058
    %3061 = vst [vmem:[#allocation3] sm:$0xff] %v3060
    // Predicated region
    $region62: #{tpu_custom_call.1} parent=1 // pred_check
      %p3062 = pneg %p102
    $region63: #{tpu_custom_call.1} parent=1 // pred_check_branch
      %3064 = sbr.rel (%p3062) target = $region65
    $region64: #{tpu_custom_call.1} parent=1 // pred_region
      %v3065 = vld [vmem:[#allocation3] sm:$0xff]
      %3066 = vst [vmem:[#allocation13] sm:$0xf] %v3065
      %v3068 = vcombine.high %v3065, %v3065
      %3070 = vst [vmem:[#allocation14] sm:$0xf] %v3068
      %v3071 = vld [vmem:[%s8] sm:$0xf]
      %v3072 = vrot.slane %v3065, 4
      %v3074 = vmul.f32 %v3072, 1.442695
      %v3075 = vpow.pop %v3074
      %v3076 = vmul.f32 %v3071, %v3075
      %v3077 = vadd.f32 %v3065, %v3076
      %3078 = vst [vmem:[#allocation16] sm:$0xf] %v3077
    $region65: #{tpu_custom_call.1} parent=1 // pred_fallthru
      _
    // Predicated region
    $region66: #{tpu_custom_call.1} parent=1 // pred_check
      _
    $region67: #{tpu_custom_call.1} parent=1 // pred_check_branch
      %3080 = sbr.rel (0) target = $region69
    $region68: #{tpu_custom_call.1} parent=1 // pred_region
      %s3082 = ssub.s32 64, 64
      %3083 = vsyncadd [#allocation6], %s3082
      %s3085 = sshll.u32 [#allocation13], 4
      %s3086 = int_to_ptr.vmem [resolvable:$true] %s3085
      %3088 = dma.vmem_to_hbm [thread:$0]  %s3086, 64, %s9, [#allocation6]
    $region69: #{tpu_custom_call.1} parent=1 // pred_fallthru
      _
    // Predicated region
    $region70: #{tpu_custom_call.1} parent=1 // pred_check
      _
    $region71: #{tpu_custom_call.1} parent=1 // pred_check_branch
      %3090 = sbr.rel (0) target = $region73
    $region72: #{tpu_custom_call.1} parent=1 // pred_region
      %s3092 = ssub.s32 64, 64
      %3093 = vsyncadd [#allocation15], %s3092
      %s3095 = sshll.u32 [#allocation14], 4
      %s3096 = int_to_ptr.vmem [resolvable:$true] %s3095
      %3098 = dma.vmem_to_hbm [thread:$0]  %s3096, 64, %s10, [#allocation15]
    $region73: #{tpu_custom_call.1} parent=1 // pred_fallthru
      _
    // Predicated region
    $region74: #{tpu_custom_call.1} parent=1 // pred_check
      _
    $region75: #{tpu_custom_call.1} parent=1 // pred_check_branch
      %3100 = sbr.rel (0) target = $region77
    $region76: #{tpu_custom_call.1} parent=1 // pred_region
      %s3102 = ssub.s32 64, 64
      %3103 = vsyncadd [#allocation15], %s3102
      %s3105 = sshll.u32 [#allocation16], 4
      %s3106 = int_to_ptr.vmem [resolvable:$true] %s3105
      %3108 = dma.vmem_to_hbm [thread:$0]  %s3106, 64, %s11, [#allocation15]
    $region77: #{tpu_custom_call.1} parent=1 // pred_fallthru
      _
    // Predicated region
    $region78: #{tpu_custom_call.1} parent=1 // pred_check
      _
    $region79: #{tpu_custom_call.1} parent=1 // pred_check_branch
      %3110 = sbr.rel (0) target = $region81
    $region80: #{tpu_custom_call.1} parent=1 // pred_region
      %3111 = dma.done [#allocation6], 64
    $region81: #{tpu_custom_call.1} parent=1 // pred_fallthru
      _
    // Predicated region
    $region82: #{tpu_custom_call.1} parent=1 // pred_check
      _
    $region83: #{tpu_custom_call.1} parent=1 // pred_check_branch
      %3113 = sbr.rel (0) target = $region85
    $region84: #{tpu_custom_call.1} parent=1 // pred_region
      %3114 = dma.done [#allocation15], 64
    $region85: #{tpu_custom_call.1} parent=1 // pred_fallthru
      _
    // Predicated region
    $region86: #{tpu_custom_call.1} parent=1 // pred_check
      _
    $region87: #{tpu_custom_call.1} parent=1 // pred_check_branch
      %3116 = sbr.rel (0) target = $region89
    $region88: #{tpu_custom_call.1} parent=1 // pred_region
      %3117 = dma.done [#allocation15], 64
    $region89: #{tpu_custom_call.1} parent=1 // pred_fallthru
      _
    %3118 = vsyncpa [#allocation5], 1
    %3119 = vsyncpa [#allocation8], 1
    %3120 = vsyncpa [#allocation11], 1
    %3121 = vsyncpa [#allocation6], 1
    %3122 = vsyncpa [#allocation15], 1

</llo_original>
